<compile_context>
chip_gen: v7x
topology: tpu7x:2x2x1
jax: 0.10.0
libtpu: 0.0.40
codegen_flags: <defaults>
</compile_context>

<pallas_src>
import functools
import math

import jax
import jax.numpy as jnp
from jax.experimental import pallas as pl
from jax.experimental.pallas import tpu as pltpu

_MXU_DTYPE = jnp.bfloat16          # MXU operand dtype (fp32 accumulation)
_HANDOFF_DTYPE = jnp.bfloat16      # inter-kernel activation dtype (halves HBM traffic)
_LN_EPS = 1e-5
_NEG_INF = -1e30                   # finite "-inf": keeps softmax NaN-free


# ----------------------------------------------------------------------------
# helpers
# ----------------------------------------------------------------------------
@functools.lru_cache(maxsize=1)
def _vmem_cap_bytes():
    """Physical VMEM per core (64 MiB v7x, 128 MiB v5e/v6e); safe fallback."""
    try:
        return int(pltpu.get_tpu_info().vmem_capacity_bytes)
    except Exception:
        return 64 * 1024 * 1024


def _fit_rows(m, target, bytes_per_row, budget):
    """Largest sublane-aligned divisor of m that is <= target and whose per-row
    VMEM footprint fits `budget`; prefers >= 2 grid steps (megacore/pipelining)."""
    if bytes_per_row > 0 and budget > 0:
        target = max(8, min(target, budget // bytes_per_row))
    cands = [t for t in range(min(target, m), 7, -8) if m % t == 0]
    if not cands:
        return m
    multi = [t for t in cands if m // t >= 2]
    return multi[0] if multi else cands[0]


def _compiler_params(sems, budget_bytes):
    """dimension_semantics + explicit VMEM limit from the actual footprint
    (default scoped limits are only 16 MiB on v5e / 32 MiB on v6e, v7x)."""
    cap = _vmem_cap_bytes()
    return pltpu.CompilerParams(
        dimension_semantics=sems,
        vmem_limit_bytes=int(min(max(budget_bytes, 32 * 1024 * 1024), cap)))


def _layernorm(y, g, b, eps):
    mu = jnp.mean(y, axis=-1, keepdims=True)
    var = jnp.mean((y - mu) * (y - mu), axis=-1, keepdims=True)
    return (y - mu) * jax.lax.rsqrt(var + eps) * g + b


# ----------------------------------------------------------------------------
# Kernel 1: fused MultiheadAttention + residual + LayerNorm1
#           grid = (batch, query tiles), both "parallel"
# ----------------------------------------------------------------------------
def _mha_layer_kernel(q_ref, k_ref, v_ref, wq_ref, wk_ref, wv_ref, wo_ref,
                      bq_ref, bk_ref, bv_ref, bo_ref, g_ref, beta_ref, *rest,
                      nhead, eps, q_tile, causal, has_mask, need_weights):
    idx = 0
    mask_ref = None
    if has_mask:
        mask_ref = rest[idx]; idx += 1
    x_ref = rest[idx]; idx += 1
    p_ref = None
    if need_weights:
        p_ref = rest[idx]; idx += 1
    ctx_scr = rest[idx]                                   # (tq, E) fp32 VMEM scratch

    q_in = q_ref[0]                                       # (tq, E) handoff dtype
    k_in = k_ref[0]                                       # (Sk, E)
    v_in = v_ref[0]                                       # (Sk, E)

    def proj(x, w_ref, b_ref):                            # x @ W^T + b (W pre-transposed)
        return jnp.dot(x.astype(_MXU_DTYPE), w_ref[...],
                       preferred_element_type=jnp.float32) + b_ref[...]

    qp = proj(q_in, wq_ref, bq_ref)                       # (tq, E) fp32, scale pre-folded
    kp = proj(k_in, wk_ref, bk_ref)                       # (Sk, E)
    vp = proj(v_in, wv_ref, bv_ref)                       # (Sk, E)

    tq, emb = qp.shape
    sk = kp.shape[0]
    dh = emb // nhead

    if has_mask:
        add_mask = mask_ref[...].astype(jnp.float32)      # (tq, Sk) user mask tile
    elif causal:
        # in-kernel causal mask: no (Sq, Sk) DMA / VMEM residency.
        q0 = pl.program_id(1) * q_tile
        rows = jax.lax.broadcasted_iota(jnp.int32, (tq, sk), 0) + q0
        cols = jax.lax.broadcasted_iota(jnp.int32, (tq, sk), 1)
        add_mask = jnp.where(cols > rows, jnp.float32(_NEG_INF), jnp.float32(0.0))
    else:
        add_mask = None                                   # static no-mask fast path

    p_sum = jnp.zeros((tq, sk), jnp.float32) if need_weights else None
    # TODO(synk): for very long Sk with need_weights=False, switch this loop to
    # flash-style online-softmax over Sk tiles; also pad dh to 128 for better
    # MXU utilization when nhead makes dh < 128.
    for h in range(nhead):                                # static unroll over heads
        lo = h * dh
        qh = qp[:, lo:lo + dh]
        kh = kp[:, lo:lo + dh]
        vh = vp[:, lo:lo + dh]
        s = jax.lax.dot_general(                          # q @ k^T (contract Dh axes)
            qh.astype(_MXU_DTYPE), kh.astype(_MXU_DTYPE),
            dimension_numbers=(((1,), (1,)), ((), ())),
            preferred_element_type=jnp.float32)
        if add_mask is not None:
            s = s + add_mask
        s = s - jnp.max(s, axis=-1, keepdims=True)
        e_s = jnp.exp(s)
        den = jnp.sum(e_s, axis=-1, keepdims=True)
        if need_weights:
            p = e_s / den                                 # exact: returned rows sum to 1
            p_sum = p_sum + p
        else:
            p = e_s * pl.reciprocal(den, approx=True)     # EUP slot, ctx-only path
        # per-head context written at a static lane offset into VMEM scratch:
        # no concatenate, live range bounded to one head.
        ctx_scr[:, lo:lo + dh] = jnp.dot(
            p.astype(_MXU_DTYPE), vh.astype(_MXU_DTYPE),
            preferred_element_type=jnp.float32)

    attn = jnp.dot(ctx_scr[...].astype(_MXU_DTYPE), wo_ref[...],
                   preferred_element_type=jnp.float32) + bo_ref[...]
    y = _layernorm(q_in.astype(jnp.float32) + attn, g_ref[...], beta_ref[...], eps)
    x_ref[0] = y.astype(x_ref.dtype)
    if need_weights:
        p_ref[0] = (p_sum * (1.0 / nhead)).astype(p_ref.dtype)   # torch head average


def mha_layer(q, k, v, p, nhead, mask, causal, need_weights, weights_dtype,
              out_dtype):
    """x = LayerNorm1(q + MHA(q, k, v)); optional head-averaged attn weights."""
    B, Sq, E = q.shape
    Sk = k.shape[1]
    has_mask = mask is not None
    cap = _vmem_cap_bytes()

    # query tile: caps the live (tq, Sk) fp32 score arrays inside VMEM.
    per_row = (3 * Sk + 3 * E) * 4 + (Sk * 4 if need_weights else 0)
    tq = _fit_rows(Sq, target=256, bytes_per_row=per_row, budget=cap // 4)
    grid = (B, Sq // tq)

    # explicit VMEM budget: weights (single-buffered) + double-buffered I/O tiles
    # + fp32 intermediates + scratch, with 25% margin.
    weight_bytes = 4 * E * E * 2 + 6 * E * 4
    io_bytes = (2 * (tq + 2 * Sk) * E * q.dtype.itemsize
                + 2 * tq * E * jnp.dtype(out_dtype).itemsize
                + (2 * tq * Sk * jnp.dtype(weights_dtype).itemsize
                   if need_weights else 0)
                + (2 * tq * Sk * 4 if has_mask else 0))
    live_bytes = (tq + 2 * Sk) * E * 4 + 4 * tq * Sk * 4 + tq * E * 4
    budget = int(1.25 * (weight_bytes + io_bytes + live_bytes))

    kern = functools.partial(_mha_layer_kernel, nhead=nhead, eps=_LN_EPS,
                             q_tile=tq, causal=causal, has_mask=has_mask,
                             need_weights=need_weights)

    def const(shp):
        # constant index_map keeps weights VMEM-resident across the grid;
        # Buffered(1) disables pointless double buffering of constant blocks.
        return pl.BlockSpec(shp, lambda b, i: (0, 0), pipeline_mode=pl.Buffered(1))

    in_specs = [pl.BlockSpec((1, tq, E), lambda b, i: (b, i, 0)),
                pl.BlockSpec((1, Sk, E), lambda b, i: (b, 0, 0)),
                pl.BlockSpec((1, Sk, E), lambda b, i: (b, 0, 0)),
                const((E, E)), const((E, E)), const((E, E)), const((E, E)),
                const((1, E)), const((1, E)), const((1, E)), const((1, E)),
                const((1, E)), const((1, E))]
    args = [q, k, v, p["wq_t"], p["wk_t"], p["wv_t"], p["wo_t"],
            p["bq"], p["bk"], p["bv"], p["bo"], p["ln1_g"], p["ln1_b"]]
    if has_mask:
        in_specs.append(pl.BlockSpec((tq, Sk), lambda b, i: (i, 0)))
        args.append(mask)

    x_spec = pl.BlockSpec((1, tq, E), lambda b, i: (b, i, 0))
    if need_weights:
        out_shape = (jax.ShapeDtypeStruct((B, Sq, E), out_dtype),
                     jax.ShapeDtypeStruct((B, Sq, Sk), weights_dtype))
        out_specs = (x_spec, pl.BlockSpec((1, tq, Sk), lambda b, i: (b, i, 0)))
    else:
        out_shape = jax.ShapeDtypeStruct((B, Sq, E), out_dtype)
        out_specs = x_spec

    out = pl.pallas_call(
        kern, out_shape=out_shape, grid=grid,
        in_specs=in_specs, out_specs=out_specs,
        scratch_shapes=[pltpu.VMEM((tq, E), jnp.float32)],
        compiler_params=_compiler_params(("parallel", "parallel"), budget),
    )(*args)
    return out if need_weights else (out, None)


# ----------------------------------------------------------------------------
# Kernel 2: fused FeedForward (Linear1+ReLU+Linear2) + residual + LayerNorm2
# ----------------------------------------------------------------------------
def _ffn_ln_kernel(x_ref, w1_ref, b1_ref, w2_ref, b2_ref, g_ref, beta_ref,
                   o_ref, *, eps):
    x = x_ref[...].astype(jnp.float32)                    # (TM, E)
    h = jnp.dot(x.astype(_MXU_DTYPE), w1_ref[...],
                preferred_element_type=jnp.float32) + b1_ref[...]
    h = jnp.maximum(h, 0.0)                               # ReLU
    ff = jnp.dot(h.astype(_MXU_DTYPE), w2_ref[...],
                 preferred_element_type=jnp.float32) + b2_ref[...]
    o_ref[...] = _layernorm(x + ff, g_ref[...], beta_ref[...],
                            eps).astype(o_ref.dtype)


def ffn_layer(x, p, out_dtype):
    B, S, E = x.shape
    M = B * S
    FF = p["w1_t"].shape[1]
    x2 = x.reshape(M, E)
    cap = _vmem_cap_bytes()

    # generation-aware row tile: ~256 rows on v7x (64 MiB VMEM), 512 on v5e/v6e;
    # further capped so the (tm, FF) fp32 hidden + I/O tiles fit alongside weights.
    target = 256 if cap <= 64 * 1024 * 1024 else 512
    weight_bytes = 2 * E * FF * 2 + (FF + 3 * E) * 4
    per_row = FF * 4 + 2 * E * (x.dtype.itemsize + jnp.dtype(out_dtype).itemsize)
    tm = _fit_rows(M, target=target, bytes_per_row=per_row,
                   budget=cap // 2 - weight_bytes)
    budget = int(1.25 * (weight_bytes + tm * per_row + tm * (FF + E) * 4))

    def const(shp):
        return pl.BlockSpec(shp, lambda i: (0, 0), pipeline_mode=pl.Buffered(1))

    out = pl.pallas_call(
        functools.partial(_ffn_ln_kernel, eps=_LN_EPS),
        out_shape=jax.ShapeDtypeStruct((M, E), out_dtype),
        grid=(M // tm,),
        in_specs=[pl.BlockSpec((tm, E), lambda i: (i, 0)),
                  const((E, FF)), const((1, FF)),
                  const((FF, E)), const((1, E)),
                  const((1, E)), const((1, E))],
        out_specs=pl.BlockSpec((tm, E), lambda i: (i, 0)),
        compiler_params=_compiler_params(("parallel",), budget),
    )(x2, p["w1_t"], p["b1"], p["w2_t"], p["b2"], p["ln2_g"], p["ln2_b"])
    return out.reshape(B, S, E)


# ----------------------------------------------------------------------------
# Kernel 3: plain LayerNorm (final norm)
# ----------------------------------------------------------------------------
def _ln_kernel(x_ref, g_ref, beta_ref, o_ref, *, eps):
    x = x_ref[...].astype(jnp.float32)
    o_ref[...] = _layernorm(x, g_ref[...], beta_ref[...], eps).astype(o_ref.dtype)


def layer_norm(x, g, b, out_dtype):
    B, S, E = x.shape
    M = B * S
    x2 = x.reshape(M, E)
    per_row = 2 * E * (x.dtype.itemsize + jnp.dtype(out_dtype).itemsize)
    tm = _fit_rows(M, target=512, bytes_per_row=per_row,
                   budget=_vmem_cap_bytes() // 2)
    budget = int(1.25 * (tm * per_row + 2 * E * 4 + tm * E * 4))
    out = pl.pallas_call(
        functools.partial(_ln_kernel, eps=_LN_EPS),
        out_shape=jax.ShapeDtypeStruct((M, E), out_dtype),
        grid=(M // tm,),
        in_specs=[pl.BlockSpec((tm, E), lambda i: (i, 0)),
                  pl.BlockSpec((1, E), lambda i: (0, 0),
                               pipeline_mode=pl.Buffered(1)),
                  pl.BlockSpec((1, E), lambda i: (0, 0),
                               pipeline_mode=pl.Buffered(1))],
        out_specs=pl.BlockSpec((tm, E), lambda i: (i, 0)),
        compiler_params=_compiler_params(("parallel",), budget),
    )(x2, g, b)
    return out.reshape(B, S, E)


# ----------------------------------------------------------------------------
# Module composition (glue in plain JAX)
# ----------------------------------------------------------------------------
def encoder_layer(q, k, v, p, nhead, mask, causal, need_weights, weights_dtype,
                  handoff_dtype, out_dtype):
    # TODO(synk): on v5e/v6e (128 MiB VMEM) the MHA and FFN stages could be
    # fused into a single pallas_call per layer to save one (B,Sq,E) HBM
    # round-trip; kept separate so the same kernels also fit v7x's 64 MiB.
    x, attn_w = mha_layer(q, k, v, p, nhead, mask, causal, need_weights,
                          weights_dtype, handoff_dtype)
    y = ffn_layer(x, p, out_dtype)
    return y, attn_w


def transformer_decoder(q, k, v, params, nhead, mask=None, is_causal=None,
                        need_weights=True, weights_dtype=jnp.float32,
                        handoff_dtype=_HANDOFF_DTYPE):
    """Mirrors TransformerDecoder.forward: returns (output, [weights per layer])."""
    out_dtype = q.dtype
    # An explicit mask is applied additively as-is; is_causal=True (with no
    # mask) selects the in-kernel causal mask (no dense mask DMA).
    # TODO(synk): the mask==causal_comparison auto-detection and the
    # src_key_padding_mask path are not implemented (both None in this model).
    causal = (mask is None) and (is_causal is True)
    add_mask = mask.astype(jnp.float32) if mask is not None else None

    # k / v are reused unchanged by every layer: cast to handoff dtype once.
    q_c = q.astype(handoff_dtype)
    k_c = k.astype(handoff_dtype)
    v_c = v.astype(handoff_dtype)

    layers = params["layers"]
    has_final = params.get("final") is not None
    weights = []
    output = q_c
    for li, p in enumerate(layers):
        last = (li == len(layers) - 1) and not has_final
        output, w = encoder_layer(q_c, k_c, v_c, p, nhead, add_mask, causal,
                                  need_weights, weights_dtype, handoff_dtype,
                                  out_dtype if last else handoff_dtype)
        q_c = output
        if need_weights:
            weights.append(w)
    if has_final:
        output = layer_norm(output, params["final"]["g"], params["final"]["b"],
                            out_dtype)
    return output, weights


# ----------------------------------------------------------------------------
# Parameters: torch-layout init + one-time conversion to kernel layout
# ----------------------------------------------------------------------------
def init_params(key, E, nhead, dim_ff, num_layers):
    """Torch-layout parameters (nn.TransformerEncoderLayer / MultiheadAttention)."""
    def dense(k_, shape, scale=0.05):
        return scale * jax.random.normal(k_, shape, jnp.float32)

    layers = []
    for i in range(num_layers):
        ks = jax.random.split(jax.random.fold_in(key, i), 4)
        layers.append(dict(
            in_proj_w=dense(ks[0], (3 * E, E)),
            in_proj_b=jnp.zeros((3 * E,), jnp.float32),
            out_proj_w=dense(ks[1], (E, E)),
            out_proj_b=jnp.zeros((E,), jnp.float32),
            ln1_g=jnp.ones((E,), jnp.float32), ln1_b=jnp.zeros((E,), jnp.float32),
            ln2_g=jnp.ones((E,), jnp.float32), ln2_b=jnp.zeros((E,), jnp.float32),
            w1=dense(ks[2], (dim_ff, E)), b1=jnp.zeros((dim_ff,), jnp.float32),
            w2=dense(ks[3], (E, dim_ff)), b2=jnp.zeros((E,), jnp.float32),
        ))
    final = dict(g=jnp.ones((E,), jnp.float32), b=jnp.zeros((E,), jnp.float32))
    return dict(layers=layers, final=final)


def prepare_params(params, nhead, mxu_dtype=_MXU_DTYPE):
    """One-time conversion: pre-split in_proj, pre-transpose matmul weights,
    fold the 1/sqrt(head_dim) attention scale into wq/bq, and cast weights to
    the MXU operand dtype.  Biases / LayerNorm params stay fp32 as (1, D).
    TODO(synk): optionally store weight matrices in fp8 on v7x (halves resident
    weight VMEM and doubles MXU throughput there)."""
    layers = []
    for p in params["layers"]:
        E = p["out_proj_w"].shape[0]
        scale = 1.0 / math.sqrt(E // nhead)
        wq, wk, wv = jnp.split(p["in_proj_w"], 3, axis=0)
        bq, bk, bv = jnp.split(p["in_proj_b"], 3)
        layers.append(dict(
            wq_t=(wq.T * scale).astype(mxu_dtype),          # scale folded in
            wk_t=wk.T.astype(mxu_dtype),
            wv_t=wv.T.astype(mxu_dtype),
            wo_t=p["out_proj_w"].T.astype(mxu_dtype),
            bq=(bq * scale).reshape(1, E), bk=bk.reshape(1, E),
            bv=bv.reshape(1, E), bo=p["out_proj_b"].reshape(1, E),
            ln1_g=p["ln1_g"].reshape(1, E), ln1_b=p["ln1_b"].reshape(1, E),
            ln2_g=p["ln2_g"].reshape(1, E), ln2_b=p["ln2_b"].reshape(1, E),
            w1_t=p["w1"].T.astype(mxu_dtype), b1=p["b1"].reshape(1, -1),
            w2_t=p["w2"].T.astype(mxu_dtype), b2=p["b2"].reshape(1, E),
        ))
    final = None
    if params.get("final") is not None:
        E = params["final"]["g"].shape[0]
        final = dict(g=params["final"]["g"].reshape(1, E),
                     b=params["final"]["b"].reshape(1, E))
    return dict(layers=layers, final=final)


# ----------------------------------------------------------------------------
if __name__ == "__main__":
    B, S, E, H, FF, L = 2, 128, 128, 4, 256, 2
    key = jax.random.PRNGKey(0)
    kq, kk, kv, kp = jax.random.split(key, 4)
    q = jax.random.normal(kq, (B, S, E), jnp.float32)
    k = jax.random.normal(kk, (B, S, E), jnp.float32)
    v = jax.random.normal(kv, (B, S, E), jnp.float32)
    params = prepare_params(init_params(kp, E, H, FF, L), nhead=H)

    @functools.partial(jax.jit,
                       static_argnames=("nhead", "is_causal", "need_weights"))
    def run(q, k, v, params, nhead, is_causal=None, need_weights=True):
        return transformer_decoder(q, k, v, params, nhead, mask=None,
                                   is_causal=is_causal,
                                   need_weights=need_weights)

    # default path: no mask, attention weights returned (torch semantics)
    out, weights = run(q, k, v, params, nhead=H)
    jax.block_until_ready(out)
    assert out.shape == (B, S, E) and out.dtype == jnp.float32
    assert len(weights) == L and weights[0].shape == (B, S, S)
    assert bool(jnp.all(jnp.isfinite(out)))
    for w in weights:
        assert bool(jnp.allclose(jnp.sum(w, axis=-1), 1.0, atol=1e-3))

    # causal path with the attention-weights output statically disabled
    out_c, weights_c = run(q, k, v, params, nhead=H, is_causal=True,
                           need_weights=False)
    jax.block_until_ready(out_c)
    assert out_c.shape == (B, S, E) and len(weights_c) == 0
    assert bool(jnp.all(jnp.isfinite(out_c)))

    print("KERNEL_OK")
</pallas_src>

<mosaic_0001>
module attributes {stable_mosaic.version = 11 : i64} {
  func.func @_mha_layer_kernel(%arg0: i32, %arg1: i32, %arg2: memref<1x64x128xbf16, #tpu.memory_space<vmem>>, %arg3: memref<1x128x128xbf16, #tpu.memory_space<vmem>>, %arg4: memref<1x128x128xbf16, #tpu.memory_space<vmem>>, %arg5: memref<128x128xbf16, #tpu.memory_space<vmem>>, %arg6: memref<128x128xbf16, #tpu.memory_space<vmem>>, %arg7: memref<128x128xbf16, #tpu.memory_space<vmem>>, %arg8: memref<128x128xbf16, #tpu.memory_space<vmem>>, %arg9: memref<1x128xf32, #tpu.memory_space<vmem>>, %arg10: memref<1x128xf32, #tpu.memory_space<vmem>>, %arg11: memref<1x128xf32, #tpu.memory_space<vmem>>, %arg12: memref<1x128xf32, #tpu.memory_space<vmem>>, %arg13: memref<1x128xf32, #tpu.memory_space<vmem>>, %arg14: memref<1x128xf32, #tpu.memory_space<vmem>>, %arg15: memref<1x64x128xbf16, #tpu.memory_space<vmem>>, %arg16: memref<1x64x128xf32, #tpu.memory_space<vmem>>, %arg17: memref<64x128xf32, #tpu.memory_space<vmem>>) attributes {dimension_semantics = [#tpu.dimension_semantics<parallel>, #tpu.dimension_semantics<parallel>], iteration_bounds = array<i64: 2, 2>, scalar_prefetch = 0 : i64, scratch_operands = 1 : i64, tpu.core_type = #tpu.core_type<tc>, window_params = [{transform_indices = @transform_0, window_bounds = array<i64: 1, 64, 128>}, {transform_indices = @transform_1, window_bounds = array<i64: 1, 128, 128>}, {transform_indices = @transform_2, window_bounds = array<i64: 1, 128, 128>}, {pipeline_mode = #tpu.pipeline_mode<synchronous>, transform_indices = @transform_3, window_bounds = array<i64: 128, 128>}, {pipeline_mode = #tpu.pipeline_mode<synchronous>, transform_indices = @transform_4, window_bounds = array<i64: 128, 128>}, {pipeline_mode = #tpu.pipeline_mode<synchronous>, transform_indices = @transform_5, window_bounds = array<i64: 128, 128>}, {pipeline_mode = #tpu.pipeline_mode<synchronous>, transform_indices = @transform_6, window_bounds = array<i64: 128, 128>}, {pipeline_mode = #tpu.pipeline_mode<synchronous>, transform_indices = @transform_7, window_bounds = array<i64: 1, 128>}, {pipeline_mode = #tpu.pipeline_mode<synchronous>, transform_indices = @transform_8, window_bounds = array<i64: 1, 128>}, {pipeline_mode = #tpu.pipeline_mode<synchronous>, transform_indices = @transform_9, window_bounds = array<i64: 1, 128>}, {pipeline_mode = #tpu.pipeline_mode<synchronous>, transform_indices = @transform_10, window_bounds = array<i64: 1, 128>}, {pipeline_mode = #tpu.pipeline_mode<synchronous>, transform_indices = @transform_11, window_bounds = array<i64: 1, 128>}, {pipeline_mode = #tpu.pipeline_mode<synchronous>, transform_indices = @transform_12, window_bounds = array<i64: 1, 128>}, {transform_indices = @transform_13, window_bounds = array<i64: 1, 64, 128>}, {transform_indices = @transform_14, window_bounds = array<i64: 1, 64, 128>}]} {
    %c0 = arith.constant 0 : index
    %c0_0 = arith.constant 0 : index
    %c0_1 = arith.constant 0 : index
    %0 = vector.load %arg2[%c0, %c0_0, %c0_1] : memref<1x64x128xbf16, #tpu.memory_space<vmem>>, vector<1x64x128xbf16>
    %1 = vector.shape_cast %0 : vector<1x64x128xbf16> to vector<64x128xbf16>
    %c0_2 = arith.constant 0 : index
    %c0_3 = arith.constant 0 : index
    %c0_4 = arith.constant 0 : index
    %2 = vector.load %arg3[%c0_2, %c0_3, %c0_4] : memref<1x128x128xbf16, #tpu.memory_space<vmem>>, vector<1x128x128xbf16>
    %3 = vector.shape_cast %2 : vector<1x128x128xbf16> to vector<128x128xbf16>
    %c0_5 = arith.constant 0 : index
    %c0_6 = arith.constant 0 : index
    %c0_7 = arith.constant 0 : index
    %4 = vector.load %arg4[%c0_5, %c0_6, %c0_7] : memref<1x128x128xbf16, #tpu.memory_space<vmem>>, vector<1x128x128xbf16>
    %5 = vector.shape_cast %4 : vector<1x128x128xbf16> to vector<128x128xbf16>
    %c0_8 = arith.constant 0 : index
    %c0_9 = arith.constant 0 : index
    %6 = vector.load %arg5[%c0_8, %c0_9] : memref<128x128xbf16, #tpu.memory_space<vmem>>, vector<128x128xbf16>
    %cst = arith.constant dense<0.000000e+00> : vector<64x128xf32>
    %7 = tpu.matmul %1, %6, %cst {dimension_numbers = #tpu.dot_dimension_numbers<[1], [0], [0], [1], [0, 0, 1, 1], [], []>} : vector<64x128xbf16>, vector<128x128xbf16>, vector<64x128xf32> -> vector<64x128xf32>
    %c0_10 = arith.constant 0 : index
    %c0_11 = arith.constant 0 : index
    %8 = vector.load %arg9[%c0_10, %c0_11] : memref<1x128xf32, #tpu.memory_space<vmem>>, vector<1x128xf32>
    %9 = vector.broadcast %8 : vector<1x128xf32> to vector<64x128xf32>
    %10 = arith.addf %7, %9 : vector<64x128xf32>
    %c0_12 = arith.constant 0 : index
    %c0_13 = arith.constant 0 : index
    %11 = vector.load %arg6[%c0_12, %c0_13] : memref<128x128xbf16, #tpu.memory_space<vmem>>, vector<128x128xbf16>
    %cst_14 = arith.constant dense<0.000000e+00> : vector<128x128xf32>
    %12 = tpu.matmul %3, %11, %cst_14 {dimension_numbers = #tpu.dot_dimension_numbers<[1], [0], [0], [1], [0, 0, 1, 1], [], []>} : vector<128x128xbf16>, vector<128x128xbf16>, vector<128x128xf32> -> vector<128x128xf32>
    %c0_15 = arith.constant 0 : index
    %c0_16 = arith.constant 0 : index
    %13 = vector.load %arg10[%c0_15, %c0_16] : memref<1x128xf32, #tpu.memory_space<vmem>>, vector<1x128xf32>
    %14 = vector.broadcast %13 : vector<1x128xf32> to vector<128x128xf32>
    %15 = arith.addf %12, %14 : vector<128x128xf32>
    %c0_17 = arith.constant 0 : index
    %c0_18 = arith.constant 0 : index
    %16 = vector.load %arg7[%c0_17, %c0_18] : memref<128x128xbf16, #tpu.memory_space<vmem>>, vector<128x128xbf16>
    %cst_19 = arith.constant dense<0.000000e+00> : vector<128x128xf32>
    %17 = tpu.matmul %5, %16, %cst_19 {dimension_numbers = #tpu.dot_dimension_numbers<[1], [0], [0], [1], [0, 0, 1, 1], [], []>} : vector<128x128xbf16>, vector<128x128xbf16>, vector<128x128xf32> -> vector<128x128xf32>
    %c0_20 = arith.constant 0 : index
    %c0_21 = arith.constant 0 : index
    %18 = vector.load %arg11[%c0_20, %c0_21] : memref<1x128xf32, #tpu.memory_space<vmem>>, vector<1x128xf32>
    %19 = vector.broadcast %18 : vector<1x128xf32> to vector<128x128xf32>
    %20 = arith.addf %17, %19 : vector<128x128xf32>
    %cst_22 = arith.constant 0.000000e+00 : f32
    %21 = vector.broadcast %cst_22 : f32 to vector<64x128xf32>
    %22 = vector.extract_strided_slice %10 {offsets = [0, 0], sizes = [64, 32], strides = [1, 1]} : vector<64x128xf32> to vector<64x32xf32>
    %23 = vector.extract_strided_slice %15 {offsets = [0, 0], sizes = [128, 32], strides = [1, 1]} : vector<128x128xf32> to vector<128x32xf32>
    %24 = vector.extract_strided_slice %20 {offsets = [0, 0], sizes = [128, 32], strides = [1, 1]} : vector<128x128xf32> to vector<128x32xf32>
    %25 = arith.truncf %22 : vector<64x32xf32> to vector<64x32xbf16>
    %26 = arith.truncf %23 : vector<128x32xf32> to vector<128x32xbf16>
    %cst_23 = arith.constant dense<0.000000e+00> : vector<64x128xf32>
    %27 = tpu.matmul %25, %26, %cst_23 {dimension_numbers = #tpu.dot_dimension_numbers<[1], [1], [0], [0], [0, 0, 1, 0], [], []>} : vector<64x32xbf16>, vector<128x32xbf16>, vector<64x128xf32> -> vector<64x128xf32>
    %cst_24 = arith.constant dense<0xFF800000> : vector<64xf32>
    %28 = vector.multi_reduction <maximumf>, %27, %cst_24 [1] : vector<64x128xf32> to vector<64xf32>
    %29 = vector.shape_cast %28 : vector<64xf32> to vector<64x1xf32>
    %30 = vector.broadcast %29 : vector<64x1xf32> to vector<64x128xf32>
    %31 = arith.subf %27, %30 : vector<64x128xf32>
    %32 = math.exp %31 : vector<64x128xf32>
    %cst_25 = arith.constant dense<0.000000e+00> : vector<64xf32>
    %33 = vector.multi_reduction <add>, %32, %cst_25 [1] : vector<64x128xf32> to vector<64xf32>
    %34 = vector.shape_cast %33 : vector<64xf32> to vector<64x1xf32>
    %35 = vector.broadcast %34 : vector<64x1xf32> to vector<64x128xf32>
    %36 = arith.divf %32, %35 : vector<64x128xf32>
    %37 = arith.addf %21, %36 : vector<64x128xf32>
    %38 = arith.truncf %36 : vector<64x128xf32> to vector<64x128xbf16>
    %39 = arith.truncf %24 : vector<128x32xf32> to vector<128x32xbf16>
    %cst_26 = arith.constant dense<0.000000e+00> : vector<64x32xf32>
    %40 = tpu.matmul %38, %39, %cst_26 {dimension_numbers = #tpu.dot_dimension_numbers<[1], [0], [0], [1], [0, 0, 1, 1], [], []>} : vector<64x128xbf16>, vector<128x32xbf16>, vector<64x32xf32> -> vector<64x32xf32>
    %c0_27 = arith.constant 0 : index
    %c0_28 = arith.constant 0 : index
    %41 = vector.load %arg17[%c0_27, %c0_28] : memref<64x128xf32, #tpu.memory_space<vmem>>, vector<64x32xf32>
    tpu.vector_store %arg17[%c0_27, %c0_28], %40 {strides = array<i32>} : memref<64x128xf32, #tpu.memory_space<vmem>>, vector<64x32xf32>,
    %42 = vector.extract_strided_slice %10 {offsets = [0, 32], sizes = [64, 32], strides = [1, 1]} : vector<64x128xf32> to vector<64x32xf32>
    %43 = vector.extract_strided_slice %15 {offsets = [0, 32], sizes = [128, 32], strides = [1, 1]} : vector<128x128xf32> to vector<128x32xf32>
    %44 = vector.extract_strided_slice %20 {offsets = [0, 32], sizes = [128, 32], strides = [1, 1]} : vector<128x128xf32> to vector<128x32xf32>
    %45 = arith.truncf %42 : vector<64x32xf32> to vector<64x32xbf16>
    %46 = arith.truncf %43 : vector<128x32xf32> to vector<128x32xbf16>
    %cst_29 = arith.constant dense<0.000000e+00> : vector<64x128xf32>
    %47 = tpu.matmul %45, %46, %cst_29 {dimension_numbers = #tpu.dot_dimension_numbers<[1], [1], [0], [0], [0, 0, 1, 0], [], []>} : vector<64x32xbf16>, vector<128x32xbf16>, vector<64x128xf32> -> vector<64x128xf32>
    %cst_30 = arith.constant dense<0xFF800000> : vector<64xf32>
    %48 = vector.multi_reduction <maximumf>, %47, %cst_30 [1] : vector<64x128xf32> to vector<64xf32>
    %49 = vector.shape_cast %48 : vector<64xf32> to vector<64x1xf32>
    %50 = vector.broadcast %49 : vector<64x1xf32> to vector<64x128xf32>
    %51 = arith.subf %47, %50 : vector<64x128xf32>
    %52 = math.exp %51 : vector<64x128xf32>
    %cst_31 = arith.constant dense<0.000000e+00> : vector<64xf32>
    %53 = vector.multi_reduction <add>, %52, %cst_31 [1] : vector<64x128xf32> to vector<64xf32>
    %54 = vector.shape_cast %53 : vector<64xf32> to vector<64x1xf32>
    %55 = vector.broadcast %54 : vector<64x1xf32> to vector<64x128xf32>
    %56 = arith.divf %52, %55 : vector<64x128xf32>
    %57 = arith.addf %37, %56 : vector<64x128xf32>
    %58 = arith.truncf %56 : vector<64x128xf32> to vector<64x128xbf16>
    %59 = arith.truncf %44 : vector<128x32xf32> to vector<128x32xbf16>
    %cst_32 = arith.constant dense<0.000000e+00> : vector<64x32xf32>
    %60 = tpu.matmul %58, %59, %cst_32 {dimension_numbers = #tpu.dot_dimension_numbers<[1], [0], [0], [1], [0, 0, 1, 1], [], []>} : vector<64x128xbf16>, vector<128x32xbf16>, vector<64x32xf32> -> vector<64x32xf32>
    %c0_33 = arith.constant 0 : index
    %c32 = arith.constant 32 : index
    %61 = vector.load %arg17[%c0_33, %c32] : memref<64x128xf32, #tpu.memory_space<vmem>>, vector<64x32xf32>
    tpu.vector_store %arg17[%c0_33, %c32], %60 {strides = array<i32>} : memref<64x128xf32, #tpu.memory_space<vmem>>, vector<64x32xf32>,
    %62 = vector.extract_strided_slice %10 {offsets = [0, 64], sizes = [64, 32], strides = [1, 1]} : vector<64x128xf32> to vector<64x32xf32>
    %63 = vector.extract_strided_slice %15 {offsets = [0, 64], sizes = [128, 32], strides = [1, 1]} : vector<128x128xf32> to vector<128x32xf32>
    %64 = vector.extract_strided_slice %20 {offsets = [0, 64], sizes = [128, 32], strides = [1, 1]} : vector<128x128xf32> to vector<128x32xf32>
    %65 = arith.truncf %62 : vector<64x32xf32> to vector<64x32xbf16>
    %66 = arith.truncf %63 : vector<128x32xf32> to vector<128x32xbf16>
    %cst_34 = arith.constant dense<0.000000e+00> : vector<64x128xf32>
    %67 = tpu.matmul %65, %66, %cst_34 {dimension_numbers = #tpu.dot_dimension_numbers<[1], [1], [0], [0], [0, 0, 1, 0], [], []>} : vector<64x32xbf16>, vector<128x32xbf16>, vector<64x128xf32> -> vector<64x128xf32>
    %cst_35 = arith.constant dense<0xFF800000> : vector<64xf32>
    %68 = vector.multi_reduction <maximumf>, %67, %cst_35 [1] : vector<64x128xf32> to vector<64xf32>
    %69 = vector.shape_cast %68 : vector<64xf32> to vector<64x1xf32>
    %70 = vector.broadcast %69 : vector<64x1xf32> to vector<64x128xf32>
    %71 = arith.subf %67, %70 : vector<64x128xf32>
    %72 = math.exp %71 : vector<64x128xf32>
    %cst_36 = arith.constant dense<0.000000e+00> : vector<64xf32>
    %73 = vector.multi_reduction <add>, %72, %cst_36 [1] : vector<64x128xf32> to vector<64xf32>
    %74 = vector.shape_cast %73 : vector<64xf32> to vector<64x1xf32>
    %75 = vector.broadcast %74 : vector<64x1xf32> to vector<64x128xf32>
    %76 = arith.divf %72, %75 : vector<64x128xf32>
    %77 = arith.addf %57, %76 : vector<64x128xf32>
    %78 = arith.truncf %76 : vector<64x128xf32> to vector<64x128xbf16>
    %79 = arith.truncf %64 : vector<128x32xf32> to vector<128x32xbf16>
    %cst_37 = arith.constant dense<0.000000e+00> : vector<64x32xf32>
    %80 = tpu.matmul %78, %79, %cst_37 {dimension_numbers = #tpu.dot_dimension_numbers<[1], [0], [0], [1], [0, 0, 1, 1], [], []>} : vector<64x128xbf16>, vector<128x32xbf16>, vector<64x32xf32> -> vector<64x32xf32>
    %c0_38 = arith.constant 0 : index
    %c64 = arith.constant 64 : index
    %81 = vector.load %arg17[%c0_38, %c64] : memref<64x128xf32, #tpu.memory_space<vmem>>, vector<64x32xf32>
    tpu.vector_store %arg17[%c0_38, %c64], %80 {strides = array<i32>} : memref<64x128xf32, #tpu.memory_space<vmem>>, vector<64x32xf32>,
    %82 = vector.extract_strided_slice %10 {offsets = [0, 96], sizes = [64, 32], strides = [1, 1]} : vector<64x128xf32> to vector<64x32xf32>
    %83 = vector.extract_strided_slice %15 {offsets = [0, 96], sizes = [128, 32], strides = [1, 1]} : vector<128x128xf32> to vector<128x32xf32>
    %84 = vector.extract_strided_slice %20 {offsets = [0, 96], sizes = [128, 32], strides = [1, 1]} : vector<128x128xf32> to vector<128x32xf32>
    %85 = arith.truncf %82 : vector<64x32xf32> to vector<64x32xbf16>
    %86 = arith.truncf %83 : vector<128x32xf32> to vector<128x32xbf16>
    %cst_39 = arith.constant dense<0.000000e+00> : vector<64x128xf32>
    %87 = tpu.matmul %85, %86, %cst_39 {dimension_numbers = #tpu.dot_dimension_numbers<[1], [1], [0], [0], [0, 0, 1, 0], [], []>} : vector<64x32xbf16>, vector<128x32xbf16>, vector<64x128xf32> -> vector<64x128xf32>
    %cst_40 = arith.constant dense<0xFF800000> : vector<64xf32>
    %88 = vector.multi_reduction <maximumf>, %87, %cst_40 [1] : vector<64x128xf32> to vector<64xf32>
    %89 = vector.shape_cast %88 : vector<64xf32> to vector<64x1xf32>
    %90 = vector.broadcast %89 : vector<64x1xf32> to vector<64x128xf32>
    %91 = arith.subf %87, %90 : vector<64x128xf32>
    %92 = math.exp %91 : vector<64x128xf32>
    %cst_41 = arith.constant dense<0.000000e+00> : vector<64xf32>
    %93 = vector.multi_reduction <add>, %92, %cst_41 [1] : vector<64x128xf32> to vector<64xf32>
    %94 = vector.shape_cast %93 : vector<64xf32> to vector<64x1xf32>
    %95 = vector.broadcast %94 : vector<64x1xf32> to vector<64x128xf32>
    %96 = arith.divf %92, %95 : vector<64x128xf32>
    %97 = arith.addf %77, %96 : vector<64x128xf32>
    %98 = arith.truncf %96 : vector<64x128xf32> to vector<64x128xbf16>
    %99 = arith.truncf %84 : vector<128x32xf32> to vector<128x32xbf16>
    %cst_42 = arith.constant dense<0.000000e+00> : vector<64x32xf32>
    %100 = tpu.matmul %98, %99, %cst_42 {dimension_numbers = #tpu.dot_dimension_numbers<[1], [0], [0], [1], [0, 0, 1, 1], [], []>} : vector<64x128xbf16>, vector<128x32xbf16>, vector<64x32xf32> -> vector<64x32xf32>
    %c0_43 = arith.constant 0 : index
    %c96 = arith.constant 96 : index
    %101 = vector.load %arg17[%c0_43, %c96] : memref<64x128xf32, #tpu.memory_space<vmem>>, vector<64x32xf32>
    tpu.vector_store %arg17[%c0_43, %c96], %100 {strides = array<i32>} : memref<64x128xf32, #tpu.memory_space<vmem>>, vector<64x32xf32>,
    %c0_44 = arith.constant 0 : index
    %c0_45 = arith.constant 0 : index
    %102 = vector.load %arg17[%c0_44, %c0_45] : memref<64x128xf32, #tpu.memory_space<vmem>>, vector<64x128xf32>
    %103 = arith.truncf %102 : vector<64x128xf32> to vector<64x128xbf16>
    %c0_46 = arith.constant 0 : index
    %c0_47 = arith.constant 0 : index
    %104 = vector.load %arg8[%c0_46, %c0_47] : memref<128x128xbf16, #tpu.memory_space<vmem>>, vector<128x128xbf16>
    %cst_48 = arith.constant dense<0.000000e+00> : vector<64x128xf32>
    %105 = tpu.matmul %103, %104, %cst_48 {dimension_numbers = #tpu.dot_dimension_numbers<[1], [0], [0], [1], [0, 0, 1, 1], [], []>} : vector<64x128xbf16>, vector<128x128xbf16>, vector<64x128xf32> -> vector<64x128xf32>
    %c0_49 = arith.constant 0 : index
    %c0_50 = arith.constant 0 : index
    %106 = vector.load %arg12[%c0_49, %c0_50] : memref<1x128xf32, #tpu.memory_space<vmem>>, vector<1x128xf32>
    %107 = vector.broadcast %106 : vector<1x128xf32> to vector<64x128xf32>
    %108 = arith.addf %105, %107 : vector<64x128xf32>
    %109 = arith.extf %1 : vector<64x128xbf16> to vector<64x128xf32>
    %110 = arith.addf %109, %108 : vector<64x128xf32>
    %c0_51 = arith.constant 0 : index
    %c0_52 = arith.constant 0 : index
    %111 = vector.load %arg13[%c0_51, %c0_52] : memref<1x128xf32, #tpu.memory_space<vmem>>, vector<1x128xf32>
    %c0_53 = arith.constant 0 : index
    %c0_54 = arith.constant 0 : index
    %112 = vector.load %arg14[%c0_53, %c0_54] : memref<1x128xf32, #tpu.memory_space<vmem>>, vector<1x128xf32>
    %cst_55 = arith.constant dense<0.000000e+00> : vector<64xf32>
    %113 = vector.multi_reduction <add>, %110, %cst_55 [1] : vector<64x128xf32> to vector<64xf32>
    %114 = vector.shape_cast %113 : vector<64xf32> to vector<64x1xf32>
    %cst_56 = arith.constant 1.280000e+02 : f32
    %115 = vector.broadcast %cst_56 : f32 to vector<64x1xf32>
    %116 = arith.divf %114, %115 : vector<64x1xf32>
    %117 = vector.broadcast %116 : vector<64x1xf32> to vector<64x128xf32>
    %118 = arith.subf %110, %117 : vector<64x128xf32>
    %119 = vector.broadcast %116 : vector<64x1xf32> to vector<64x128xf32>
    %120 = arith.subf %110, %119 : vector<64x128xf32>
    %121 = arith.mulf %118, %120 : vector<64x128xf32>
    %cst_57 = arith.constant dense<0.000000e+00> : vector<64xf32>
    %122 = vector.multi_reduction <add>, %121, %cst_57 [1] : vector<64x128xf32> to vector<64xf32>
    %123 = vector.shape_cast %122 : vector<64xf32> to vector<64x1xf32>
    %cst_58 = arith.constant 1.280000e+02 : f32
    %124 = vector.broadcast %cst_58 : f32 to vector<64x1xf32>
    %125 = arith.divf %123, %124 : vector<64x1xf32>
    %126 = vector.broadcast %116 : vector<64x1xf32> to vector<64x128xf32>
    %127 = arith.subf %110, %126 : vector<64x128xf32>
    %cst_59 = arith.constant 9.99999974E-6 : f32
    %128 = vector.broadcast %cst_59 : f32 to vector<64x1xf32>
    %129 = arith.addf %125, %128 : vector<64x1xf32>
    %130 = math.rsqrt %129 : vector<64x1xf32>
    %131 = vector.broadcast %130 : vector<64x1xf32> to vector<64x128xf32>
    %132 = arith.mulf %127, %131 : vector<64x128xf32>
    %133 = vector.broadcast %111 : vector<1x128xf32> to vector<64x128xf32>
    %134 = arith.mulf %132, %133 : vector<64x128xf32>
    %135 = vector.broadcast %112 : vector<1x128xf32> to vector<64x128xf32>
    %136 = arith.addf %134, %135 : vector<64x128xf32>
    %137 = arith.truncf %136 : vector<64x128xf32> to vector<64x128xbf16>
    %c0_60 = arith.constant 0 : index
    %c0_61 = arith.constant 0 : index
    %c0_62 = arith.constant 0 : index
    %138 = vector.load %arg15[%c0_60, %c0_61, %c0_62] : memref<1x64x128xbf16, #tpu.memory_space<vmem>>, vector<1x64x128xbf16>
    %139 = vector.shape_cast %138 : vector<1x64x128xbf16> to vector<64x128xbf16>
    %140 = vector.shape_cast %137 : vector<64x128xbf16> to vector<1x64x128xbf16>
    tpu.vector_store %arg15[%c0_60, %c0_61, %c0_62], %140 {strides = array<i32>} : memref<1x64x128xbf16, #tpu.memory_space<vmem>>, vector<1x64x128xbf16>,
    %cst_63 = arith.constant 2.500000e-01 : f32
    %141 = vector.broadcast %cst_63 : f32 to vector<64x128xf32>
    %142 = arith.mulf %97, %141 : vector<64x128xf32>
    %c0_64 = arith.constant 0 : index
    %c0_65 = arith.constant 0 : index
    %c0_66 = arith.constant 0 : index
    %143 = vector.load %arg16[%c0_64, %c0_65, %c0_66] : memref<1x64x128xf32, #tpu.memory_space<vmem>>, vector<1x64x128xf32>
    %144 = vector.shape_cast %143 : vector<1x64x128xf32> to vector<64x128xf32>
    %145 = vector.shape_cast %142 : vector<64x128xf32> to vector<1x64x128xf32>
    tpu.vector_store %arg16[%c0_64, %c0_65, %c0_66], %145 {strides = array<i32>} : memref<1x64x128xf32, #tpu.memory_space<vmem>>, vector<1x64x128xf32>,
    return
  }
  func.func @transform_0(%arg0: i32, %arg1: i32) -> (i32, i32, i32) {
    %c0_i32 = arith.constant 0 : i32
    %c0_i32_0 = arith.constant 0 : i32
    return %arg0, %arg1, %c0_i32 : i32, i32, i32
  }
  func.func @transform_1(%arg0: i32, %arg1: i32) -> (i32, i32, i32) {
    %c0_i32 = arith.constant 0 : i32
    %c0_i32_0 = arith.constant 0 : i32
    %c0_i32_1 = arith.constant 0 : i32
    return %arg0, %c0_i32, %c0_i32_0 : i32, i32, i32
  }
  func.func @transform_2(%arg0: i32, %arg1: i32) -> (i32, i32, i32) {
    %c0_i32 = arith.constant 0 : i32
    %c0_i32_0 = arith.constant 0 : i32
    %c0_i32_1 = arith.constant 0 : i32
    return %arg0, %c0_i32, %c0_i32_0 : i32, i32, i32
  }
  func.func @transform_3(%arg0: i32, %arg1: i32) -> (i32, i32) {
    %c0_i32 = arith.constant 0 : i32
    %c0_i32_0 = arith.constant 0 : i32
    %c0_i32_1 = arith.constant 0 : i32
    return %c0_i32, %c0_i32_0 : i32, i32
  }
  func.func @transform_4(%arg0: i32, %arg1: i32) -> (i32, i32) {
    %c0_i32 = arith.constant 0 : i32
    %c0_i32_0 = arith.constant 0 : i32
    %c0_i32_1 = arith.constant 0 : i32
    return %c0_i32, %c0_i32_0 : i32, i32
  }
  func.func @transform_5(%arg0: i32, %arg1: i32) -> (i32, i32) {
    %c0_i32 = arith.constant 0 : i32
    %c0_i32_0 = arith.constant 0 : i32
    %c0_i32_1 = arith.constant 0 : i32
    return %c0_i32, %c0_i32_0 : i32, i32
  }
  func.func @transform_6(%arg0: i32, %arg1: i32) -> (i32, i32) {
    %c0_i32 = arith.constant 0 : i32
    %c0_i32_0 = arith.constant 0 : i32
    %c0_i32_1 = arith.constant 0 : i32
    return %c0_i32, %c0_i32_0 : i32, i32
  }
  func.func @transform_7(%arg0: i32, %arg1: i32) -> (i32, i32) {
    %c0_i32 = arith.constant 0 : i32
    %c0_i32_0 = arith.constant 0 : i32
    %c0_i32_1 = arith.constant 0 : i32
    return %c0_i32, %c0_i32_0 : i32, i32
  }
  func.func @transform_8(%arg0: i32, %arg1: i32) -> (i32, i32) {
    %c0_i32 = arith.constant 0 : i32
    %c0_i32_0 = arith.constant 0 : i32
    %c0_i32_1 = arith.constant 0 : i32
    return %c0_i32, %c0_i32_0 : i32, i32
  }
  func.func @transform_9(%arg0: i32, %arg1: i32) -> (i32, i32) {
    %c0_i32 = arith.constant 0 : i32
    %c0_i32_0 = arith.constant 0 : i32
    %c0_i32_1 = arith.constant 0 : i32
    return %c0_i32, %c0_i32_0 : i32, i32
  }
  func.func @transform_10(%arg0: i32, %arg1: i32) -> (i32, i32) {
    %c0_i32 = arith.constant 0 : i32
    %c0_i32_0 = arith.constant 0 : i32
    %c0_i32_1 = arith.constant 0 : i32
    return %c0_i32, %c0_i32_0 : i32, i32
  }
  func.func @transform_11(%arg0: i32, %arg1: i32) -> (i32, i32) {
    %c0_i32 = arith.constant 0 : i32
    %c0_i32_0 = arith.constant 0 : i32
    %c0_i32_1 = arith.constant 0 : i32
    return %c0_i32, %c0_i32_0 : i32, i32
  }
  func.func @transform_12(%arg0: i32, %arg1: i32) -> (i32, i32) {
    %c0_i32 = arith.constant 0 : i32
    %c0_i32_0 = arith.constant 0 : i32
    %c0_i32_1 = arith.constant 0 : i32
    return %c0_i32, %c0_i32_0 : i32, i32
  }
  func.func @transform_13(%arg0: i32, %arg1: i32) -> (i32, i32, i32) {
    %c0_i32 = arith.constant 0 : i32
    %c0_i32_0 = arith.constant 0 : i32
    return %arg0, %arg1, %c0_i32 : i32, i32, i32
  }
  func.func @transform_14(%arg0: i32, %arg1: i32) -> (i32, i32, i32) {
    %c0_i32 = arith.constant 0 : i32
    %c0_i32_0 = arith.constant 0 : i32
    return %arg0, %arg1, %c0_i32 : i32, i32, i32
  }
}

module attributes {stable_mosaic.version = 11 : i64} {
  func.func @_ffn_ln_kernel(%arg0: i32, %arg1: memref<128x128xbf16, #tpu.memory_space<vmem>>, %arg2: memref<128x256xbf16, #tpu.memory_space<vmem>>, %arg3: memref<1x256xf32, #tpu.memory_space<vmem>>, %arg4: memref<256x128xbf16, #tpu.memory_space<vmem>>, %arg5: memref<1x128xf32, #tpu.memory_space<vmem>>, %arg6: memref<1x128xf32, #tpu.memory_space<vmem>>, %arg7: memref<1x128xf32, #tpu.memory_space<vmem>>, %arg8: memref<128x128xbf16, #tpu.memory_space<vmem>>) attributes {dimension_semantics = [#tpu.dimension_semantics<parallel>], iteration_bounds = array<i64: 2>, scalar_prefetch = 0 : i64, scratch_operands = 0 : i64, tpu.core_type = #tpu.core_type<tc>, window_params = [{transform_indices = @transform_0, window_bounds = array<i64: 128, 128>}, {pipeline_mode = #tpu.pipeline_mode<synchronous>, transform_indices = @transform_1, window_bounds = array<i64: 128, 256>}, {pipeline_mode = #tpu.pipeline_mode<synchronous>, transform_indices = @transform_2, window_bounds = array<i64: 1, 256>}, {pipeline_mode = #tpu.pipeline_mode<synchronous>, transform_indices = @transform_3, window_bounds = array<i64: 256, 128>}, {pipeline_mode = #tpu.pipeline_mode<synchronous>, transform_indices = @transform_4, window_bounds = array<i64: 1, 128>}, {pipeline_mode = #tpu.pipeline_mode<synchronous>, transform_indices = @transform_5, window_bounds = array<i64: 1, 128>}, {pipeline_mode = #tpu.pipeline_mode<synchronous>, transform_indices = @transform_6, window_bounds = array<i64: 1, 128>}, {transform_indices = @transform_7, window_bounds = array<i64: 128, 128>}]} {
    %c0 = arith.constant 0 : index
    %c0_0 = arith.constant 0 : index
    %0 = vector.load %arg1[%c0, %c0_0] : memref<128x128xbf16, #tpu.memory_space<vmem>>, vector<128x128xbf16>
    %1 = arith.extf %0 : vector<128x128xbf16> to vector<128x128xf32>
    %2 = arith.truncf %1 : vector<128x128xf32> to vector<128x128xbf16>
    %c0_1 = arith.constant 0 : index
    %c0_2 = arith.constant 0 : index
    %3 = vector.load %arg2[%c0_1, %c0_2] : memref<128x256xbf16, #tpu.memory_space<vmem>>, vector<128x256xbf16>
    %cst = arith.constant dense<0.000000e+00> : vector<128x256xf32>
    %4 = tpu.matmul %2, %3, %cst {dimension_numbers = #tpu.dot_dimension_numbers<[1], [0], [0], [1], [0, 0, 1, 1], [], []>} : vector<128x128xbf16>, vector<128x256xbf16>, vector<128x256xf32> -> vector<128x256xf32>
    %c0_3 = arith.constant 0 : index
    %c0_4 = arith.constant 0 : index
    %5 = vector.load %arg3[%c0_3, %c0_4] : memref<1x256xf32, #tpu.memory_space<vmem>>, vector<1x256xf32>
    %6 = vector.broadcast %5 : vector<1x256xf32> to vector<128x256xf32>
    %7 = arith.addf %4, %6 : vector<128x256xf32>
    %cst_5 = arith.constant 0.000000e+00 : f32
    %8 = vector.broadcast %cst_5 : f32 to vector<128x256xf32>
    %9 = arith.maximumf %7, %8 : vector<128x256xf32>
    %10 = arith.truncf %9 : vector<128x256xf32> to vector<128x256xbf16>
    %c0_6 = arith.constant 0 : index
    %c0_7 = arith.constant 0 : index
    %11 = vector.load %arg4[%c0_6, %c0_7] : memref<256x128xbf16, #tpu.memory_space<vmem>>, vector<256x128xbf16>
    %cst_8 = arith.constant dense<0.000000e+00> : vector<128x128xf32>
    %12 = tpu.matmul %10, %11, %cst_8 {dimension_numbers = #tpu.dot_dimension_numbers<[1], [0], [0], [1], [0, 0, 1, 1], [], []>} : vector<128x256xbf16>, vector<256x128xbf16>, vector<128x128xf32> -> vector<128x128xf32>
    %c0_9 = arith.constant 0 : index
    %c0_10 = arith.constant 0 : index
    %13 = vector.load %arg5[%c0_9, %c0_10] : memref<1x128xf32, #tpu.memory_space<vmem>>, vector<1x128xf32>
    %14 = vector.broadcast %13 : vector<1x128xf32> to vector<128x128xf32>
    %15 = arith.addf %12, %14 : vector<128x128xf32>
    %16 = arith.addf %1, %15 : vector<128x128xf32>
    %c0_11 = arith.constant 0 : index
    %c0_12 = arith.constant 0 : index
    %17 = vector.load %arg6[%c0_11, %c0_12] : memref<1x128xf32, #tpu.memory_space<vmem>>, vector<1x128xf32>
    %c0_13 = arith.constant 0 : index
    %c0_14 = arith.constant 0 : index
    %18 = vector.load %arg7[%c0_13, %c0_14] : memref<1x128xf32, #tpu.memory_space<vmem>>, vector<1x128xf32>
    %cst_15 = arith.constant dense<0.000000e+00> : vector<128xf32>
    %19 = vector.multi_reduction <add>, %16, %cst_15 [1] : vector<128x128xf32> to vector<128xf32>
    %20 = vector.shape_cast %19 : vector<128xf32> to vector<128x1xf32>
    %cst_16 = arith.constant 1.280000e+02 : f32
    %21 = vector.broadcast %cst_16 : f32 to vector<128x1xf32>
    %22 = arith.divf %20, %21 : vector<128x1xf32>
    %23 = vector.broadcast %22 : vector<128x1xf32> to vector<128x128xf32>
    %24 = arith.subf %16, %23 : vector<128x128xf32>
    %25 = vector.broadcast %22 : vector<128x1xf32> to vector<128x128xf32>
    %26 = arith.subf %16, %25 : vector<128x128xf32>
    %27 = arith.mulf %24, %26 : vector<128x128xf32>
    %cst_17 = arith.constant dense<0.000000e+00> : vector<128xf32>
    %28 = vector.multi_reduction <add>, %27, %cst_17 [1] : vector<128x128xf32> to vector<128xf32>
    %29 = vector.shape_cast %28 : vector<128xf32> to vector<128x1xf32>
    %cst_18 = arith.constant 1.280000e+02 : f32
    %30 = vector.broadcast %cst_18 : f32 to vector<128x1xf32>
    %31 = arith.divf %29, %30 : vector<128x1xf32>
    %32 = vector.broadcast %22 : vector<128x1xf32> to vector<128x128xf32>
    %33 = arith.subf %16, %32 : vector<128x128xf32>
    %cst_19 = arith.constant 9.99999974E-6 : f32
    %34 = vector.broadcast %cst_19 : f32 to vector<128x1xf32>
    %35 = arith.addf %31, %34 : vector<128x1xf32>
    %36 = math.rsqrt %35 : vector<128x1xf32>
    %37 = vector.broadcast %36 : vector<128x1xf32> to vector<128x128xf32>
    %38 = arith.mulf %33, %37 : vector<128x128xf32>
    %39 = vector.broadcast %17 : vector<1x128xf32> to vector<128x128xf32>
    %40 = arith.mulf %38, %39 : vector<128x128xf32>
    %41 = vector.broadcast %18 : vector<1x128xf32> to vector<128x128xf32>
    %42 = arith.addf %40, %41 : vector<128x128xf32>
    %43 = arith.truncf %42 : vector<128x128xf32> to vector<128x128xbf16>
    %c0_20 = arith.constant 0 : index
    %c0_21 = arith.constant 0 : index
    %44 = vector.load %arg8[%c0_20, %c0_21] : memref<128x128xbf16, #tpu.memory_space<vmem>>, vector<128x128xbf16>
    tpu.vector_store %arg8[%c0_20, %c0_21], %43 {strides = array<i32>} : memref<128x128xbf16, #tpu.memory_space<vmem>>, vector<128x128xbf16>,
    return
  }
  func.func @transform_0(%arg0: i32) -> (i32, i32) {
    %c0_i32 = arith.constant 0 : i32
    %c0_i32_0 = arith.constant 0 : i32
    return %arg0, %c0_i32 : i32, i32
  }
  func.func @transform_1(%arg0: i32) -> (i32, i32) {
    %c0_i32 = arith.constant 0 : i32
    %c0_i32_0 = arith.constant 0 : i32
    %c0_i32_1 = arith.constant 0 : i32
    return %c0_i32, %c0_i32_0 : i32, i32
  }
  func.func @transform_2(%arg0: i32) -> (i32, i32) {
    %c0_i32 = arith.constant 0 : i32
    %c0_i32_0 = arith.constant 0 : i32
    %c0_i32_1 = arith.constant 0 : i32
    return %c0_i32, %c0_i32_0 : i32, i32
  }
  func.func @transform_3(%arg0: i32) -> (i32, i32) {
    %c0_i32 = arith.constant 0 : i32
    %c0_i32_0 = arith.constant 0 : i32
    %c0_i32_1 = arith.constant 0 : i32
    return %c0_i32, %c0_i32_0 : i32, i32
  }
  func.func @transform_4(%arg0: i32) -> (i32, i32) {
    %c0_i32 = arith.constant 0 : i32
    %c0_i32_0 = arith.constant 0 : i32
    %c0_i32_1 = arith.constant 0 : i32
    return %c0_i32, %c0_i32_0 : i32, i32
  }
  func.func @transform_5(%arg0: i32) -> (i32, i32) {
    %c0_i32 = arith.constant 0 : i32
    %c0_i32_0 = arith.constant 0 : i32
    %c0_i32_1 = arith.constant 0 : i32
    return %c0_i32, %c0_i32_0 : i32, i32
  }
  func.func @transform_6(%arg0: i32) -> (i32, i32) {
    %c0_i32 = arith.constant 0 : i32
    %c0_i32_0 = arith.constant 0 : i32
    %c0_i32_1 = arith.constant 0 : i32
    return %c0_i32, %c0_i32_0 : i32, i32
  }
  func.func @transform_7(%arg0: i32) -> (i32, i32) {
    %c0_i32 = arith.constant 0 : i32
    %c0_i32_0 = arith.constant 0 : i32
    return %arg0, %c0_i32 : i32, i32
  }
}

module attributes {stable_mosaic.version = 11 : i64} {
  func.func @_ln_kernel(%arg0: i32, %arg1: memref<128x128xbf16, #tpu.memory_space<vmem>>, %arg2: memref<1x128xf32, #tpu.memory_space<vmem>>, %arg3: memref<1x128xf32, #tpu.memory_space<vmem>>, %arg4: memref<128x128xf32, #tpu.memory_space<vmem>>) attributes {dimension_semantics = [#tpu.dimension_semantics<parallel>], iteration_bounds = array<i64: 2>, scalar_prefetch = 0 : i64, scratch_operands = 0 : i64, tpu.core_type = #tpu.core_type<tc>, window_params = [{transform_indices = @transform_0, window_bounds = array<i64: 128, 128>}, {pipeline_mode = #tpu.pipeline_mode<synchronous>, transform_indices = @transform_1, window_bounds = array<i64: 1, 128>}, {pipeline_mode = #tpu.pipeline_mode<synchronous>, transform_indices = @transform_2, window_bounds = array<i64: 1, 128>}, {transform_indices = @transform_3, window_bounds = array<i64: 128, 128>}]} {
    %c0 = arith.constant 0 : index
    %c0_0 = arith.constant 0 : index
    %0 = vector.load %arg1[%c0, %c0_0] : memref<128x128xbf16, #tpu.memory_space<vmem>>, vector<128x128xbf16>
    %1 = arith.extf %0 : vector<128x128xbf16> to vector<128x128xf32>
    %c0_1 = arith.constant 0 : index
    %c0_2 = arith.constant 0 : index
    %2 = vector.load %arg2[%c0_1, %c0_2] : memref<1x128xf32, #tpu.memory_space<vmem>>, vector<1x128xf32>
    %c0_3 = arith.constant 0 : index
    %c0_4 = arith.constant 0 : index
    %3 = vector.load %arg3[%c0_3, %c0_4] : memref<1x128xf32, #tpu.memory_space<vmem>>, vector<1x128xf32>
    %cst = arith.constant dense<0.000000e+00> : vector<128xf32>
    %4 = vector.multi_reduction <add>, %1, %cst [1] : vector<128x128xf32> to vector<128xf32>
    %5 = vector.shape_cast %4 : vector<128xf32> to vector<128x1xf32>
    %cst_5 = arith.constant 1.280000e+02 : f32
    %6 = vector.broadcast %cst_5 : f32 to vector<128x1xf32>
    %7 = arith.divf %5, %6 : vector<128x1xf32>
    %8 = vector.broadcast %7 : vector<128x1xf32> to vector<128x128xf32>
    %9 = arith.subf %1, %8 : vector<128x128xf32>
    %10 = vector.broadcast %7 : vector<128x1xf32> to vector<128x128xf32>
    %11 = arith.subf %1, %10 : vector<128x128xf32>
    %12 = arith.mulf %9, %11 : vector<128x128xf32>
    %cst_6 = arith.constant dense<0.000000e+00> : vector<128xf32>
    %13 = vector.multi_reduction <add>, %12, %cst_6 [1] : vector<128x128xf32> to vector<128xf32>
    %14 = vector.shape_cast %13 : vector<128xf32> to vector<128x1xf32>
    %cst_7 = arith.constant 1.280000e+02 : f32
    %15 = vector.broadcast %cst_7 : f32 to vector<128x1xf32>
    %16 = arith.divf %14, %15 : vector<128x1xf32>
    %17 = vector.broadcast %7 : vector<128x1xf32> to vector<128x128xf32>
    %18 = arith.subf %1, %17 : vector<128x128xf32>
    %cst_8 = arith.constant 9.99999974E-6 : f32
    %19 = vector.broadcast %cst_8 : f32 to vector<128x1xf32>
    %20 = arith.addf %16, %19 : vector<128x1xf32>
    %21 = math.rsqrt %20 : vector<128x1xf32>
    %22 = vector.broadcast %21 : vector<128x1xf32> to vector<128x128xf32>
    %23 = arith.mulf %18, %22 : vector<128x128xf32>
    %24 = vector.broadcast %2 : vector<1x128xf32> to vector<128x128xf32>
    %25 = arith.mulf %23, %24 : vector<128x128xf32>
    %26 = vector.broadcast %3 : vector<1x128xf32> to vector<128x128xf32>
    %27 = arith.addf %25, %26 : vector<128x128xf32>
    %c0_9 = arith.constant 0 : index
    %c0_10 = arith.constant 0 : index
    %28 = vector.load %arg4[%c0_9, %c0_10] : memref<128x128xf32, #tpu.memory_space<vmem>>, vector<128x128xf32>
    tpu.vector_store %arg4[%c0_9, %c0_10], %27 {strides = array<i32>} : memref<128x128xf32, #tpu.memory_space<vmem>>, vector<128x128xf32>,
    return
  }
  func.func @transform_0(%arg0: i32) -> (i32, i32) {
    %c0_i32 = arith.constant 0 : i32
    %c0_i32_0 = arith.constant 0 : i32
    return %arg0, %c0_i32 : i32, i32
  }
  func.func @transform_1(%arg0: i32) -> (i32, i32) {
    %c0_i32 = arith.constant 0 : i32
    %c0_i32_0 = arith.constant 0 : i32
    %c0_i32_1 = arith.constant 0 : i32
    return %c0_i32, %c0_i32_0 : i32, i32
  }
  func.func @transform_2(%arg0: i32) -> (i32, i32) {
    %c0_i32 = arith.constant 0 : i32
    %c0_i32_0 = arith.constant 0 : i32
    %c0_i32_1 = arith.constant 0 : i32
    return %c0_i32, %c0_i32_0 : i32, i32
  }
  func.func @transform_3(%arg0: i32) -> (i32, i32) {
    %c0_i32 = arith.constant 0 : i32
    %c0_i32_0 = arith.constant 0 : i32
    return %arg0, %c0_i32 : i32, i32
  }
}

</mosaic_0001>

<llo_original>
// kernel: run.9
$region0: #{run.9}
  #allocation0 [shape = 'u32[]', space=smem, size = 0x4, offset = 0x4, fixed_abs, tag = 'smem constant byte address 0x4 - core index']
  #allocation1 [shape = 'u32[144,128]{1,0:T(1,128)}', space=vmem, size = 0x12000, scoped, tag = 'internal scratch']
  %s0 = inlined_call_operand.vmem [shape: bf16[256,128], index: 0, kind: input, shape index: {}]
  %s1 = inlined_call_operand.vmem [shape: f32[1,128], index: 1, kind: input, shape index: {}]
  %s2 = inlined_call_operand.vmem [shape: f32[1,128], index: 2, kind: input, shape index: {}]
  %s3 = inlined_call_operand.hbm [shape: f32[256,128], index: 3, kind: output, shape index: {}]
  %s4 = sld [smem:[#allocation0]]
  $region45: #{run.9} parent=0
    _
  %s6 = ssub.s32 1, %s4
  %s7 = scalar_select 0, %s6, %s4
  $region1: #{run.9} parent=0
    #allocation2 [shape = 'u8[131072]{0}', space=vmem, size = 0x20000, scoped, tag = 'output window, operand 0']
    #allocation3 [shape = 's32[2]{0}', space=sflag, size = 0x8, scoped, tag = 'scoped memory for run.9']
    %8 = vsyncpa [#allocation3], 0
    %s9 = scalar_lea.sflag [#allocation3], 1
    %10 = vsyncpa %s9, 0
    loop: start=0, step=1, limit=4
    $region2: #{run.9} parent=1 // loop_pre_header
      _
    $region3: #{run.9} parent=1 // loop_header
      %s12 = sphi 0, %s16
      %p13 = scmp.ge.s32.totalorder %s12, 4
      %s22 = sphi 0, %s24
      %s25 = sphi 0, %s22
      %s26 = sphi 0, %s25
      %s42 = sphi 0, %s26
      %s46 = sphi 0, %s46
      %s48 = sphi 0, %s46
      %s49 = sphi 0, %s48
      %s63 = sphi 0, %s49
      %s67 = sphi 0, %s67
      %s69 = sphi 0, %s67
      %s70 = sphi 0, %s69
      %s84 = sphi 0, %s70
      %s90 = sphi 0, %s92
      %s93 = sphi 0, %s90
      %s94 = sphi 0, %s93
      %s110 = sphi 0, %s94
    $region4: #{run.9} parent=1 // loop_header_branch
      %15 = sbr.rel (%p13) target = $region8
    $region5: #{run.9} parent=1 // loop_body
      %s17 = ssub.s32 %s12, 1
      %s18 = ssub.s32 %s12, 2
      %s19 = sadd.s32 %s12, 1
      %s20 = ssub.s32 %s12, %s19
      %p21 = scmp.eq.s32.totalorder %s20, 0
      %s23 = sadd.s32 %s22, 1
      %s24 = scalar_select %p21, %s22, %s23
      %p27 = pneg %p21
      %p28 = scmp.eq.s32.totalorder %s12, 1
      %p29 = por %p27, %p28
      %p30 = scmp.ne.s32.totalorder %s22, %s25
      %p31 = scmp.eq.s32.totalorder %s12, 0
      %p32 = por %p30, %p31
      %p33 = scmp.ne.s32.totalorder %s22, %s25
      %p34 = scmp.eq.s32.totalorder %s17, 1
      %p35 = por %p33, %p34
      %p36 = scmp.ne.s32.totalorder %s25, %s26
      %p37 = scmp.eq.s32.totalorder %s17, 0
      %p38 = por %p36, %p37
      %p39 = scmp.ne.s32.totalorder %s25, %s26
      %p40 = scmp.eq.s32.totalorder %s18, 1
      %p41 = por %p39, %p40
      %p43 = scmp.ne.s32.totalorder %s26, %s42
      %p44 = scmp.eq.s32.totalorder %s18, 0
      %p45 = por %p43, %p44
      %s47 = sadd.s32 %s46, 1
      %p50 = scmp.eq.s32.totalorder %s12, 1
      %p51 = scmp.ne.s32.totalorder %s46, %s48
      %p52 = scmp.eq.s32.totalorder %s12, 0
      %p53 = por %p51, %p52
      %p54 = scmp.ne.s32.totalorder %s46, %s48
      %p55 = scmp.eq.s32.totalorder %s17, 1
      %p56 = por %p54, %p55
      %p57 = scmp.ne.s32.totalorder %s48, %s49
      %p58 = scmp.eq.s32.totalorder %s17, 0
      %p59 = por %p57, %p58
      %p60 = scmp.ne.s32.totalorder %s48, %s49
      %p61 = scmp.eq.s32.totalorder %s18, 1
      %p62 = por %p60, %p61
      %p64 = scmp.ne.s32.totalorder %s49, %s63
      %p65 = scmp.eq.s32.totalorder %s18, 0
      %p66 = por %p64, %p65
      %s68 = sadd.s32 %s67, 1
      %p71 = scmp.eq.s32.totalorder %s12, 1
      %p72 = scmp.ne.s32.totalorder %s67, %s69
      %p73 = scmp.eq.s32.totalorder %s12, 0
      %p74 = por %p72, %p73
      %p75 = scmp.ne.s32.totalorder %s67, %s69
      %p76 = scmp.eq.s32.totalorder %s17, 1
      %p77 = por %p75, %p76
      %p78 = scmp.ne.s32.totalorder %s69, %s70
      %p79 = scmp.eq.s32.totalorder %s17, 0
      %p80 = por %p78, %p79
      %p81 = scmp.ne.s32.totalorder %s69, %s70
      %p82 = scmp.eq.s32.totalorder %s18, 1
      %p83 = por %p81, %p82
      %p85 = scmp.ne.s32.totalorder %s70, %s84
      %p86 = scmp.eq.s32.totalorder %s18, 0
      %p87 = por %p85, %p86
      %s88 = ssub.s32 %s12, %s19
      %p89 = scmp.eq.s32.totalorder %s88, 0
      %s91 = sadd.s32 %s90, 1
      %s92 = scalar_select %p89, %s90, %s91
      %p95 = pneg %p89
      %p96 = scmp.eq.s32.totalorder %s12, 1
      %p97 = por %p95, %p96
      %p98 = scmp.ne.s32.totalorder %s90, %s93
      %p99 = scmp.eq.s32.totalorder %s12, 0
      %p100 = por %p98, %p99
      %p101 = scmp.ne.s32.totalorder %s90, %s93
      %p102 = scmp.eq.s32.totalorder %s17, 1
      %p103 = por %p101, %p102
      %p104 = scmp.ne.s32.totalorder %s93, %s94
      %p105 = scmp.eq.s32.totalorder %s17, 0
      %p106 = por %p104, %p105
      %p107 = scmp.ne.s32.totalorder %s93, %s94
      %p108 = scmp.eq.s32.totalorder %s18, 1
      %p109 = por %p107, %p108
      %p111 = scmp.ne.s32.totalorder %s94, %s110
      %p112 = scmp.eq.s32.totalorder %s18, 0
      %p113 = por %p111, %p112
      %p114 = scmp.le.s32.totalorder 1, %s12
      %p115 = scmp.lt.s32.totalorder %s12, 3
      %p116 = pnand %p114, %p115
      %p117 = pneg %p116
      // Predicated region
      $region9: #{run.9} parent=5 // pred_check
        _
      $region10: #{run.9} parent=5 // pred_check_branch
        %119 = sbr.rel (%p116) target = $region12
      $region11: #{run.9} parent=5 // pred_region
        %s120 = ssub.s32 %s12, 1
        // Predicated region
        $region13: #{run.9} parent=11 // pred_check
          %p121 = pneg %p59
        $region14: #{run.9} parent=11 // pred_check_branch
          %123 = sbr.rel (%p121) target = $region16
        $region15: #{run.9} parent=11 // pred_region
          _
        $region16: #{run.9} parent=11 // pred_fallthru
          _
        // Predicated region
        $region17: #{run.9} parent=11 // pred_check
          %p124 = pneg %p80
        $region18: #{run.9} parent=11 // pred_check_branch
          %126 = sbr.rel (%p124) target = $region20
        $region19: #{run.9} parent=11 // pred_region
          _
        $region20: #{run.9} parent=11 // pred_fallthru
          _
      $region12: #{run.9} parent=5 // pred_fallthru
        _
      %p127 = scmp.lt.s32.totalorder %s12, 2
      // Predicated region
      $region21: #{run.9} parent=5 // pred_check
        %p128 = pneg %p127
      $region22: #{run.9} parent=5 // pred_check_branch
        %130 = sbr.rel (%p128) target = $region24
      $region23: #{run.9} parent=5 // pred_region
        // Predicated region
        $region25: #{run.9} parent=23 // pred_check
          %p131 = pneg %p32
        $region26: #{run.9} parent=23 // pred_check_branch
          %133 = sbr.rel (%p131) target = $region28
        $region27: #{run.9} parent=23 // pred_region
          %s134 = smul.u32 16, %s12
          %p135 = scmp.lt.s32.totalorder %s134, 31
          %s136 = scalar_select %p135, %s134, 31
          %s137 = smul.addr %s136, 4
          %s138 = scalar_lea.vmem %s0, %s137
          %s139 = smul.u32 16, %s12
        $region28: #{run.9} parent=23 // pred_fallthru
          _
      $region24: #{run.9} parent=5 // pred_fallthru
        _
      %p140 = scmp.le.s32.totalorder 1, %s12
      %p141 = scmp.lt.s32.totalorder %s12, 3
      %p142 = pnand %p140, %p141
      %p143 = pneg %p142
      // Predicated region
      $region29: #{run.9} parent=5 // pred_check
        _
      $region30: #{run.9} parent=5 // pred_check_branch
        %145 = sbr.rel (%p142) target = $region32
      $region31: #{run.9} parent=5 // pred_region
        %s146 = ssub.s32 %s12, 1
        %s147 = smul.u32 16, %s17
        %p148 = scmp.lt.s32.totalorder %s147, 31
        %s149 = scalar_select %p148, %s147, 31
        %s150 = smul.addr %s149, 4
        %s151 = scalar_lea.vmem %s0, %s150
        %p152 = pneg %p38
        %p153 = pneg %p35
        %p154 = pneg %p59
        %p155 = pneg %p56
        %p156 = pneg %p80
        %p157 = pneg %p77
        %p158 = pneg %p106
        %p159 = pneg %p103
        %s160 = sand.u32 %s93, 1
        %s161 = scalar_lea.sflag [#allocation3], %s160
        %s162 = sand.u32 %s93, 1
        %s163 = smul.addr %s162, 128
        %s164 = scalar_lea.vmem [#allocation2], %s163
        %s165 = smul.u32 16, %s17
        %p166 = scmp.lt.s32.totalorder %s165, 31
        %s167 = scalar_select %p166, %s165, 31
        %s168 = smul.addr %s167, 4
        %s169 = scalar_lea.vmem %s0, %s168
        %s170 = smul.u32 16, %s17
        %s171 = smul.u32 16, %s17
        %v172 = vld [vmem:[%s169] sm:$0xf]
        %v173 = vld [vmem:[%s169 + $0x4] sm:$0xf]
        %v174 = vld [vmem:[%s169 + $0x8] sm:$0xf]
        %v175 = vld [vmem:[%s169 + $0xc] sm:$0xf]
        %v176 = vld [vmem:[%s169 + $0x10] sm:$0xf]
        %v177 = vld [vmem:[%s169 + $0x14] sm:$0xf]
        %v178 = vld [vmem:[%s169 + $0x18] sm:$0xf]
        %v179 = vld [vmem:[%s169 + $0x1c] sm:$0xf]
        %v180 = vld [vmem:[%s169 + $0x20] sm:$0xf]
        %v181 = vld [vmem:[%s169 + $0x24] sm:$0xf]
        %v182 = vld [vmem:[%s169 + $0x28] sm:$0xf]
        %v183 = vld [vmem:[%s169 + $0x2c] sm:$0xf]
        %v184 = vld [vmem:[%s169 + $0x30] sm:$0xf]
        %v185 = vld [vmem:[%s169 + $0x34] sm:$0xf]
        %v186 = vld [vmem:[%s169 + $0x38] sm:$0xf]
        %v187 = vld [vmem:[%s169 + $0x3c] sm:$0xf]
        %v188 = vunpack.c.l.bf16 %v172
        %v189 = vunpack.c.l.bf16 %v173
        %v190 = vunpack.c.l.bf16 %v174
        %v191 = vunpack.c.l.bf16 %v175
        %v192 = vunpack.c.l.bf16 %v176
        %v193 = vunpack.c.l.bf16 %v177
        %v194 = vunpack.c.l.bf16 %v178
        %v195 = vunpack.c.l.bf16 %v179
        %v196 = vunpack.c.l.bf16 %v180
        %v197 = vunpack.c.l.bf16 %v181
        %v198 = vunpack.c.l.bf16 %v182
        %v199 = vunpack.c.l.bf16 %v183
        %v200 = vunpack.c.l.bf16 %v184
        %v201 = vunpack.c.l.bf16 %v185
        %v202 = vunpack.c.l.bf16 %v186
        %v203 = vunpack.c.l.bf16 %v187
        %v204 = vld [vmem:[%s1] sm:$0x1]
        %v205 = vld [vmem:[%s2] sm:$0x1]
        %206 = vadd.xlane.f32.xlu0 %v188
        %v207 = vpop.xlane.xlu0 %206
        %208 = vadd.xlane.f32.xlu0 %v189
        %v209 = vpop.xlane.xlu0 %208
        %210 = vadd.xlane.f32.xlu0 %v190
        %v211 = vpop.xlane.xlu0 %210
        %212 = vadd.xlane.f32.xlu0 %v191
        %v213 = vpop.xlane.xlu0 %212
        %214 = vadd.xlane.f32.xlu0 %v192
        %v215 = vpop.xlane.xlu0 %214
        %216 = vadd.xlane.f32.xlu0 %v193
        %v217 = vpop.xlane.xlu0 %216
        %218 = vadd.xlane.f32.xlu0 %v194
        %v219 = vpop.xlane.xlu0 %218
        %220 = vadd.xlane.f32.xlu0 %v195
        %v221 = vpop.xlane.xlu0 %220
        %222 = vadd.xlane.f32.xlu0 %v196
        %v223 = vpop.xlane.xlu0 %222
        %224 = vadd.xlane.f32.xlu0 %v197
        %v225 = vpop.xlane.xlu0 %224
        %226 = vadd.xlane.f32.xlu0 %v198
        %v227 = vpop.xlane.xlu0 %226
        %228 = vadd.xlane.f32.xlu0 %v199
        %v229 = vpop.xlane.xlu0 %228
        %230 = vadd.xlane.f32.xlu0 %v200
        %v231 = vpop.xlane.xlu0 %230
        %232 = vadd.xlane.f32.xlu0 %v201
        %v233 = vpop.xlane.xlu0 %232
        %234 = vadd.xlane.f32.xlu0 %v202
        %v235 = vpop.xlane.xlu0 %234
        %236 = vadd.xlane.f32.xlu0 %v203
        %v237 = vpop.xlane.xlu0 %236
        %v238 = vrcp.pop 128.0
        %v239 = vmul.f32 %v207, %v238
        %v240 = vmul.f32 %v209, %v238
        %v241 = vmul.f32 %v211, %v238
        %v242 = vmul.f32 %v213, %v238
        %v243 = vmul.f32 %v215, %v238
        %v244 = vmul.f32 %v217, %v238
        %v245 = vmul.f32 %v219, %v238
        %v246 = vmul.f32 %v221, %v238
        %v247 = vmul.f32 %v223, %v238
        %v248 = vmul.f32 %v225, %v238
        %v249 = vmul.f32 %v227, %v238
        %v250 = vmul.f32 %v229, %v238
        %v251 = vmul.f32 %v231, %v238
        %v252 = vmul.f32 %v233, %v238
        %v253 = vmul.f32 %v235, %v238
        %v254 = vmul.f32 %v237, %v238
        %v255 = vsub.f32 %v188, %v239
        %v256 = vsub.f32 %v189, %v240
        %v257 = vsub.f32 %v190, %v241
        %v258 = vsub.f32 %v191, %v242
        %v259 = vsub.f32 %v192, %v243
        %v260 = vsub.f32 %v193, %v244
        %v261 = vsub.f32 %v194, %v245
        %v262 = vsub.f32 %v195, %v246
        %v263 = vsub.f32 %v196, %v247
        %v264 = vsub.f32 %v197, %v248
        %v265 = vsub.f32 %v198, %v249
        %v266 = vsub.f32 %v199, %v250
        %v267 = vsub.f32 %v200, %v251
        %v268 = vsub.f32 %v201, %v252
        %v269 = vsub.f32 %v202, %v253
        %v270 = vsub.f32 %v203, %v254
        %v271 = vmul.f32 %v255, %v255
        %v272 = vmul.f32 %v256, %v256
        %v273 = vmul.f32 %v257, %v257
        %v274 = vmul.f32 %v258, %v258
        %v275 = vmul.f32 %v259, %v259
        %v276 = vmul.f32 %v260, %v260
        %v277 = vmul.f32 %v261, %v261
        %v278 = vmul.f32 %v262, %v262
        %v279 = vmul.f32 %v263, %v263
        %v280 = vmul.f32 %v264, %v264
        %v281 = vmul.f32 %v265, %v265
        %v282 = vmul.f32 %v266, %v266
        %v283 = vmul.f32 %v267, %v267
        %v284 = vmul.f32 %v268, %v268
        %v285 = vmul.f32 %v269, %v269
        %v286 = vmul.f32 %v270, %v270
        %287 = vadd.xlane.f32.xlu0 %v271
        %v288 = vpop.xlane.xlu0 %287
        %289 = vadd.xlane.f32.xlu0 %v272
        %v290 = vpop.xlane.xlu0 %289
        %291 = vadd.xlane.f32.xlu0 %v273
        %v292 = vpop.xlane.xlu0 %291
        %293 = vadd.xlane.f32.xlu0 %v274
        %v294 = vpop.xlane.xlu0 %293
        %295 = vadd.xlane.f32.xlu0 %v275
        %v296 = vpop.xlane.xlu0 %295
        %297 = vadd.xlane.f32.xlu0 %v276
        %v298 = vpop.xlane.xlu0 %297
        %299 = vadd.xlane.f32.xlu0 %v277
        %v300 = vpop.xlane.xlu0 %299
        %301 = vadd.xlane.f32.xlu0 %v278
        %v302 = vpop.xlane.xlu0 %301
        %303 = vadd.xlane.f32.xlu0 %v279
        %v304 = vpop.xlane.xlu0 %303
        %305 = vadd.xlane.f32.xlu0 %v280
        %v306 = vpop.xlane.xlu0 %305
        %307 = vadd.xlane.f32.xlu0 %v281
        %v308 = vpop.xlane.xlu0 %307
        %309 = vadd.xlane.f32.xlu0 %v282
        %v310 = vpop.xlane.xlu0 %309
        %311 = vadd.xlane.f32.xlu0 %v283
        %v312 = vpop.xlane.xlu0 %311
        %313 = vadd.xlane.f32.xlu0 %v284
        %v314 = vpop.xlane.xlu0 %313
        %315 = vadd.xlane.f32.xlu0 %v285
        %v316 = vpop.xlane.xlu0 %315
        %317 = vadd.xlane.f32.xlu0 %v286
        %v318 = vpop.xlane.xlu0 %317
        %v319 = vmul.f32 %v288, %v238
        %v320 = vmul.f32 %v290, %v238
        %v321 = vmul.f32 %v292, %v238
        %v322 = vmul.f32 %v294, %v238
        %v323 = vmul.f32 %v296, %v238
        %v324 = vmul.f32 %v298, %v238
        %v325 = vmul.f32 %v300, %v238
        %v326 = vmul.f32 %v302, %v238
        %v327 = vmul.f32 %v304, %v238
        %v328 = vmul.f32 %v306, %v238
        %v329 = vmul.f32 %v308, %v238
        %v330 = vmul.f32 %v310, %v238
        %v331 = vmul.f32 %v312, %v238
        %v332 = vmul.f32 %v314, %v238
        %v333 = vmul.f32 %v316, %v238
        %v334 = vmul.f32 %v318, %v238
        %v335 = vadd.f32 %v319, 1e-05
        %v336 = vadd.f32 %v320, 1e-05
        %v337 = vadd.f32 %v321, 1e-05
        %v338 = vadd.f32 %v322, 1e-05
        %v339 = vadd.f32 %v323, 1e-05
        %v340 = vadd.f32 %v324, 1e-05
        %v341 = vadd.f32 %v325, 1e-05
        %v342 = vadd.f32 %v326, 1e-05
        %v343 = vadd.f32 %v327, 1e-05
        %v344 = vadd.f32 %v328, 1e-05
        %v345 = vadd.f32 %v329, 1e-05
        %v346 = vadd.f32 %v330, 1e-05
        %v347 = vadd.f32 %v331, 1e-05
        %v348 = vadd.f32 %v332, 1e-05
        %v349 = vadd.f32 %v333, 1e-05
        %v350 = vadd.f32 %v334, 1e-05
        %v351 = vrsqrt.pop %v335
        %v352 = vrsqrt.pop %v336
        %v353 = vrsqrt.pop %v337
        %v354 = vrsqrt.pop %v338
        %v355 = vrsqrt.pop %v339
        %v356 = vrsqrt.pop %v340
        %v357 = vrsqrt.pop %v341
        %v358 = vrsqrt.pop %v342
        %v359 = vrsqrt.pop %v343
        %v360 = vrsqrt.pop %v344
        %v361 = vrsqrt.pop %v345
        %v362 = vrsqrt.pop %v346
        %v363 = vrsqrt.pop %v347
        %v364 = vrsqrt.pop %v348
        %v365 = vrsqrt.pop %v349
        %v366 = vrsqrt.pop %v350
        %v367 = vmul.f32 %v255, %v351
        %v368 = vmul.f32 %v256, %v352
        %v369 = vmul.f32 %v257, %v353
        %v370 = vmul.f32 %v258, %v354
        %v371 = vmul.f32 %v259, %v355
        %v372 = vmul.f32 %v260, %v356
        %v373 = vmul.f32 %v261, %v357
        %v374 = vmul.f32 %v262, %v358
        %v375 = vmul.f32 %v263, %v359
        %v376 = vmul.f32 %v264, %v360
        %v377 = vmul.f32 %v265, %v361
        %v378 = vmul.f32 %v266, %v362
        %v379 = vmul.f32 %v267, %v363
        %v380 = vmul.f32 %v268, %v364
        %v381 = vmul.f32 %v269, %v365
        %v382 = vmul.f32 %v270, %v366
        %v384 = vlaneseq
        %v385 = vshrl.u32 %v384, 7
        %v386 = vsub.s32 0, %v385
        %v387 = vrot.slane %v204, %v386
        %v389 = vmul.f32 %v367, %v387
        %v390 = vmul.f32 %v368, %v387
        %v391 = vmul.f32 %v369, %v387
        %v392 = vmul.f32 %v370, %v387
        %v393 = vmul.f32 %v371, %v387
        %v394 = vmul.f32 %v372, %v387
        %v395 = vmul.f32 %v373, %v387
        %v396 = vmul.f32 %v374, %v387
        %v397 = vmul.f32 %v375, %v387
        %v398 = vmul.f32 %v376, %v387
        %v399 = vmul.f32 %v377, %v387
        %v400 = vmul.f32 %v378, %v387
        %v401 = vmul.f32 %v379, %v387
        %v402 = vmul.f32 %v380, %v387
        %v403 = vmul.f32 %v381, %v387
        %v404 = vmul.f32 %v382, %v387
        %v406 = vlaneseq
        %v407 = vshrl.u32 %v406, 7
        %v408 = vsub.s32 0, %v407
        %v409 = vrot.slane %v205, %v408
        %v411 = vadd.f32 %v389, %v409
        %v412 = vadd.f32 %v390, %v409
        %v413 = vadd.f32 %v391, %v409
        %v414 = vadd.f32 %v392, %v409
        %v415 = vadd.f32 %v393, %v409
        %v416 = vadd.f32 %v394, %v409
        %v417 = vadd.f32 %v395, %v409
        %v418 = vadd.f32 %v396, %v409
        %v419 = vadd.f32 %v397, %v409
        %v420 = vadd.f32 %v398, %v409
        %v421 = vadd.f32 %v399, %v409
        %v422 = vadd.f32 %v400, %v409
        %v423 = vadd.f32 %v401, %v409
        %v424 = vadd.f32 %v402, %v409
        %v425 = vadd.f32 %v403, %v409
        %v426 = vadd.f32 %v404, %v409
        %427 = vst [vmem:[%s164] sm:$0xff] %v411
        %428 = vst [vmem:[%s164 + $0x8] sm:$0xff] %v412
        %429 = vst [vmem:[%s164 + $0x10] sm:$0xff] %v413
        %430 = vst [vmem:[%s164 + $0x18] sm:$0xff] %v414
        %431 = vst [vmem:[%s164 + $0x20] sm:$0xff] %v415
        %432 = vst [vmem:[%s164 + $0x28] sm:$0xff] %v416
        %433 = vst [vmem:[%s164 + $0x30] sm:$0xff] %v417
        %434 = vst [vmem:[%s164 + $0x38] sm:$0xff] %v418
        %435 = vst [vmem:[%s164 + $0x40] sm:$0xff] %v419
        %436 = vst [vmem:[%s164 + $0x48] sm:$0xff] %v420
        %437 = vst [vmem:[%s164 + $0x50] sm:$0xff] %v421
        %438 = vst [vmem:[%s164 + $0x58] sm:$0xff] %v422
        %439 = vst [vmem:[%s164 + $0x60] sm:$0xff] %v423
        %440 = vst [vmem:[%s164 + $0x68] sm:$0xff] %v424
        %441 = vst [vmem:[%s164 + $0x70] sm:$0xff] %v425
        %442 = vst [vmem:[%s164 + $0x78] sm:$0xff] %v426
        %s443 = sand.u32 %s93, 1
        %s444 = scalar_lea.sflag [#allocation3], %s443
        %s445 = sand.u32 %s93, 1
        %s446 = smul.addr %s445, 128
        %s447 = scalar_lea.vmem [#allocation2], %s446
        // Predicated region
        $region33: #{run.9} parent=31 // pred_check
          %p448 = pneg %p103
        $region34: #{run.9} parent=31 // pred_check_branch
          %450 = sbr.rel (%p448) target = $region36
        $region35: #{run.9} parent=31 // pred_region
          %s451 = smul.u32 16, %s17
          %s453 = ssub.s32 2048, 2048
          %454 = vsyncadd %s444, %s453
          %s455 = smul.addr %s451, 128
          %s456 = scalar_lea.hbm %s3, %s455
          %s457 = sshll.u32 %s447, 4
          %s458 = int_to_ptr.vmem [resolvable:$true] %s457
          %463 = dma.vmem_to_hbm [thread:$0]  %s458, 2048, %s456, %s444, 128, 128, 8
        $region36: #{run.9} parent=31 // pred_fallthru
          _
      $region32: #{run.9} parent=5 // pred_fallthru
        _
      %p464 = scmp.le.s32.totalorder 2, %s12
      // Predicated region
      $region37: #{run.9} parent=5 // pred_check
        %p465 = pneg %p464
      $region38: #{run.9} parent=5 // pred_check_branch
        %467 = sbr.rel (%p465) target = $region40
      $region39: #{run.9} parent=5 // pred_region
        %s468 = ssub.s32 %s12, 2
        // Predicated region
        $region41: #{run.9} parent=39 // pred_check
          %p469 = pneg %p109
        $region42: #{run.9} parent=39 // pred_check_branch
          %471 = sbr.rel (%p469) target = $region44
        $region43: #{run.9} parent=39 // pred_region
          %s472 = sand.u32 %s94, 1
          %s473 = scalar_lea.sflag [#allocation3], %s472
          %s474 = sand.u32 %s94, 1
          %s475 = smul.addr %s474, 128
          %s476 = scalar_lea.vmem [#allocation2], %s475
          %477 = dma.done %s473, 2048
        $region44: #{run.9} parent=39 // pred_fallthru
          _
      $region40: #{run.9} parent=5 // pred_fallthru
        _
    $region6: #{run.9} parent=1 // loop_footer
      %s16 = sadd.s32 1, %s12
    $region7: #{run.9} parent=1 // loop_footer_branch
      %11 = sbr.rel target = $region3
    $region8: #{run.9} parent=1 // loop_exit
      _
    %478 = vsyncpa [#allocation3], 1
    %s479 = scalar_lea.sflag [#allocation3], 1
    %480 = vsyncpa %s479, 1

// kernel: run.6
$region0: #{run.6}
  #allocation0 [shape = 'u32[]', space=smem, size = 0x4, offset = 0x4, fixed_abs, tag = 'smem constant byte address 0x4 - core index']
  #allocation1 [shape = 'u32[144,128]{1,0:T(1,128)}', space=vmem, size = 0x12000, scoped, tag = 'internal scratch']
  %s0 = inlined_call_operand.vmem [shape: bf16[256,128], index: 0, kind: input, shape index: {}]
  %s1 = inlined_call_operand.vmem [shape: bf16[128,256], index: 1, kind: input, shape index: {}]
  %s2 = inlined_call_operand.vmem [shape: f32[1,256], index: 2, kind: input, shape index: {}]
  %s3 = inlined_call_operand.vmem [shape: bf16[256,128], index: 3, kind: input, shape index: {}]
  %s4 = inlined_call_operand.vmem [shape: f32[1,128], index: 4, kind: input, shape index: {}]
  %s5 = inlined_call_operand.vmem [shape: f32[1,128], index: 5, kind: input, shape index: {}]
  %s6 = inlined_call_operand.vmem [shape: f32[1,128], index: 6, kind: input, shape index: {}]
  %s7 = inlined_call_operand.vmem [shape: bf16[256,128], index: 7, kind: output, shape index: {}]
  %s8 = sld [smem:[#allocation0]]
  $region61: #{run.6} parent=0
    _
  %s10 = ssub.s32 1, %s8
  %s11 = scalar_select 0, %s10, %s8
  loop: start=0, step=1, limit=4
  $region2: #{run.6} parent=0 // loop_pre_header
    _
  $region3: #{run.6} parent=0 // loop_header
    %s13 = sphi 0, %s17
    %p14 = scmp.ge.s32.totalorder %s13, 4
    %s23 = sphi 0, %s25
    %s26 = sphi 0, %s23
    %s27 = sphi 0, %s26
    %s43 = sphi 0, %s27
    %s47 = sphi 0, %s47
    %s49 = sphi 0, %s47
    %s50 = sphi 0, %s49
    %s64 = sphi 0, %s50
    %s68 = sphi 0, %s68
    %s70 = sphi 0, %s68
    %s71 = sphi 0, %s70
    %s85 = sphi 0, %s71
    %s89 = sphi 0, %s89
    %s91 = sphi 0, %s89
    %s92 = sphi 0, %s91
    %s106 = sphi 0, %s92
    %s110 = sphi 0, %s110
    %s112 = sphi 0, %s110
    %s113 = sphi 0, %s112
    %s127 = sphi 0, %s113
    %s131 = sphi 0, %s131
    %s133 = sphi 0, %s131
    %s134 = sphi 0, %s133
    %s148 = sphi 0, %s134
    %s152 = sphi 0, %s152
    %s154 = sphi 0, %s152
    %s155 = sphi 0, %s154
    %s169 = sphi 0, %s155
    %s175 = sphi 0, %s177
    %s178 = sphi 0, %s175
    %s179 = sphi 0, %s178
    %s195 = sphi 0, %s179
  $region4: #{run.6} parent=0 // loop_header_branch
    %16 = sbr.rel (%p14) target = $region8
  $region5: #{run.6} parent=0 // loop_body
    %s18 = ssub.s32 %s13, 1
    %s19 = ssub.s32 %s13, 2
    %s20 = sadd.s32 %s13, 1
    %s21 = ssub.s32 %s13, %s20
    %p22 = scmp.eq.s32.totalorder %s21, 0
    %s24 = sadd.s32 %s23, 1
    %s25 = scalar_select %p22, %s23, %s24
    %p28 = pneg %p22
    %p29 = scmp.eq.s32.totalorder %s13, 1
    %p30 = por %p28, %p29
    %p31 = scmp.ne.s32.totalorder %s23, %s26
    %p32 = scmp.eq.s32.totalorder %s13, 0
    %p33 = por %p31, %p32
    %p34 = scmp.ne.s32.totalorder %s23, %s26
    %p35 = scmp.eq.s32.totalorder %s18, 1
    %p36 = por %p34, %p35
    %p37 = scmp.ne.s32.totalorder %s26, %s27
    %p38 = scmp.eq.s32.totalorder %s18, 0
    %p39 = por %p37, %p38
    %p40 = scmp.ne.s32.totalorder %s26, %s27
    %p41 = scmp.eq.s32.totalorder %s19, 1
    %p42 = por %p40, %p41
    %p44 = scmp.ne.s32.totalorder %s27, %s43
    %p45 = scmp.eq.s32.totalorder %s19, 0
    %p46 = por %p44, %p45
    %s48 = sadd.s32 %s47, 1
    %p51 = scmp.eq.s32.totalorder %s13, 1
    %p52 = scmp.ne.s32.totalorder %s47, %s49
    %p53 = scmp.eq.s32.totalorder %s13, 0
    %p54 = por %p52, %p53
    %p55 = scmp.ne.s32.totalorder %s47, %s49
    %p56 = scmp.eq.s32.totalorder %s18, 1
    %p57 = por %p55, %p56
    %p58 = scmp.ne.s32.totalorder %s49, %s50
    %p59 = scmp.eq.s32.totalorder %s18, 0
    %p60 = por %p58, %p59
    %p61 = scmp.ne.s32.totalorder %s49, %s50
    %p62 = scmp.eq.s32.totalorder %s19, 1
    %p63 = por %p61, %p62
    %p65 = scmp.ne.s32.totalorder %s50, %s64
    %p66 = scmp.eq.s32.totalorder %s19, 0
    %p67 = por %p65, %p66
    %s69 = sadd.s32 %s68, 1
    %p72 = scmp.eq.s32.totalorder %s13, 1
    %p73 = scmp.ne.s32.totalorder %s68, %s70
    %p74 = scmp.eq.s32.totalorder %s13, 0
    %p75 = por %p73, %p74
    %p76 = scmp.ne.s32.totalorder %s68, %s70
    %p77 = scmp.eq.s32.totalorder %s18, 1
    %p78 = por %p76, %p77
    %p79 = scmp.ne.s32.totalorder %s70, %s71
    %p80 = scmp.eq.s32.totalorder %s18, 0
    %p81 = por %p79, %p80
    %p82 = scmp.ne.s32.totalorder %s70, %s71
    %p83 = scmp.eq.s32.totalorder %s19, 1
    %p84 = por %p82, %p83
    %p86 = scmp.ne.s32.totalorder %s71, %s85
    %p87 = scmp.eq.s32.totalorder %s19, 0
    %p88 = por %p86, %p87
    %s90 = sadd.s32 %s89, 1
    %p93 = scmp.eq.s32.totalorder %s13, 1
    %p94 = scmp.ne.s32.totalorder %s89, %s91
    %p95 = scmp.eq.s32.totalorder %s13, 0
    %p96 = por %p94, %p95
    %p97 = scmp.ne.s32.totalorder %s89, %s91
    %p98 = scmp.eq.s32.totalorder %s18, 1
    %p99 = por %p97, %p98
    %p100 = scmp.ne.s32.totalorder %s91, %s92
    %p101 = scmp.eq.s32.totalorder %s18, 0
    %p102 = por %p100, %p101
    %p103 = scmp.ne.s32.totalorder %s91, %s92
    %p104 = scmp.eq.s32.totalorder %s19, 1
    %p105 = por %p103, %p104
    %p107 = scmp.ne.s32.totalorder %s92, %s106
    %p108 = scmp.eq.s32.totalorder %s19, 0
    %p109 = por %p107, %p108
    %s111 = sadd.s32 %s110, 1
    %p114 = scmp.eq.s32.totalorder %s13, 1
    %p115 = scmp.ne.s32.totalorder %s110, %s112
    %p116 = scmp.eq.s32.totalorder %s13, 0
    %p117 = por %p115, %p116
    %p118 = scmp.ne.s32.totalorder %s110, %s112
    %p119 = scmp.eq.s32.totalorder %s18, 1
    %p120 = por %p118, %p119
    %p121 = scmp.ne.s32.totalorder %s112, %s113
    %p122 = scmp.eq.s32.totalorder %s18, 0
    %p123 = por %p121, %p122
    %p124 = scmp.ne.s32.totalorder %s112, %s113
    %p125 = scmp.eq.s32.totalorder %s19, 1
    %p126 = por %p124, %p125
    %p128 = scmp.ne.s32.totalorder %s113, %s127
    %p129 = scmp.eq.s32.totalorder %s19, 0
    %p130 = por %p128, %p129
    %s132 = sadd.s32 %s131, 1
    %p135 = scmp.eq.s32.totalorder %s13, 1
    %p136 = scmp.ne.s32.totalorder %s131, %s133
    %p137 = scmp.eq.s32.totalorder %s13, 0
    %p138 = por %p136, %p137
    %p139 = scmp.ne.s32.totalorder %s131, %s133
    %p140 = scmp.eq.s32.totalorder %s18, 1
    %p141 = por %p139, %p140
    %p142 = scmp.ne.s32.totalorder %s133, %s134
    %p143 = scmp.eq.s32.totalorder %s18, 0
    %p144 = por %p142, %p143
    %p145 = scmp.ne.s32.totalorder %s133, %s134
    %p146 = scmp.eq.s32.totalorder %s19, 1
    %p147 = por %p145, %p146
    %p149 = scmp.ne.s32.totalorder %s134, %s148
    %p150 = scmp.eq.s32.totalorder %s19, 0
    %p151 = por %p149, %p150
    %s153 = sadd.s32 %s152, 1
    %p156 = scmp.eq.s32.totalorder %s13, 1
    %p157 = scmp.ne.s32.totalorder %s152, %s154
    %p158 = scmp.eq.s32.totalorder %s13, 0
    %p159 = por %p157, %p158
    %p160 = scmp.ne.s32.totalorder %s152, %s154
    %p161 = scmp.eq.s32.totalorder %s18, 1
    %p162 = por %p160, %p161
    %p163 = scmp.ne.s32.totalorder %s154, %s155
    %p164 = scmp.eq.s32.totalorder %s18, 0
    %p165 = por %p163, %p164
    %p166 = scmp.ne.s32.totalorder %s154, %s155
    %p167 = scmp.eq.s32.totalorder %s19, 1
    %p168 = por %p166, %p167
    %p170 = scmp.ne.s32.totalorder %s155, %s169
    %p171 = scmp.eq.s32.totalorder %s19, 0
    %p172 = por %p170, %p171
    %s173 = ssub.s32 %s13, %s20
    %p174 = scmp.eq.s32.totalorder %s173, 0
    %s176 = sadd.s32 %s175, 1
    %s177 = scalar_select %p174, %s175, %s176
    %p180 = pneg %p174
    %p181 = scmp.eq.s32.totalorder %s13, 1
    %p182 = por %p180, %p181
    %p183 = scmp.ne.s32.totalorder %s175, %s178
    %p184 = scmp.eq.s32.totalorder %s13, 0
    %p185 = por %p183, %p184
    %p186 = scmp.ne.s32.totalorder %s175, %s178
    %p187 = scmp.eq.s32.totalorder %s18, 1
    %p188 = por %p186, %p187
    %p189 = scmp.ne.s32.totalorder %s178, %s179
    %p190 = scmp.eq.s32.totalorder %s18, 0
    %p191 = por %p189, %p190
    %p192 = scmp.ne.s32.totalorder %s178, %s179
    %p193 = scmp.eq.s32.totalorder %s19, 1
    %p194 = por %p192, %p193
    %p196 = scmp.ne.s32.totalorder %s179, %s195
    %p197 = scmp.eq.s32.totalorder %s19, 0
    %p198 = por %p196, %p197
    %p199 = scmp.le.s32.totalorder 1, %s13
    %p200 = scmp.lt.s32.totalorder %s13, 3
    %p201 = pnand %p199, %p200
    %p202 = pneg %p201
    // Predicated region
    $region9: #{run.6} parent=5 // pred_check
      _
    $region10: #{run.6} parent=5 // pred_check_branch
      %204 = sbr.rel (%p201) target = $region12
    $region11: #{run.6} parent=5 // pred_region
      %s205 = ssub.s32 %s13, 1
      // Predicated region
      $region13: #{run.6} parent=11 // pred_check
        %p206 = pneg %p60
      $region14: #{run.6} parent=11 // pred_check_branch
        %208 = sbr.rel (%p206) target = $region16
      $region15: #{run.6} parent=11 // pred_region
        _
      $region16: #{run.6} parent=11 // pred_fallthru
        _
      // Predicated region
      $region17: #{run.6} parent=11 // pred_check
        %p209 = pneg %p81
      $region18: #{run.6} parent=11 // pred_check_branch
        %211 = sbr.rel (%p209) target = $region20
      $region19: #{run.6} parent=11 // pred_region
        _
      $region20: #{run.6} parent=11 // pred_fallthru
        _
      // Predicated region
      $region21: #{run.6} parent=11 // pred_check
        %p212 = pneg %p102
      $region22: #{run.6} parent=11 // pred_check_branch
        %214 = sbr.rel (%p212) target = $region24
      $region23: #{run.6} parent=11 // pred_region
        _
      $region24: #{run.6} parent=11 // pred_fallthru
        _
      // Predicated region
      $region25: #{run.6} parent=11 // pred_check
        %p215 = pneg %p123
      $region26: #{run.6} parent=11 // pred_check_branch
        %217 = sbr.rel (%p215) target = $region28
      $region27: #{run.6} parent=11 // pred_region
        _
      $region28: #{run.6} parent=11 // pred_fallthru
        _
      // Predicated region
      $region29: #{run.6} parent=11 // pred_check
        %p218 = pneg %p144
      $region30: #{run.6} parent=11 // pred_check_branch
        %220 = sbr.rel (%p218) target = $region32
      $region31: #{run.6} parent=11 // pred_region
        _
      $region32: #{run.6} parent=11 // pred_fallthru
        _
      // Predicated region
      $region33: #{run.6} parent=11 // pred_check
        %p221 = pneg %p165
      $region34: #{run.6} parent=11 // pred_check_branch
        %223 = sbr.rel (%p221) target = $region36
      $region35: #{run.6} parent=11 // pred_region
        _
      $region36: #{run.6} parent=11 // pred_fallthru
        _
    $region12: #{run.6} parent=5 // pred_fallthru
      _
    %p224 = scmp.lt.s32.totalorder %s13, 2
    // Predicated region
    $region37: #{run.6} parent=5 // pred_check
      %p225 = pneg %p224
    $region38: #{run.6} parent=5 // pred_check_branch
      %227 = sbr.rel (%p225) target = $region40
    $region39: #{run.6} parent=5 // pred_region
      // Predicated region
      $region41: #{run.6} parent=39 // pred_check
        %p228 = pneg %p33
      $region42: #{run.6} parent=39 // pred_check_branch
        %230 = sbr.rel (%p228) target = $region44
      $region43: #{run.6} parent=39 // pred_region
        %s231 = smul.u32 16, %s13
        %p232 = scmp.lt.s32.totalorder %s231, 31
        %s233 = scalar_select %p232, %s231, 31
        %s234 = smul.addr %s233, 4
        %s235 = scalar_lea.vmem %s0, %s234
        %s236 = smul.u32 16, %s13
      $region44: #{run.6} parent=39 // pred_fallthru
        _
    $region40: #{run.6} parent=5 // pred_fallthru
      _
    %p237 = scmp.le.s32.totalorder 1, %s13
    %p238 = scmp.lt.s32.totalorder %s13, 3
    %p239 = pnand %p237, %p238
    %p240 = pneg %p239
    // Predicated region
    $region45: #{run.6} parent=5 // pred_check
      _
    $region46: #{run.6} parent=5 // pred_check_branch
      %242 = sbr.rel (%p239) target = $region48
    $region47: #{run.6} parent=5 // pred_region
      %s243 = ssub.s32 %s13, 1
      %s244 = smul.u32 16, %s18
      %p245 = scmp.lt.s32.totalorder %s244, 31
      %s246 = scalar_select %p245, %s244, 31
      %s247 = smul.addr %s246, 4
      %s248 = scalar_lea.vmem %s0, %s247
      %p249 = pneg %p39
      %p250 = pneg %p36
      %p251 = pneg %p60
      %p252 = pneg %p57
      %p253 = pneg %p81
      %p254 = pneg %p78
      %p255 = pneg %p102
      %p256 = pneg %p99
      %p257 = pneg %p123
      %p258 = pneg %p120
      %p259 = pneg %p144
      %p260 = pneg %p141
      %p261 = pneg %p165
      %p262 = pneg %p162
      %p263 = pneg %p191
      %p264 = pneg %p188
      %s265 = smul.u32 16, %s18
      %p266 = scmp.lt.s32.totalorder %s265, 31
      %s267 = scalar_select %p266, %s265, 31
      %s268 = smul.addr %s267, 4
      %s269 = scalar_lea.vmem %s7, %s268
      %s270 = smul.u32 16, %s18
      %p271 = scmp.lt.s32.totalorder %s270, 31
      %s272 = scalar_select %p271, %s270, 31
      %s273 = smul.addr %s272, 4
      %s274 = scalar_lea.vmem %s0, %s273
      %s275 = smul.u32 16, %s18
      %s276 = smul.u32 16, %s18
      %p277 = scmp.lt.s32.totalorder %s276, 31
      %s278 = scalar_select %p277, %s276, 31
      %s279 = smul.addr %s278, 4
      %s280 = scalar_lea.vmem %s7, %s279
      %s281 = smul.u32 16, %s18
      %v283 = vld [vmem:[%s274] sm:$0xf]
      %v284 = vld [vmem:[%s274 + $0x4] sm:$0xf]
      %v285 = vld [vmem:[%s274 + $0x8] sm:$0xf]
      %v286 = vld [vmem:[%s274 + $0xc] sm:$0xf]
      %v287 = vld [vmem:[%s274 + $0x10] sm:$0xf]
      %v288 = vld [vmem:[%s274 + $0x14] sm:$0xf]
      %v289 = vld [vmem:[%s274 + $0x18] sm:$0xf]
      %v290 = vld [vmem:[%s274 + $0x1c] sm:$0xf]
      %v291 = vld [vmem:[%s274 + $0x20] sm:$0xf]
      %v292 = vld [vmem:[%s274 + $0x24] sm:$0xf]
      %v293 = vld [vmem:[%s274 + $0x28] sm:$0xf]
      %v294 = vld [vmem:[%s274 + $0x2c] sm:$0xf]
      %v295 = vld [vmem:[%s274 + $0x30] sm:$0xf]
      %v296 = vld [vmem:[%s274 + $0x34] sm:$0xf]
      %v297 = vld [vmem:[%s274 + $0x38] sm:$0xf]
      %v298 = vld [vmem:[%s274 + $0x3c] sm:$0xf]
      %v299 = vunpack.c.l.bf16 %v283
      %v300 = vunpack.c.l.bf16 %v284
      %v301 = vunpack.c.l.bf16 %v285
      %v302 = vunpack.c.l.bf16 %v286
      %v303 = vunpack.c.l.bf16 %v287
      %v304 = vunpack.c.l.bf16 %v288
      %v305 = vunpack.c.l.bf16 %v289
      %v306 = vunpack.c.l.bf16 %v290
      %v307 = vunpack.c.l.bf16 %v291
      %v308 = vunpack.c.l.bf16 %v292
      %v309 = vunpack.c.l.bf16 %v293
      %v310 = vunpack.c.l.bf16 %v294
      %v311 = vunpack.c.l.bf16 %v295
      %v312 = vunpack.c.l.bf16 %v296
      %v313 = vunpack.c.l.bf16 %v297
      %v314 = vunpack.c.l.bf16 %v298
      %v315 = vld [vmem:[%s1] sm:$0xff]
      %v316 = vld [vmem:[%s1 + $0x8] sm:$0xff]
      %v317 = vld [vmem:[%s1 + $0x10] sm:$0xff]
      %v318 = vld [vmem:[%s1 + $0x18] sm:$0xff]
      %v319 = vld [vmem:[%s1 + $0x20] sm:$0xff]
      %v320 = vld [vmem:[%s1 + $0x28] sm:$0xff]
      %v321 = vld [vmem:[%s1 + $0x30] sm:$0xff]
      %v322 = vld [vmem:[%s1 + $0x38] sm:$0xff]
      %v323 = vld [vmem:[%s1 + $0x40] sm:$0xff]
      %v324 = vld [vmem:[%s1 + $0x48] sm:$0xff]
      %v325 = vld [vmem:[%s1 + $0x50] sm:$0xff]
      %v326 = vld [vmem:[%s1 + $0x58] sm:$0xff]
      %v327 = vld [vmem:[%s1 + $0x60] sm:$0xff]
      %v328 = vld [vmem:[%s1 + $0x68] sm:$0xff]
      %v329 = vld [vmem:[%s1 + $0x70] sm:$0xff]
      %v330 = vld [vmem:[%s1 + $0x78] sm:$0xff]
      %v331 = vld [vmem:[%s2] sm:$0x3]
      %v333 = vlaneseq
      %v334 = vshrl.u32 %v333, 7
      %v335 = vsub.s32 0, %v334
      %v336 = vrot.slane %v331, %v335
      %v337 = vlaneseq
      %v338 = vshrl.u32 %v337, 7
      %v339 = vsub.s32 1, %v338
      %v340 = vrot.slane %v331, %v339
      %v359 = vunpack.c.l.b16 %v283
      %v360 = vunpack.c.l.b16 %v284
      %v361 = vunpack.c.l.b16 %v285
      %v362 = vunpack.c.l.b16 %v286
      %v363 = vunpack.c.l.b16 %v287
      %v364 = vunpack.c.l.b16 %v288
      %v365 = vunpack.c.l.b16 %v289
      %v366 = vunpack.c.l.b16 %v290
      %v367 = vunpack.c.l.b16 %v291
      %v368 = vunpack.c.l.b16 %v292
      %v369 = vunpack.c.l.b16 %v293
      %v370 = vunpack.c.l.b16 %v294
      %v371 = vunpack.c.l.b16 %v295
      %v372 = vunpack.c.l.b16 %v296
      %v373 = vunpack.c.l.b16 %v297
      %v374 = vunpack.c.l.b16 %v298
      %v375 = vpack.c.b16 %v360, %v359
      %v376 = vpack.c.b16 %v362, %v361
      %v377 = vpack.c.b16 %v364, %v363
      %v378 = vpack.c.b16 %v366, %v365
      %v379 = vpack.c.b16 %v368, %v367
      %v380 = vpack.c.b16 %v370, %v369
      %v381 = vpack.c.b16 %v372, %v371
      %v382 = vpack.c.b16 %v374, %v373
      %v407 = vunpack.c.l.b16 %v315
      %v408 = vunpack.c.h.b16 %v315
      %v409 = vunpack.c.l.b16 %v316
      %v410 = vunpack.c.h.b16 %v316
      %v411 = vunpack.c.l.b16 %v317
      %v412 = vunpack.c.h.b16 %v317
      %v413 = vunpack.c.l.b16 %v318
      %v414 = vunpack.c.h.b16 %v318
      %v415 = vunpack.c.l.b16 %v319
      %v416 = vunpack.c.h.b16 %v319
      %v417 = vunpack.c.l.b16 %v320
      %v418 = vunpack.c.h.b16 %v320
      %v419 = vunpack.c.l.b16 %v321
      %v420 = vunpack.c.h.b16 %v321
      %v421 = vunpack.c.l.b16 %v322
      %v422 = vunpack.c.h.b16 %v322
      %v423 = vunpack.c.l.b16 %v323
      %v424 = vunpack.c.h.b16 %v323
      %v425 = vunpack.c.l.b16 %v324
      %v426 = vunpack.c.h.b16 %v324
      %v427 = vunpack.c.l.b16 %v325
      %v428 = vunpack.c.h.b16 %v325
      %v429 = vunpack.c.l.b16 %v326
      %v430 = vunpack.c.h.b16 %v326
      %v431 = vunpack.c.l.b16 %v327
      %v432 = vunpack.c.h.b16 %v327
      %v433 = vunpack.c.l.b16 %v328
      %v434 = vunpack.c.h.b16 %v328
      %v435 = vunpack.c.l.b16 %v329
      %v436 = vunpack.c.h.b16 %v329
      %v437 = vunpack.c.l.b16 %v330
      %v438 = vunpack.c.h.b16 %v330
      %v439 = vpack.c.b16 %v409, %v407
      %v440 = vpack.c.b16 %v410, %v408
      %v441 = vpack.c.b16 %v413, %v411
      %v442 = vpack.c.b16 %v414, %v412
      %v443 = vpack.c.b16 %v417, %v415
      %v444 = vpack.c.b16 %v418, %v416
      %v445 = vpack.c.b16 %v421, %v419
      %v446 = vpack.c.b16 %v422, %v420
      %v447 = vpack.c.b16 %v425, %v423
      %v448 = vpack.c.b16 %v426, %v424
      %v449 = vpack.c.b16 %v429, %v427
      %v450 = vpack.c.b16 %v430, %v428
      %v451 = vpack.c.b16 %v433, %v431
      %v452 = vpack.c.b16 %v434, %v432
      %v453 = vpack.c.b16 %v437, %v435
      %v454 = vpack.c.b16 %v438, %v436
      %471 = vmatprep.subr.bf16.mxu0 %v440
      %472 = vmatpush1.bf16.msra.mxu0 %v439
      %473 = vmatprep.subr.bf16.mxu0 %v442
      %474 = vmatpush1.bf16.msra.mxu0 %v441
      %475 = vmatprep.subr.bf16.mxu0 %v444
      %476 = vmatpush1.bf16.msra.mxu0 %v443
      %477 = vmatprep.subr.bf16.mxu0 %v446
      %478 = vmatpush1.bf16.msra.mxu0 %v445
      %479 = vmatprep.subr.bf16.mxu0 %v448
      %480 = vmatpush1.bf16.msra.mxu0 %v447
      %481 = vmatprep.subr.bf16.mxu0 %v450
      %482 = vmatpush1.bf16.msra.mxu0 %v449
      %483 = vmatprep.subr.bf16.mxu0 %v452
      %484 = vmatpush1.bf16.msra.mxu0 %v451
      %485 = vmatprep.subr.bf16.mxu0 %v454
      %486 = vmatpush1.bf16.msra.mxu0 %v453
      %487 = vmatprep.subr.bf16.mxu0 0
      %488 = vmatpush1.bf16.msra.mxu0 0
      %489 = vmatprep.subr.bf16.mxu0 0
      %490 = vmatpush1.bf16.msra.mxu0 0
      %491 = vmatprep.subr.bf16.mxu0 0
      %492 = vmatpush1.bf16.msra.mxu0 0
      %493 = vmatprep.subr.bf16.mxu0 0
      %494 = vmatpush1.bf16.msra.mxu0 0
      %495 = vmatprep.subr.bf16.mxu0 0
      %496 = vmatpush1.bf16.msra.mxu0 0
      %497 = vmatprep.subr.bf16.mxu0 0
      %498 = vmatpush1.bf16.msra.mxu0 0
      %499 = vmatprep.subr.bf16.mxu0 0
      %500 = vmatpush1.bf16.msra.mxu0 0
      %501 = vmatprep.subr.bf16.mxu0 0
      %502 = vmatpush1.bf16.msra.mxu0 0
      %503 = vmatprep.mubr.bf16.mxu0 0
      %504 = vmatmul.mubr.bf16.gmra.mrb[0].mxu0 %v375
      %v505 = vpop.f32.mrb[0].mxu0
      %v506 = vadd.f32 %v336, %v505
      %v507 = vpop.f32.mrb[0].mxu0
      %v508 = vadd.f32 %v340, %v507
      %v509 = vpop.f32.mrb[0].mxu0
      %v510 = vadd.f32 %v336, %v509
      %v511 = vpop.f32.mrb[0].mxu0
      %v512 = vadd.f32 %v340, %v511
      %513 = vmatprep.mubr.bf16.mxu0 0
      %514 = vmatmul.mubr.bf16.gmra.mrb[0].mxu0 %v376
      %v515 = vpop.f32.mrb[0].mxu0
      %v516 = vadd.f32 %v336, %v515
      %v517 = vpop.f32.mrb[0].mxu0
      %v518 = vadd.f32 %v340, %v517
      %v519 = vpop.f32.mrb[0].mxu0
      %v520 = vadd.f32 %v336, %v519
      %v521 = vpop.f32.mrb[0].mxu0
      %v522 = vadd.f32 %v340, %v521
      %523 = vmatprep.mubr.bf16.mxu0 0
      %524 = vmatmul.mubr.bf16.gmra.mrb[0].mxu0 %v377
      %v525 = vpop.f32.mrb[0].mxu0
      %v526 = vadd.f32 %v336, %v525
      %v527 = vpop.f32.mrb[0].mxu0
      %v528 = vadd.f32 %v340, %v527
      %v529 = vpop.f32.mrb[0].mxu0
      %v530 = vadd.f32 %v336, %v529
      %v531 = vpop.f32.mrb[0].mxu0
      %v532 = vadd.f32 %v340, %v531
      %533 = vmatprep.mubr.bf16.mxu0 0
      %534 = vmatmul.mubr.bf16.gmra.mrb[0].mxu0 %v378
      %v535 = vpop.f32.mrb[0].mxu0
      %v536 = vadd.f32 %v336, %v535
      %v537 = vpop.f32.mrb[0].mxu0
      %v538 = vadd.f32 %v340, %v537
      %v539 = vpop.f32.mrb[0].mxu0
      %v540 = vadd.f32 %v336, %v539
      %v541 = vpop.f32.mrb[0].mxu0
      %v542 = vadd.f32 %v340, %v541
      %543 = vmatprep.mubr.bf16.mxu0 0
      %544 = vmatmul.mubr.bf16.gmra.mrb[0].mxu0 %v379
      %v545 = vpop.f32.mrb[0].mxu0
      %v546 = vadd.f32 %v336, %v545
      %v547 = vpop.f32.mrb[0].mxu0
      %v548 = vadd.f32 %v340, %v547
      %v549 = vpop.f32.mrb[0].mxu0
      %v550 = vadd.f32 %v336, %v549
      %v551 = vpop.f32.mrb[0].mxu0
      %v552 = vadd.f32 %v340, %v551
      %553 = vmatprep.mubr.bf16.mxu0 0
      %554 = vmatmul.mubr.bf16.gmra.mrb[0].mxu0 %v380
      %v555 = vpop.f32.mrb[0].mxu0
      %v556 = vadd.f32 %v336, %v555
      %v557 = vpop.f32.mrb[0].mxu0
      %v558 = vadd.f32 %v340, %v557
      %v559 = vpop.f32.mrb[0].mxu0
      %v560 = vadd.f32 %v336, %v559
      %v561 = vpop.f32.mrb[0].mxu0
      %v562 = vadd.f32 %v340, %v561
      %563 = vmatprep.mubr.bf16.mxu0 0
      %564 = vmatmul.mubr.bf16.gmra.mrb[0].mxu0 %v381
      %v565 = vpop.f32.mrb[0].mxu0
      %v566 = vadd.f32 %v336, %v565
      %v567 = vpop.f32.mrb[0].mxu0
      %v568 = vadd.f32 %v340, %v567
      %v569 = vpop.f32.mrb[0].mxu0
      %v570 = vadd.f32 %v336, %v569
      %v571 = vpop.f32.mrb[0].mxu0
      %v572 = vadd.f32 %v340, %v571
      %573 = vmatprep.mubr.bf16.mxu0 0
      %574 = vmatmul.mubr.bf16.gmra.mrb[0].mxu0 %v382
      %v575 = vpop.f32.mrb[0].mxu0
      %v576 = vadd.f32 %v336, %v575
      %v577 = vpop.f32.mrb[0].mxu0
      %v578 = vadd.f32 %v340, %v577
      %v579 = vpop.f32.mrb[0].mxu0
      %v580 = vadd.f32 %v336, %v579
      %v581 = vpop.f32.mrb[0].mxu0
      %v582 = vadd.f32 %v340, %v581
      %583 = vdwg.mxu0
      %v584 = vmax.f32 %v506, 0.0
      %v585 = vmax.f32 %v508, 0.0
      %v586 = vmax.f32 %v510, 0.0
      %v587 = vmax.f32 %v512, 0.0
      %v588 = vmax.f32 %v516, 0.0
      %v589 = vmax.f32 %v518, 0.0
      %v590 = vmax.f32 %v520, 0.0
      %v591 = vmax.f32 %v522, 0.0
      %v592 = vmax.f32 %v526, 0.0
      %v593 = vmax.f32 %v528, 0.0
      %v594 = vmax.f32 %v530, 0.0
      %v595 = vmax.f32 %v532, 0.0
      %v596 = vmax.f32 %v536, 0.0
      %v597 = vmax.f32 %v538, 0.0
      %v598 = vmax.f32 %v540, 0.0
      %v599 = vmax.f32 %v542, 0.0
      %v600 = vmax.f32 %v546, 0.0
      %v601 = vmax.f32 %v548, 0.0
      %v602 = vmax.f32 %v550, 0.0
      %v603 = vmax.f32 %v552, 0.0
      %v604 = vmax.f32 %v556, 0.0
      %v605 = vmax.f32 %v558, 0.0
      %v606 = vmax.f32 %v560, 0.0
      %v607 = vmax.f32 %v562, 0.0
      %v608 = vmax.f32 %v566, 0.0
      %v609 = vmax.f32 %v568, 0.0
      %v610 = vmax.f32 %v570, 0.0
      %v611 = vmax.f32 %v572, 0.0
      %v612 = vmax.f32 %v576, 0.0
      %v613 = vmax.f32 %v578, 0.0
      %v614 = vmax.f32 %v580, 0.0
      %v615 = vmax.f32 %v582, 0.0
      %v616 = vpack.c.bf16 %v586, %v584
      %v617 = vpack.c.bf16 %v587, %v585
      %v618 = vpack.c.bf16 %v590, %v588
      %v619 = vpack.c.bf16 %v591, %v589
      %v620 = vpack.c.bf16 %v594, %v592
      %v621 = vpack.c.bf16 %v595, %v593
      %v622 = vpack.c.bf16 %v598, %v596
      %v623 = vpack.c.bf16 %v599, %v597
      %v624 = vpack.c.bf16 %v602, %v600
      %v625 = vpack.c.bf16 %v603, %v601
      %v626 = vpack.c.bf16 %v606, %v604
      %v627 = vpack.c.bf16 %v607, %v605
      %v628 = vpack.c.bf16 %v610, %v608
      %v629 = vpack.c.bf16 %v611, %v609
      %v630 = vpack.c.bf16 %v614, %v612
      %v631 = vpack.c.bf16 %v615, %v613
      %v632 = vld [vmem:[%s3] sm:$0xf]
      %v633 = vld [vmem:[%s3 + $0x4] sm:$0xf]
      %v634 = vld [vmem:[%s3 + $0x8] sm:$0xf]
      %v635 = vld [vmem:[%s3 + $0xc] sm:$0xf]
      %v636 = vld [vmem:[%s3 + $0x10] sm:$0xf]
      %v637 = vld [vmem:[%s3 + $0x14] sm:$0xf]
      %v638 = vld [vmem:[%s3 + $0x18] sm:$0xf]
      %v639 = vld [vmem:[%s3 + $0x1c] sm:$0xf]
      %v640 = vld [vmem:[%s3 + $0x20] sm:$0xf]
      %v641 = vld [vmem:[%s3 + $0x24] sm:$0xf]
      %v642 = vld [vmem:[%s3 + $0x28] sm:$0xf]
      %v643 = vld [vmem:[%s3 + $0x2c] sm:$0xf]
      %v644 = vld [vmem:[%s3 + $0x30] sm:$0xf]
      %v645 = vld [vmem:[%s3 + $0x34] sm:$0xf]
      %v646 = vld [vmem:[%s3 + $0x38] sm:$0xf]
      %v647 = vld [vmem:[%s3 + $0x3c] sm:$0xf]
      %v648 = vld [vmem:[%s3 + $0x40] sm:$0xf]
      %v649 = vld [vmem:[%s3 + $0x44] sm:$0xf]
      %v650 = vld [vmem:[%s3 + $0x48] sm:$0xf]
      %v651 = vld [vmem:[%s3 + $0x4c] sm:$0xf]
      %v652 = vld [vmem:[%s3 + $0x50] sm:$0xf]
      %v653 = vld [vmem:[%s3 + $0x54] sm:$0xf]
      %v654 = vld [vmem:[%s3 + $0x58] sm:$0xf]
      %v655 = vld [vmem:[%s3 + $0x5c] sm:$0xf]
      %v656 = vld [vmem:[%s3 + $0x60] sm:$0xf]
      %v657 = vld [vmem:[%s3 + $0x64] sm:$0xf]
      %v658 = vld [vmem:[%s3 + $0x68] sm:$0xf]
      %v659 = vld [vmem:[%s3 + $0x6c] sm:$0xf]
      %v660 = vld [vmem:[%s3 + $0x70] sm:$0xf]
      %v661 = vld [vmem:[%s3 + $0x74] sm:$0xf]
      %v662 = vld [vmem:[%s3 + $0x78] sm:$0xf]
      %v663 = vld [vmem:[%s3 + $0x7c] sm:$0xf]
      %v664 = vld [vmem:[%s4] sm:$0x1]
      %v666 = vlaneseq
      %v667 = vshrl.u32 %v666, 7
      %v668 = vsub.s32 0, %v667
      %v669 = vrot.slane %v664, %v668
      %v703 = vunpack.c.l.b16 %v632
      %v704 = vunpack.c.l.b16 %v633
      %v705 = vunpack.c.l.b16 %v634
      %v706 = vunpack.c.l.b16 %v635
      %v707 = vunpack.c.l.b16 %v636
      %v708 = vunpack.c.l.b16 %v637
      %v709 = vunpack.c.l.b16 %v638
      %v710 = vunpack.c.l.b16 %v639
      %v711 = vunpack.c.l.b16 %v640
      %v712 = vunpack.c.l.b16 %v641
      %v713 = vunpack.c.l.b16 %v642
      %v714 = vunpack.c.l.b16 %v643
      %v715 = vunpack.c.l.b16 %v644
      %v716 = vunpack.c.l.b16 %v645
      %v717 = vunpack.c.l.b16 %v646
      %v718 = vunpack.c.l.b16 %v647
      %v719 = vunpack.c.l.b16 %v648
      %v720 = vunpack.c.l.b16 %v649
      %v721 = vunpack.c.l.b16 %v650
      %v722 = vunpack.c.l.b16 %v651
      %v723 = vunpack.c.l.b16 %v652
      %v724 = vunpack.c.l.b16 %v653
      %v725 = vunpack.c.l.b16 %v654
      %v726 = vunpack.c.l.b16 %v655
      %v727 = vunpack.c.l.b16 %v656
      %v728 = vunpack.c.l.b16 %v657
      %v729 = vunpack.c.l.b16 %v658
      %v730 = vunpack.c.l.b16 %v659
      %v731 = vunpack.c.l.b16 %v660
      %v732 = vunpack.c.l.b16 %v661
      %v733 = vunpack.c.l.b16 %v662
      %v734 = vunpack.c.l.b16 %v663
      %v735 = vpack.c.b16 %v704, %v703
      %v736 = vpack.c.b16 %v706, %v705
      %v737 = vpack.c.b16 %v708, %v707
      %v738 = vpack.c.b16 %v710, %v709
      %v739 = vpack.c.b16 %v712, %v711
      %v740 = vpack.c.b16 %v714, %v713
      %v741 = vpack.c.b16 %v716, %v715
      %v742 = vpack.c.b16 %v718, %v717
      %v743 = vpack.c.b16 %v720, %v719
      %v744 = vpack.c.b16 %v722, %v721
      %v745 = vpack.c.b16 %v724, %v723
      %v746 = vpack.c.b16 %v726, %v725
      %v747 = vpack.c.b16 %v728, %v727
      %v748 = vpack.c.b16 %v730, %v729
      %v749 = vpack.c.b16 %v732, %v731
      %v750 = vpack.c.b16 %v734, %v733
      %767 = vmatprep.subr.bf16.mxu0 0
      %768 = vmatpush1.bf16.msra.mxu0 %v735
      %769 = vmatprep.subr.bf16.mxu0 0
      %770 = vmatpush1.bf16.msra.mxu0 %v736
      %771 = vmatprep.subr.bf16.mxu0 0
      %772 = vmatpush1.bf16.msra.mxu0 %v737
      %773 = vmatprep.subr.bf16.mxu0 0
      %774 = vmatpush1.bf16.msra.mxu0 %v738
      %775 = vmatprep.subr.bf16.mxu0 0
      %776 = vmatpush1.bf16.msra.mxu0 %v739
      %777 = vmatprep.subr.bf16.mxu0 0
      %778 = vmatpush1.bf16.msra.mxu0 %v740
      %779 = vmatprep.subr.bf16.mxu0 0
      %780 = vmatpush1.bf16.msra.mxu0 %v741
      %781 = vmatprep.subr.bf16.mxu0 0
      %782 = vmatpush1.bf16.msra.mxu0 %v742
      %783 = vmatprep.subr.bf16.mxu0 0
      %784 = vmatpush1.bf16.msra.mxu0 %v743
      %785 = vmatprep.subr.bf16.mxu0 0
      %786 = vmatpush1.bf16.msra.mxu0 %v744
      %787 = vmatprep.subr.bf16.mxu0 0
      %788 = vmatpush1.bf16.msra.mxu0 %v745
      %789 = vmatprep.subr.bf16.mxu0 0
      %790 = vmatpush1.bf16.msra.mxu0 %v746
      %791 = vmatprep.subr.bf16.mxu0 0
      %792 = vmatpush1.bf16.msra.mxu0 %v747
      %793 = vmatprep.subr.bf16.mxu0 0
      %794 = vmatpush1.bf16.msra.mxu0 %v748
      %795 = vmatprep.subr.bf16.mxu0 0
      %796 = vmatpush1.bf16.msra.mxu0 %v749
      %797 = vmatprep.subr.bf16.mxu0 0
      %798 = vmatpush1.bf16.msra.mxu0 %v750
      %799 = vmatprep.mubr.bf16.mxu0 %v617
      %800 = vmatmul.mubr.bf16.gmra.mrb[0].mxu0 %v616
      %v801 = vpop.f32.mrb[0].mxu0
      %v802 = vadd.f32 %v669, %v801
      %v803 = vpop.f32.mrb[0].mxu0
      %v804 = vpop.f32.mrb[0].mxu0
      %v805 = vadd.f32 %v669, %v804
      %v806 = vpop.f32.mrb[0].mxu0
      %807 = vmatprep.mubr.bf16.mxu0 %v619
      %808 = vmatmul.mubr.bf16.gmra.mrb[0].mxu0 %v618
      %v809 = vpop.f32.mrb[0].mxu0
      %v810 = vadd.f32 %v669, %v809
      %v811 = vpop.f32.mrb[0].mxu0
      %v812 = vpop.f32.mrb[0].mxu0
      %v813 = vadd.f32 %v669, %v812
      %v814 = vpop.f32.mrb[0].mxu0
      %815 = vmatprep.mubr.bf16.mxu0 %v621
      %816 = vmatmul.mubr.bf16.gmra.mrb[0].mxu0 %v620
      %v817 = vpop.f32.mrb[0].mxu0
      %v818 = vadd.f32 %v669, %v817
      %v819 = vpop.f32.mrb[0].mxu0
      %v820 = vpop.f32.mrb[0].mxu0
      %v821 = vadd.f32 %v669, %v820
      %v822 = vpop.f32.mrb[0].mxu0
      %823 = vmatprep.mubr.bf16.mxu0 %v623
      %824 = vmatmul.mubr.bf16.gmra.mrb[0].mxu0 %v622
      %v825 = vpop.f32.mrb[0].mxu0
      %v826 = vadd.f32 %v669, %v825
      %v827 = vpop.f32.mrb[0].mxu0
      %v828 = vpop.f32.mrb[0].mxu0
      %v829 = vadd.f32 %v669, %v828
      %v830 = vpop.f32.mrb[0].mxu0
      %831 = vmatprep.mubr.bf16.mxu0 %v625
      %832 = vmatmul.mubr.bf16.gmra.mrb[0].mxu0 %v624
      %v833 = vpop.f32.mrb[0].mxu0
      %v834 = vadd.f32 %v669, %v833
      %v835 = vpop.f32.mrb[0].mxu0
      %v836 = vpop.f32.mrb[0].mxu0
      %v837 = vadd.f32 %v669, %v836
      %v838 = vpop.f32.mrb[0].mxu0
      %839 = vmatprep.mubr.bf16.mxu0 %v627
      %840 = vmatmul.mubr.bf16.gmra.mrb[0].mxu0 %v626
      %v841 = vpop.f32.mrb[0].mxu0
      %v842 = vadd.f32 %v669, %v841
      %v843 = vpop.f32.mrb[0].mxu0
      %v844 = vpop.f32.mrb[0].mxu0
      %v845 = vadd.f32 %v669, %v844
      %v846 = vpop.f32.mrb[0].mxu0
      %847 = vmatprep.mubr.bf16.mxu0 %v629
      %848 = vmatmul.mubr.bf16.gmra.mrb[0].mxu0 %v628
      %v849 = vpop.f32.mrb[0].mxu0
      %v850 = vadd.f32 %v669, %v849
      %v851 = vpop.f32.mrb[0].mxu0
      %v852 = vpop.f32.mrb[0].mxu0
      %v853 = vadd.f32 %v669, %v852
      %v854 = vpop.f32.mrb[0].mxu0
      %855 = vmatprep.mubr.bf16.mxu0 %v631
      %856 = vmatmul.mubr.bf16.gmra.mrb[0].mxu0 %v630
      %v857 = vpop.f32.mrb[0].mxu0
      %v858 = vadd.f32 %v669, %v857
      %v859 = vpop.f32.mrb[0].mxu0
      %v860 = vpop.f32.mrb[0].mxu0
      %v861 = vadd.f32 %v669, %v860
      %v862 = vpop.f32.mrb[0].mxu0
      %863 = vdwg.mxu0
      %v864 = vadd.f32 %v299, %v802
      %v865 = vadd.f32 %v300, %v805
      %v866 = vadd.f32 %v301, %v810
      %v867 = vadd.f32 %v302, %v813
      %v868 = vadd.f32 %v303, %v818
      %v869 = vadd.f32 %v304, %v821
      %v870 = vadd.f32 %v305, %v826
      %v871 = vadd.f32 %v306, %v829
      %v872 = vadd.f32 %v307, %v834
      %v873 = vadd.f32 %v308, %v837
      %v874 = vadd.f32 %v309, %v842
      %v875 = vadd.f32 %v310, %v845
      %v876 = vadd.f32 %v311, %v850
      %v877 = vadd.f32 %v312, %v853
      %v878 = vadd.f32 %v313, %v858
      %v879 = vadd.f32 %v314, %v861
      %v880 = vld [vmem:[%s5] sm:$0x1]
      %v881 = vld [vmem:[%s6] sm:$0x1]
      %882 = vadd.xlane.f32.xlu0 %v864
      %v883 = vpop.xlane.xlu0 %882
      %884 = vadd.xlane.f32.xlu0 %v865
      %v885 = vpop.xlane.xlu0 %884
      %886 = vadd.xlane.f32.xlu0 %v866
      %v887 = vpop.xlane.xlu0 %886
      %888 = vadd.xlane.f32.xlu0 %v867
      %v889 = vpop.xlane.xlu0 %888
      %890 = vadd.xlane.f32.xlu0 %v868
      %v891 = vpop.xlane.xlu0 %890
      %892 = vadd.xlane.f32.xlu0 %v869
      %v893 = vpop.xlane.xlu0 %892
      %894 = vadd.xlane.f32.xlu0 %v870
      %v895 = vpop.xlane.xlu0 %894
      %896 = vadd.xlane.f32.xlu0 %v871
      %v897 = vpop.xlane.xlu0 %896
      %898 = vadd.xlane.f32.xlu0 %v872
      %v899 = vpop.xlane.xlu0 %898
      %900 = vadd.xlane.f32.xlu0 %v873
      %v901 = vpop.xlane.xlu0 %900
      %902 = vadd.xlane.f32.xlu0 %v874
      %v903 = vpop.xlane.xlu0 %902
      %904 = vadd.xlane.f32.xlu0 %v875
      %v905 = vpop.xlane.xlu0 %904
      %906 = vadd.xlane.f32.xlu0 %v876
      %v907 = vpop.xlane.xlu0 %906
      %908 = vadd.xlane.f32.xlu0 %v877
      %v909 = vpop.xlane.xlu0 %908
      %910 = vadd.xlane.f32.xlu0 %v878
      %v911 = vpop.xlane.xlu0 %910
      %912 = vadd.xlane.f32.xlu0 %v879
      %v913 = vpop.xlane.xlu0 %912
      %v914 = vrcp.pop 128.0
      %v915 = vmul.f32 %v883, %v914
      %v916 = vmul.f32 %v885, %v914
      %v917 = vmul.f32 %v887, %v914
      %v918 = vmul.f32 %v889, %v914
      %v919 = vmul.f32 %v891, %v914
      %v920 = vmul.f32 %v893, %v914
      %v921 = vmul.f32 %v895, %v914
      %v922 = vmul.f32 %v897, %v914
      %v923 = vmul.f32 %v899, %v914
      %v924 = vmul.f32 %v901, %v914
      %v925 = vmul.f32 %v903, %v914
      %v926 = vmul.f32 %v905, %v914
      %v927 = vmul.f32 %v907, %v914
      %v928 = vmul.f32 %v909, %v914
      %v929 = vmul.f32 %v911, %v914
      %v930 = vmul.f32 %v913, %v914
      %v931 = vsub.f32 %v864, %v915
      %v932 = vsub.f32 %v865, %v916
      %v933 = vsub.f32 %v866, %v917
      %v934 = vsub.f32 %v867, %v918
      %v935 = vsub.f32 %v868, %v919
      %v936 = vsub.f32 %v869, %v920
      %v937 = vsub.f32 %v870, %v921
      %v938 = vsub.f32 %v871, %v922
      %v939 = vsub.f32 %v872, %v923
      %v940 = vsub.f32 %v873, %v924
      %v941 = vsub.f32 %v874, %v925
      %v942 = vsub.f32 %v875, %v926
      %v943 = vsub.f32 %v876, %v927
      %v944 = vsub.f32 %v877, %v928
      %v945 = vsub.f32 %v878, %v929
      %v946 = vsub.f32 %v879, %v930
      %v947 = vmul.f32 %v931, %v931
      %v948 = vmul.f32 %v932, %v932
      %v949 = vmul.f32 %v933, %v933
      %v950 = vmul.f32 %v934, %v934
      %v951 = vmul.f32 %v935, %v935
      %v952 = vmul.f32 %v936, %v936
      %v953 = vmul.f32 %v937, %v937
      %v954 = vmul.f32 %v938, %v938
      %v955 = vmul.f32 %v939, %v939
      %v956 = vmul.f32 %v940, %v940
      %v957 = vmul.f32 %v941, %v941
      %v958 = vmul.f32 %v942, %v942
      %v959 = vmul.f32 %v943, %v943
      %v960 = vmul.f32 %v944, %v944
      %v961 = vmul.f32 %v945, %v945
      %v962 = vmul.f32 %v946, %v946
      %963 = vadd.xlane.f32.xlu0 %v947
      %v964 = vpop.xlane.xlu0 %963
      %965 = vadd.xlane.f32.xlu0 %v948
      %v966 = vpop.xlane.xlu0 %965
      %967 = vadd.xlane.f32.xlu0 %v949
      %v968 = vpop.xlane.xlu0 %967
      %969 = vadd.xlane.f32.xlu0 %v950
      %v970 = vpop.xlane.xlu0 %969
      %971 = vadd.xlane.f32.xlu0 %v951
      %v972 = vpop.xlane.xlu0 %971
      %973 = vadd.xlane.f32.xlu0 %v952
      %v974 = vpop.xlane.xlu0 %973
      %975 = vadd.xlane.f32.xlu0 %v953
      %v976 = vpop.xlane.xlu0 %975
      %977 = vadd.xlane.f32.xlu0 %v954
      %v978 = vpop.xlane.xlu0 %977
      %979 = vadd.xlane.f32.xlu0 %v955
      %v980 = vpop.xlane.xlu0 %979
      %981 = vadd.xlane.f32.xlu0 %v956
      %v982 = vpop.xlane.xlu0 %981
      %983 = vadd.xlane.f32.xlu0 %v957
      %v984 = vpop.xlane.xlu0 %983
      %985 = vadd.xlane.f32.xlu0 %v958
      %v986 = vpop.xlane.xlu0 %985
      %987 = vadd.xlane.f32.xlu0 %v959
      %v988 = vpop.xlane.xlu0 %987
      %989 = vadd.xlane.f32.xlu0 %v960
      %v990 = vpop.xlane.xlu0 %989
      %991 = vadd.xlane.f32.xlu0 %v961
      %v992 = vpop.xlane.xlu0 %991
      %993 = vadd.xlane.f32.xlu0 %v962
      %v994 = vpop.xlane.xlu0 %993
      %v995 = vmul.f32 %v964, %v914
      %v996 = vmul.f32 %v966, %v914
      %v997 = vmul.f32 %v968, %v914
      %v998 = vmul.f32 %v970, %v914
      %v999 = vmul.f32 %v972, %v914
      %v1000 = vmul.f32 %v974, %v914
      %v1001 = vmul.f32 %v976, %v914
      %v1002 = vmul.f32 %v978, %v914
      %v1003 = vmul.f32 %v980, %v914
      %v1004 = vmul.f32 %v982, %v914
      %v1005 = vmul.f32 %v984, %v914
      %v1006 = vmul.f32 %v986, %v914
      %v1007 = vmul.f32 %v988, %v914
      %v1008 = vmul.f32 %v990, %v914
      %v1009 = vmul.f32 %v992, %v914
      %v1010 = vmul.f32 %v994, %v914
      %v1011 = vadd.f32 %v995, 1e-05
      %v1012 = vadd.f32 %v996, 1e-05
      %v1013 = vadd.f32 %v997, 1e-05
      %v1014 = vadd.f32 %v998, 1e-05
      %v1015 = vadd.f32 %v999, 1e-05
      %v1016 = vadd.f32 %v1000, 1e-05
      %v1017 = vadd.f32 %v1001, 1e-05
      %v1018 = vadd.f32 %v1002, 1e-05
      %v1019 = vadd.f32 %v1003, 1e-05
      %v1020 = vadd.f32 %v1004, 1e-05
      %v1021 = vadd.f32 %v1005, 1e-05
      %v1022 = vadd.f32 %v1006, 1e-05
      %v1023 = vadd.f32 %v1007, 1e-05
      %v1024 = vadd.f32 %v1008, 1e-05
      %v1025 = vadd.f32 %v1009, 1e-05
      %v1026 = vadd.f32 %v1010, 1e-05
      %v1027 = vrsqrt.pop %v1011
      %v1028 = vrsqrt.pop %v1012
      %v1029 = vrsqrt.pop %v1013
      %v1030 = vrsqrt.pop %v1014
      %v1031 = vrsqrt.pop %v1015
      %v1032 = vrsqrt.pop %v1016
      %v1033 = vrsqrt.pop %v1017
      %v1034 = vrsqrt.pop %v1018
      %v1035 = vrsqrt.pop %v1019
      %v1036 = vrsqrt.pop %v1020
      %v1037 = vrsqrt.pop %v1021
      %v1038 = vrsqrt.pop %v1022
      %v1039 = vrsqrt.pop %v1023
      %v1040 = vrsqrt.pop %v1024
      %v1041 = vrsqrt.pop %v1025
      %v1042 = vrsqrt.pop %v1026
      %v1043 = vmul.f32 %v931, %v1027
      %v1044 = vmul.f32 %v932, %v1028
      %v1045 = vmul.f32 %v933, %v1029
      %v1046 = vmul.f32 %v934, %v1030
      %v1047 = vmul.f32 %v935, %v1031
      %v1048 = vmul.f32 %v936, %v1032
      %v1049 = vmul.f32 %v937, %v1033
      %v1050 = vmul.f32 %v938, %v1034
      %v1051 = vmul.f32 %v939, %v1035
      %v1052 = vmul.f32 %v940, %v1036
      %v1053 = vmul.f32 %v941, %v1037
      %v1054 = vmul.f32 %v942, %v1038
      %v1055 = vmul.f32 %v943, %v1039
      %v1056 = vmul.f32 %v944, %v1040
      %v1057 = vmul.f32 %v945, %v1041
      %v1058 = vmul.f32 %v946, %v1042
      %v1060 = vlaneseq
      %v1061 = vshrl.u32 %v1060, 7
      %v1062 = vsub.s32 0, %v1061
      %v1063 = vrot.slane %v880, %v1062
      %v1065 = vmul.f32 %v1043, %v1063
      %v1066 = vmul.f32 %v1044, %v1063
      %v1067 = vmul.f32 %v1045, %v1063
      %v1068 = vmul.f32 %v1046, %v1063
      %v1069 = vmul.f32 %v1047, %v1063
      %v1070 = vmul.f32 %v1048, %v1063
      %v1071 = vmul.f32 %v1049, %v1063
      %v1072 = vmul.f32 %v1050, %v1063
      %v1073 = vmul.f32 %v1051, %v1063
      %v1074 = vmul.f32 %v1052, %v1063
      %v1075 = vmul.f32 %v1053, %v1063
      %v1076 = vmul.f32 %v1054, %v1063
      %v1077 = vmul.f32 %v1055, %v1063
      %v1078 = vmul.f32 %v1056, %v1063
      %v1079 = vmul.f32 %v1057, %v1063
      %v1080 = vmul.f32 %v1058, %v1063
      %v1082 = vlaneseq
      %v1083 = vshrl.u32 %v1082, 7
      %v1084 = vsub.s32 0, %v1083
      %v1085 = vrot.slane %v881, %v1084
      %v1087 = vadd.f32 %v1065, %v1085
      %v1088 = vadd.f32 %v1066, %v1085
      %v1089 = vadd.f32 %v1067, %v1085
      %v1090 = vadd.f32 %v1068, %v1085
      %v1091 = vadd.f32 %v1069, %v1085
      %v1092 = vadd.f32 %v1070, %v1085
      %v1093 = vadd.f32 %v1071, %v1085
      %v1094 = vadd.f32 %v1072, %v1085
      %v1095 = vadd.f32 %v1073, %v1085
      %v1096 = vadd.f32 %v1074, %v1085
      %v1097 = vadd.f32 %v1075, %v1085
      %v1098 = vadd.f32 %v1076, %v1085
      %v1099 = vadd.f32 %v1077, %v1085
      %v1100 = vadd.f32 %v1078, %v1085
      %v1101 = vadd.f32 %v1079, %v1085
      %v1102 = vadd.f32 %v1080, %v1085
      %v1103 = vpack.c.bf16 %v1088, %v1087
      %v1104 = vpack.c.bf16 %v1090, %v1089
      %v1105 = vpack.c.bf16 %v1092, %v1091
      %v1106 = vpack.c.bf16 %v1094, %v1093
      %v1107 = vpack.c.bf16 %v1096, %v1095
      %v1108 = vpack.c.bf16 %v1098, %v1097
      %v1109 = vpack.c.bf16 %v1100, %v1099
      %v1110 = vpack.c.bf16 %v1102, %v1101
      %v1119 = vunpack.c.l.b16 %v1103
      %v1120 = vunpack.c.h.b16 %v1103
      %v1121 = vunpack.c.l.b16 %v1104
      %v1122 = vunpack.c.h.b16 %v1104
      %v1123 = vunpack.c.l.b16 %v1105
      %v1124 = vunpack.c.h.b16 %v1105
      %v1125 = vunpack.c.l.b16 %v1106
      %v1126 = vunpack.c.h.b16 %v1106
      %v1127 = vunpack.c.l.b16 %v1107
      %v1128 = vunpack.c.h.b16 %v1107
      %v1129 = vunpack.c.l.b16 %v1108
      %v1130 = vunpack.c.h.b16 %v1108
      %v1131 = vunpack.c.l.b16 %v1109
      %v1132 = vunpack.c.h.b16 %v1109
      %v1133 = vunpack.c.l.b16 %v1110
      %v1134 = vunpack.c.h.b16 %v1110
      %v1135 = vpack.c.b16 %v1119, %v1119
      %v1136 = vpack.c.b16 %v1120, %v1120
      %v1137 = vpack.c.b16 %v1121, %v1121
      %v1138 = vpack.c.b16 %v1122, %v1122
      %v1139 = vpack.c.b16 %v1123, %v1123
      %v1140 = vpack.c.b16 %v1124, %v1124
      %v1141 = vpack.c.b16 %v1125, %v1125
      %v1142 = vpack.c.b16 %v1126, %v1126
      %v1143 = vpack.c.b16 %v1127, %v1127
      %v1144 = vpack.c.b16 %v1128, %v1128
      %v1145 = vpack.c.b16 %v1129, %v1129
      %v1146 = vpack.c.b16 %v1130, %v1130
      %v1147 = vpack.c.b16 %v1131, %v1131
      %v1148 = vpack.c.b16 %v1132, %v1132
      %v1149 = vpack.c.b16 %v1133, %v1133
      %v1150 = vpack.c.b16 %v1134, %v1134
      %1167 = vst [vmem:[%s280] sm:$0xf] %v1135
      %1168 = vst [vmem:[%s280 + $0x4] sm:$0xf] %v1136
      %1169 = vst [vmem:[%s280 + $0x8] sm:$0xf] %v1137
      %1170 = vst [vmem:[%s280 + $0xc] sm:$0xf] %v1138
      %1171 = vst [vmem:[%s280 + $0x10] sm:$0xf] %v1139
      %1172 = vst [vmem:[%s280 + $0x14] sm:$0xf] %v1140
      %1173 = vst [vmem:[%s280 + $0x18] sm:$0xf] %v1141
      %1174 = vst [vmem:[%s280 + $0x1c] sm:$0xf] %v1142
      %1175 = vst [vmem:[%s280 + $0x20] sm:$0xf] %v1143
      %1176 = vst [vmem:[%s280 + $0x24] sm:$0xf] %v1144
      %1177 = vst [vmem:[%s280 + $0x28] sm:$0xf] %v1145
      %1178 = vst [vmem:[%s280 + $0x2c] sm:$0xf] %v1146
      %1179 = vst [vmem:[%s280 + $0x30] sm:$0xf] %v1147
      %1180 = vst [vmem:[%s280 + $0x34] sm:$0xf] %v1148
      %1181 = vst [vmem:[%s280 + $0x38] sm:$0xf] %v1149
      %1182 = vst [vmem:[%s280 + $0x3c] sm:$0xf] %v1150
      %s1183 = smul.u32 16, %s18
      %p1184 = scmp.lt.s32.totalorder %s1183, 31
      %s1185 = scalar_select %p1184, %s1183, 31
      %s1186 = smul.addr %s1185, 4
      %s1187 = scalar_lea.vmem %s7, %s1186
      // Predicated region
      $region49: #{run.6} parent=47 // pred_check
        %p1188 = pneg %p188
      $region50: #{run.6} parent=47 // pred_check_branch
        %1190 = sbr.rel (%p1188) target = $region52
      $region51: #{run.6} parent=47 // pred_region
        %s1191 = smul.u32 16, %s18
      $region52: #{run.6} parent=47 // pred_fallthru
        _
    $region48: #{run.6} parent=5 // pred_fallthru
      _
    %p1192 = scmp.le.s32.totalorder 2, %s13
    // Predicated region
    $region53: #{run.6} parent=5 // pred_check
      %p1193 = pneg %p1192
    $region54: #{run.6} parent=5 // pred_check_branch
      %1195 = sbr.rel (%p1193) target = $region56
    $region55: #{run.6} parent=5 // pred_region
      %s1196 = ssub.s32 %s13, 2
      // Predicated region
      $region57: #{run.6} parent=55 // pred_check
        %p1197 = pneg %p194
      $region58: #{run.6} parent=55 // pred_check_branch
        %1199 = sbr.rel (%p1197) target = $region60
      $region59: #{run.6} parent=55 // pred_region
        %s1200 = smul.u32 16, %s19
        %p1201 = scmp.lt.s32.totalorder %s1200, 31
        %s1202 = scalar_select %p1201, %s1200, 31
        %s1203 = smul.addr %s1202, 4
        %s1204 = scalar_lea.vmem %s7, %s1203
      $region60: #{run.6} parent=55 // pred_fallthru
        _
    $region56: #{run.6} parent=5 // pred_fallthru
      _
  $region6: #{run.6} parent=0 // loop_footer
    %s17 = sadd.s32 1, %s13
  $region7: #{run.6} parent=0 // loop_footer_branch
    %12 = sbr.rel target = $region3
  $region8: #{run.6} parent=0 // loop_exit
    _

// kernel: run.5
$region0: #{run.5}
  #allocation0 [shape = 'u32[]', space=smem, size = 0x4, offset = 0x4, fixed_abs, tag = 'smem constant byte address 0x4 - core index']
  #allocation1 [shape = 'u32[144,128]{1,0:T(1,128)}', space=vmem, size = 0x12000, scoped, tag = 'internal scratch']
  #allocation2 [shape = 'f32[64,128]{1,0:T(8,128)}', space=vmem, size = 0x8000, scoped, tag = 'scratch operand']
  %s0 = inlined_call_operand.vmem [shape: bf16[2,128,128], index: 0, kind: input, shape index: {}]
  %s1 = inlined_call_operand.vmem [shape: bf16[2,128,128], index: 1, kind: input, shape index: {}]
  %s2 = inlined_call_operand.vmem [shape: bf16[2,128,128], index: 2, kind: input, shape index: {}]
  %s3 = inlined_call_operand.vmem [shape: bf16[128,128], index: 3, kind: input, shape index: {}]
  %s4 = inlined_call_operand.vmem [shape: bf16[128,128], index: 4, kind: input, shape index: {}]
  %s5 = inlined_call_operand.vmem [shape: bf16[128,128], index: 5, kind: input, shape index: {}]
  %s6 = inlined_call_operand.vmem [shape: bf16[128,128], index: 6, kind: input, shape index: {}]
  %s7 = inlined_call_operand.vmem [shape: f32[1,128], index: 7, kind: input, shape index: {}]
  %s8 = inlined_call_operand.vmem [shape: f32[1,128], index: 8, kind: input, shape index: {}]
  %s9 = inlined_call_operand.vmem [shape: f32[1,128], index: 9, kind: input, shape index: {}]
  %s10 = inlined_call_operand.vmem [shape: f32[1,128], index: 10, kind: input, shape index: {}]
  %s11 = inlined_call_operand.vmem [shape: f32[1,128], index: 11, kind: input, shape index: {}]
  %s12 = inlined_call_operand.vmem [shape: f32[1,128], index: 12, kind: input, shape index: {}]
  %s13 = inlined_call_operand.vmem [shape: bf16[2,128,128], index: 13, kind: output, shape index: {0}]
  %s14 = inlined_call_operand.hbm [shape: f32[2,128,128], index: 14, kind: output, shape index: {1}]
  %15 = xla_tuple %s13, %s14
  %s16 = sld [smem:[#allocation0]]
  $region93: #{run.5} parent=0
    _
  %s18 = ssub.s32 1, %s16
  %s19 = scalar_select 0, %s18, %s16
  $region1: #{run.5} parent=0
    #allocation3 [shape = 'u8[65536]{0}', space=vmem, size = 0x10000, scoped, tag = 'output window, operand 1']
    #allocation4 [shape = 's32[2]{0}', space=sflag, size = 0x8, scoped, tag = 'scoped memory for run.5']
    %20 = vsyncpa [#allocation4], 0
    %s21 = scalar_lea.sflag [#allocation4], 1
    %22 = vsyncpa %s21, 0
    loop: start=0, step=1, limit=6
    $region2: #{run.5} parent=1 // loop_pre_header
      _
    $region3: #{run.5} parent=1 // loop_header
      %s24 = sphi 0, %s28
      %p25 = scmp.ge.s32.totalorder %s24, 6
      %s31 = sphi 0, %s43
      %s32 = sphi 0, %s39
      %s33 = sphi 0, %s31
      %s34 = sphi 0, %s32
      %s35 = sphi 0, %s33
      %s36 = sphi 0, %s34
      %s48 = sphi 0, %s50
      %s51 = sphi 0, %s48
      %s52 = sphi 0, %s51
      %s68 = sphi 0, %s52
      %s74 = sphi 0, %s76
      %s77 = sphi 0, %s74
      %s78 = sphi 0, %s77
      %s94 = sphi 0, %s78
      %s100 = sphi 0, %s102
      %s103 = sphi 0, %s100
      %s104 = sphi 0, %s103
      %s120 = sphi 0, %s104
      %s124 = sphi 0, %s124
      %s126 = sphi 0, %s124
      %s127 = sphi 0, %s126
      %s141 = sphi 0, %s127
      %s145 = sphi 0, %s145
      %s147 = sphi 0, %s145
      %s148 = sphi 0, %s147
      %s162 = sphi 0, %s148
      %s166 = sphi 0, %s166
      %s168 = sphi 0, %s166
      %s169 = sphi 0, %s168
      %s183 = sphi 0, %s169
      %s187 = sphi 0, %s187
      %s189 = sphi 0, %s187
      %s190 = sphi 0, %s189
      %s204 = sphi 0, %s190
      %s208 = sphi 0, %s208
      %s210 = sphi 0, %s208
      %s211 = sphi 0, %s210
      %s225 = sphi 0, %s211
      %s229 = sphi 0, %s229
      %s231 = sphi 0, %s229
      %s232 = sphi 0, %s231
      %s246 = sphi 0, %s232
      %s250 = sphi 0, %s250
      %s252 = sphi 0, %s250
      %s253 = sphi 0, %s252
      %s267 = sphi 0, %s253
      %s271 = sphi 0, %s271
      %s273 = sphi 0, %s271
      %s274 = sphi 0, %s273
      %s288 = sphi 0, %s274
      %s292 = sphi 0, %s292
      %s294 = sphi 0, %s292
      %s295 = sphi 0, %s294
      %s309 = sphi 0, %s295
      %s313 = sphi 0, %s313
      %s315 = sphi 0, %s313
      %s316 = sphi 0, %s315
      %s330 = sphi 0, %s316
      %s338 = sphi 0, %s340
      %s341 = sphi 0, %s338
      %s342 = sphi 0, %s341
      %s358 = sphi 0, %s342
      %s366 = sphi 0, %s368
      %s369 = sphi 0, %s366
      %s370 = sphi 0, %s369
      %s386 = sphi 0, %s370
    $region4: #{run.5} parent=1 // loop_header_branch
      %27 = sbr.rel (%p25) target = $region8
    $region5: #{run.5} parent=1 // loop_body
      %s29 = ssub.s32 %s24, 1
      %s30 = ssub.s32 %s24, 2
      %s37 = sadd.s32 1, %s32
      %p38 = scmp.ge.s32.totalorder %s37, 2
      %s39 = scalar_select %p38, 0, %s37
      %s40 = sadd.s32 1, %s31
      %s41 = scalar_select %p38, %s40, %s31
      %p42 = scmp.ge.s32.totalorder %s41, 2
      %s43 = scalar_select %p42, 0, %s41
      %s44 = ssub.s32 %s31, %s43
      %s45 = ssub.s32 %s32, %s39
      %s46 = sor.u32 %s44, %s45
      %p47 = scmp.eq.s32.totalorder %s46, 0
      %s49 = sadd.s32 %s48, 1
      %s50 = scalar_select %p47, %s48, %s49
      %p53 = pneg %p47
      %p54 = scmp.eq.s32.totalorder %s24, 3
      %p55 = por %p53, %p54
      %p56 = scmp.ne.s32.totalorder %s48, %s51
      %p57 = scmp.eq.s32.totalorder %s24, 0
      %p58 = por %p56, %p57
      %p59 = scmp.ne.s32.totalorder %s48, %s51
      %p60 = scmp.eq.s32.totalorder %s29, 3
      %p61 = por %p59, %p60
      %p62 = scmp.ne.s32.totalorder %s51, %s52
      %p63 = scmp.eq.s32.totalorder %s29, 0
      %p64 = por %p62, %p63
      %p65 = scmp.ne.s32.totalorder %s51, %s52
      %p66 = scmp.eq.s32.totalorder %s30, 3
      %p67 = por %p65, %p66
      %p69 = scmp.ne.s32.totalorder %s52, %s68
      %p70 = scmp.eq.s32.totalorder %s30, 0
      %p71 = por %p69, %p70
      %s72 = ssub.s32 %s31, %s43
      %p73 = scmp.eq.s32.totalorder %s72, 0
      %s75 = sadd.s32 %s74, 1
      %s76 = scalar_select %p73, %s74, %s75
      %p79 = pneg %p73
      %p80 = scmp.eq.s32.totalorder %s24, 3
      %p81 = por %p79, %p80
      %p82 = scmp.ne.s32.totalorder %s74, %s77
      %p83 = scmp.eq.s32.totalorder %s24, 0
      %p84 = por %p82, %p83
      %p85 = scmp.ne.s32.totalorder %s74, %s77
      %p86 = scmp.eq.s32.totalorder %s29, 3
      %p87 = por %p85, %p86
      %p88 = scmp.ne.s32.totalorder %s77, %s78
      %p89 = scmp.eq.s32.totalorder %s29, 0
      %p90 = por %p88, %p89
      %p91 = scmp.ne.s32.totalorder %s77, %s78
      %p92 = scmp.eq.s32.totalorder %s30, 3
      %p93 = por %p91, %p92
      %p95 = scmp.ne.s32.totalorder %s78, %s94
      %p96 = scmp.eq.s32.totalorder %s30, 0
      %p97 = por %p95, %p96
      %s98 = ssub.s32 %s31, %s43
      %p99 = scmp.eq.s32.totalorder %s98, 0
      %s101 = sadd.s32 %s100, 1
      %s102 = scalar_select %p99, %s100, %s101
      %p105 = pneg %p99
      %p106 = scmp.eq.s32.totalorder %s24, 3
      %p107 = por %p105, %p106
      %p108 = scmp.ne.s32.totalorder %s100, %s103
      %p109 = scmp.eq.s32.totalorder %s24, 0
      %p110 = por %p108, %p109
      %p111 = scmp.ne.s32.totalorder %s100, %s103
      %p112 = scmp.eq.s32.totalorder %s29, 3
      %p113 = por %p111, %p112
      %p114 = scmp.ne.s32.totalorder %s103, %s104
      %p115 = scmp.eq.s32.totalorder %s29, 0
      %p116 = por %p114, %p115
      %p117 = scmp.ne.s32.totalorder %s103, %s104
      %p118 = scmp.eq.s32.totalorder %s30, 3
      %p119 = por %p117, %p118
      %p121 = scmp.ne.s32.totalorder %s104, %s120
      %p122 = scmp.eq.s32.totalorder %s30, 0
      %p123 = por %p121, %p122
      %s125 = sadd.s32 %s124, 1
      %p128 = scmp.eq.s32.totalorder %s24, 3
      %p129 = scmp.ne.s32.totalorder %s124, %s126
      %p130 = scmp.eq.s32.totalorder %s24, 0
      %p131 = por %p129, %p130
      %p132 = scmp.ne.s32.totalorder %s124, %s126
      %p133 = scmp.eq.s32.totalorder %s29, 3
      %p134 = por %p132, %p133
      %p135 = scmp.ne.s32.totalorder %s126, %s127
      %p136 = scmp.eq.s32.totalorder %s29, 0
      %p137 = por %p135, %p136
      %p138 = scmp.ne.s32.totalorder %s126, %s127
      %p139 = scmp.eq.s32.totalorder %s30, 3
      %p140 = por %p138, %p139
      %p142 = scmp.ne.s32.totalorder %s127, %s141
      %p143 = scmp.eq.s32.totalorder %s30, 0
      %p144 = por %p142, %p143
      %s146 = sadd.s32 %s145, 1
      %p149 = scmp.eq.s32.totalorder %s24, 3
      %p150 = scmp.ne.s32.totalorder %s145, %s147
      %p151 = scmp.eq.s32.totalorder %s24, 0
      %p152 = por %p150, %p151
      %p153 = scmp.ne.s32.totalorder %s145, %s147
      %p154 = scmp.eq.s32.totalorder %s29, 3
      %p155 = por %p153, %p154
      %p156 = scmp.ne.s32.totalorder %s147, %s148
      %p157 = scmp.eq.s32.totalorder %s29, 0
      %p158 = por %p156, %p157
      %p159 = scmp.ne.s32.totalorder %s147, %s148
      %p160 = scmp.eq.s32.totalorder %s30, 3
      %p161 = por %p159, %p160
      %p163 = scmp.ne.s32.totalorder %s148, %s162
      %p164 = scmp.eq.s32.totalorder %s30, 0
      %p165 = por %p163, %p164
      %s167 = sadd.s32 %s166, 1
      %p170 = scmp.eq.s32.totalorder %s24, 3
      %p171 = scmp.ne.s32.totalorder %s166, %s168
      %p172 = scmp.eq.s32.totalorder %s24, 0
      %p173 = por %p171, %p172
      %p174 = scmp.ne.s32.totalorder %s166, %s168
      %p175 = scmp.eq.s32.totalorder %s29, 3
      %p176 = por %p174, %p175
      %p177 = scmp.ne.s32.totalorder %s168, %s169
      %p178 = scmp.eq.s32.totalorder %s29, 0
      %p179 = por %p177, %p178
      %p180 = scmp.ne.s32.totalorder %s168, %s169
      %p181 = scmp.eq.s32.totalorder %s30, 3
      %p182 = por %p180, %p181
      %p184 = scmp.ne.s32.totalorder %s169, %s183
      %p185 = scmp.eq.s32.totalorder %s30, 0
      %p186 = por %p184, %p185
      %s188 = sadd.s32 %s187, 1
      %p191 = scmp.eq.s32.totalorder %s24, 3
      %p192 = scmp.ne.s32.totalorder %s187, %s189
      %p193 = scmp.eq.s32.totalorder %s24, 0
      %p194 = por %p192, %p193
      %p195 = scmp.ne.s32.totalorder %s187, %s189
      %p196 = scmp.eq.s32.totalorder %s29, 3
      %p197 = por %p195, %p196
      %p198 = scmp.ne.s32.totalorder %s189, %s190
      %p199 = scmp.eq.s32.totalorder %s29, 0
      %p200 = por %p198, %p199
      %p201 = scmp.ne.s32.totalorder %s189, %s190
      %p202 = scmp.eq.s32.totalorder %s30, 3
      %p203 = por %p201, %p202
      %p205 = scmp.ne.s32.totalorder %s190, %s204
      %p206 = scmp.eq.s32.totalorder %s30, 0
      %p207 = por %p205, %p206
      %s209 = sadd.s32 %s208, 1
      %p212 = scmp.eq.s32.totalorder %s24, 3
      %p213 = scmp.ne.s32.totalorder %s208, %s210
      %p214 = scmp.eq.s32.totalorder %s24, 0
      %p215 = por %p213, %p214
      %p216 = scmp.ne.s32.totalorder %s208, %s210
      %p217 = scmp.eq.s32.totalorder %s29, 3
      %p218 = por %p216, %p217
      %p219 = scmp.ne.s32.totalorder %s210, %s211
      %p220 = scmp.eq.s32.totalorder %s29, 0
      %p221 = por %p219, %p220
      %p222 = scmp.ne.s32.totalorder %s210, %s211
      %p223 = scmp.eq.s32.totalorder %s30, 3
      %p224 = por %p222, %p223
      %p226 = scmp.ne.s32.totalorder %s211, %s225
      %p227 = scmp.eq.s32.totalorder %s30, 0
      %p228 = por %p226, %p227
      %s230 = sadd.s32 %s229, 1
      %p233 = scmp.eq.s32.totalorder %s24, 3
      %p234 = scmp.ne.s32.totalorder %s229, %s231
      %p235 = scmp.eq.s32.totalorder %s24, 0
      %p236 = por %p234, %p235
      %p237 = scmp.ne.s32.totalorder %s229, %s231
      %p238 = scmp.eq.s32.totalorder %s29, 3
      %p239 = por %p237, %p238
      %p240 = scmp.ne.s32.totalorder %s231, %s232
      %p241 = scmp.eq.s32.totalorder %s29, 0
      %p242 = por %p240, %p241
      %p243 = scmp.ne.s32.totalorder %s231, %s232
      %p244 = scmp.eq.s32.totalorder %s30, 3
      %p245 = por %p243, %p244
      %p247 = scmp.ne.s32.totalorder %s232, %s246
      %p248 = scmp.eq.s32.totalorder %s30, 0
      %p249 = por %p247, %p248
      %s251 = sadd.s32 %s250, 1
      %p254 = scmp.eq.s32.totalorder %s24, 3
      %p255 = scmp.ne.s32.totalorder %s250, %s252
      %p256 = scmp.eq.s32.totalorder %s24, 0
      %p257 = por %p255, %p256
      %p258 = scmp.ne.s32.totalorder %s250, %s252
      %p259 = scmp.eq.s32.totalorder %s29, 3
      %p260 = por %p258, %p259
      %p261 = scmp.ne.s32.totalorder %s252, %s253
      %p262 = scmp.eq.s32.totalorder %s29, 0
      %p263 = por %p261, %p262
      %p264 = scmp.ne.s32.totalorder %s252, %s253
      %p265 = scmp.eq.s32.totalorder %s30, 3
      %p266 = por %p264, %p265
      %p268 = scmp.ne.s32.totalorder %s253, %s267
      %p269 = scmp.eq.s32.totalorder %s30, 0
      %p270 = por %p268, %p269
      %s272 = sadd.s32 %s271, 1
      %p275 = scmp.eq.s32.totalorder %s24, 3
      %p276 = scmp.ne.s32.totalorder %s271, %s273
      %p277 = scmp.eq.s32.totalorder %s24, 0
      %p278 = por %p276, %p277
      %p279 = scmp.ne.s32.totalorder %s271, %s273
      %p280 = scmp.eq.s32.totalorder %s29, 3
      %p281 = por %p279, %p280
      %p282 = scmp.ne.s32.totalorder %s273, %s274
      %p283 = scmp.eq.s32.totalorder %s29, 0
      %p284 = por %p282, %p283
      %p285 = scmp.ne.s32.totalorder %s273, %s274
      %p286 = scmp.eq.s32.totalorder %s30, 3
      %p287 = por %p285, %p286
      %p289 = scmp.ne.s32.totalorder %s274, %s288
      %p290 = scmp.eq.s32.totalorder %s30, 0
      %p291 = por %p289, %p290
      %s293 = sadd.s32 %s292, 1
      %p296 = scmp.eq.s32.totalorder %s24, 3
      %p297 = scmp.ne.s32.totalorder %s292, %s294
      %p298 = scmp.eq.s32.totalorder %s24, 0
      %p299 = por %p297, %p298
      %p300 = scmp.ne.s32.totalorder %s292, %s294
      %p301 = scmp.eq.s32.totalorder %s29, 3
      %p302 = por %p300, %p301
      %p303 = scmp.ne.s32.totalorder %s294, %s295
      %p304 = scmp.eq.s32.totalorder %s29, 0
      %p305 = por %p303, %p304
      %p306 = scmp.ne.s32.totalorder %s294, %s295
      %p307 = scmp.eq.s32.totalorder %s30, 3
      %p308 = por %p306, %p307
      %p310 = scmp.ne.s32.totalorder %s295, %s309
      %p311 = scmp.eq.s32.totalorder %s30, 0
      %p312 = por %p310, %p311
      %s314 = sadd.s32 %s313, 1
      %p317 = scmp.eq.s32.totalorder %s24, 3
      %p318 = scmp.ne.s32.totalorder %s313, %s315
      %p319 = scmp.eq.s32.totalorder %s24, 0
      %p320 = por %p318, %p319
      %p321 = scmp.ne.s32.totalorder %s313, %s315
      %p322 = scmp.eq.s32.totalorder %s29, 3
      %p323 = por %p321, %p322
      %p324 = scmp.ne.s32.totalorder %s315, %s316
      %p325 = scmp.eq.s32.totalorder %s29, 0
      %p326 = por %p324, %p325
      %p327 = scmp.ne.s32.totalorder %s315, %s316
      %p328 = scmp.eq.s32.totalorder %s30, 3
      %p329 = por %p327, %p328
      %p331 = scmp.ne.s32.totalorder %s316, %s330
      %p332 = scmp.eq.s32.totalorder %s30, 0
      %p333 = por %p331, %p332
      %s334 = ssub.s32 %s31, %s43
      %s335 = ssub.s32 %s32, %s39
      %s336 = sor.u32 %s334, %s335
      %p337 = scmp.eq.s32.totalorder %s336, 0
      %s339 = sadd.s32 %s338, 1
      %s340 = scalar_select %p337, %s338, %s339
      %p343 = pneg %p337
      %p344 = scmp.eq.s32.totalorder %s24, 3
      %p345 = por %p343, %p344
      %p346 = scmp.ne.s32.totalorder %s338, %s341
      %p347 = scmp.eq.s32.totalorder %s24, 0
      %p348 = por %p346, %p347
      %p349 = scmp.ne.s32.totalorder %s338, %s341
      %p350 = scmp.eq.s32.totalorder %s29, 3
      %p351 = por %p349, %p350
      %p352 = scmp.ne.s32.totalorder %s341, %s342
      %p353 = scmp.eq.s32.totalorder %s29, 0
      %p354 = por %p352, %p353
      %p355 = scmp.ne.s32.totalorder %s341, %s342
      %p356 = scmp.eq.s32.totalorder %s30, 3
      %p357 = por %p355, %p356
      %p359 = scmp.ne.s32.totalorder %s342, %s358
      %p360 = scmp.eq.s32.totalorder %s30, 0
      %p361 = por %p359, %p360
      %s362 = ssub.s32 %s31, %s43
      %s363 = ssub.s32 %s32, %s39
      %s364 = sor.u32 %s362, %s363
      %p365 = scmp.eq.s32.totalorder %s364, 0
      %s367 = sadd.s32 %s366, 1
      %s368 = scalar_select %p365, %s366, %s367
      %p371 = pneg %p365
      %p372 = scmp.eq.s32.totalorder %s24, 3
      %p373 = por %p371, %p372
      %p374 = scmp.ne.s32.totalorder %s366, %s369
      %p375 = scmp.eq.s32.totalorder %s24, 0
      %p376 = por %p374, %p375
      %p377 = scmp.ne.s32.totalorder %s366, %s369
      %p378 = scmp.eq.s32.totalorder %s29, 3
      %p379 = por %p377, %p378
      %p380 = scmp.ne.s32.totalorder %s369, %s370
      %p381 = scmp.eq.s32.totalorder %s29, 0
      %p382 = por %p380, %p381
      %p383 = scmp.ne.s32.totalorder %s369, %s370
      %p384 = scmp.eq.s32.totalorder %s30, 3
      %p385 = por %p383, %p384
      %p387 = scmp.ne.s32.totalorder %s370, %s386
      %p388 = scmp.eq.s32.totalorder %s30, 0
      %p389 = por %p387, %p388
      %p390 = scmp.le.s32.totalorder 1, %s24
      %p391 = scmp.lt.s32.totalorder %s24, 5
      %p392 = pnand %p390, %p391
      %p393 = pneg %p392
      // Predicated region
      $region9: #{run.5} parent=5 // pred_check
        _
      $region10: #{run.5} parent=5 // pred_check_branch
        %395 = sbr.rel (%p392) target = $region12
      $region11: #{run.5} parent=5 // pred_region
        %s396 = ssub.s32 %s24, 1
        // Predicated region
        $region13: #{run.5} parent=11 // pred_check
          %p397 = pneg %p137
        $region14: #{run.5} parent=11 // pred_check_branch
          %399 = sbr.rel (%p397) target = $region16
        $region15: #{run.5} parent=11 // pred_region
          _
        $region16: #{run.5} parent=11 // pred_fallthru
          _
        // Predicated region
        $region17: #{run.5} parent=11 // pred_check
          %p400 = pneg %p158
        $region18: #{run.5} parent=11 // pred_check_branch
          %402 = sbr.rel (%p400) target = $region20
        $region19: #{run.5} parent=11 // pred_region
          _
        $region20: #{run.5} parent=11 // pred_fallthru
          _
        // Predicated region
        $region21: #{run.5} parent=11 // pred_check
          %p403 = pneg %p179
        $region22: #{run.5} parent=11 // pred_check_branch
          %405 = sbr.rel (%p403) target = $region24
        $region23: #{run.5} parent=11 // pred_region
          _
        $region24: #{run.5} parent=11 // pred_fallthru
          _
        // Predicated region
        $region25: #{run.5} parent=11 // pred_check
          %p406 = pneg %p200
        $region26: #{run.5} parent=11 // pred_check_branch
          %408 = sbr.rel (%p406) target = $region28
        $region27: #{run.5} parent=11 // pred_region
          _
        $region28: #{run.5} parent=11 // pred_fallthru
          _
        // Predicated region
        $region29: #{run.5} parent=11 // pred_check
          %p409 = pneg %p221
        $region30: #{run.5} parent=11 // pred_check_branch
          %411 = sbr.rel (%p409) target = $region32
        $region31: #{run.5} parent=11 // pred_region
          _
        $region32: #{run.5} parent=11 // pred_fallthru
          _
        // Predicated region
        $region33: #{run.5} parent=11 // pred_check
          %p412 = pneg %p242
        $region34: #{run.5} parent=11 // pred_check_branch
          %414 = sbr.rel (%p412) target = $region36
        $region35: #{run.5} parent=11 // pred_region
          _
        $region36: #{run.5} parent=11 // pred_fallthru
          _
        // Predicated region
        $region37: #{run.5} parent=11 // pred_check
          %p415 = pneg %p263
        $region38: #{run.5} parent=11 // pred_check_branch
          %417 = sbr.rel (%p415) target = $region40
        $region39: #{run.5} parent=11 // pred_region
          _
        $region40: #{run.5} parent=11 // pred_fallthru
          _
        // Predicated region
        $region41: #{run.5} parent=11 // pred_check
          %p418 = pneg %p284
        $region42: #{run.5} parent=11 // pred_check_branch
          %420 = sbr.rel (%p418) target = $region44
        $region43: #{run.5} parent=11 // pred_region
          _
        $region44: #{run.5} parent=11 // pred_fallthru
          _
        // Predicated region
        $region45: #{run.5} parent=11 // pred_check
          %p421 = pneg %p305
        $region46: #{run.5} parent=11 // pred_check_branch
          %423 = sbr.rel (%p421) target = $region48
        $region47: #{run.5} parent=11 // pred_region
          _
        $region48: #{run.5} parent=11 // pred_fallthru
          _
        // Predicated region
        $region49: #{run.5} parent=11 // pred_check
          %p424 = pneg %p326
        $region50: #{run.5} parent=11 // pred_check_branch
          %426 = sbr.rel (%p424) target = $region52
        $region51: #{run.5} parent=11 // pred_region
          _
        $region52: #{run.5} parent=11 // pred_fallthru
          _
      $region12: #{run.5} parent=5 // pred_fallthru
        _
      %p427 = scmp.lt.s32.totalorder %s24, 4
      // Predicated region
      $region53: #{run.5} parent=5 // pred_check
        %p428 = pneg %p427
      $region54: #{run.5} parent=5 // pred_check_branch
        %430 = sbr.rel (%p428) target = $region56
      $region55: #{run.5} parent=5 // pred_region
        // Predicated region
        $region57: #{run.5} parent=55 // pred_check
          %p431 = pneg %p58
        $region58: #{run.5} parent=55 // pred_check_branch
          %433 = sbr.rel (%p431) target = $region60
        $region59: #{run.5} parent=55 // pred_region
          %s434 = smul.u32 8, %s32
          %p435 = scmp.lt.s32.totalorder %s31, 1
          %s436 = scalar_select %p435, %s31, 1
          %p437 = scmp.lt.s32.totalorder %s434, 15
          %s438 = scalar_select %p437, %s434, 15
          %s439 = smul.addr %s436, 16
          %s440 = sadd.s32 %s438, %s439
          %s441 = smul.addr %s440, 4
          %s442 = scalar_lea.vmem %s0, %s441
          %s443 = smul.u32 8, %s32
        $region60: #{run.5} parent=55 // pred_fallthru
          _
        // Predicated region
        $region61: #{run.5} parent=55 // pred_check
          %p444 = pneg %p84
        $region62: #{run.5} parent=55 // pred_check_branch
          %446 = sbr.rel (%p444) target = $region64
        $region63: #{run.5} parent=55 // pred_region
          %p447 = scmp.lt.s32.totalorder %s31, 1
          %s448 = scalar_select %p447, %s31, 1
          %s449 = smul.addr %s448, 16
          %s450 = smul.addr %s449, 4
          %s451 = scalar_lea.vmem %s1, %s450
        $region64: #{run.5} parent=55 // pred_fallthru
          _
        // Predicated region
        $region65: #{run.5} parent=55 // pred_check
          %p452 = pneg %p110
        $region66: #{run.5} parent=55 // pred_check_branch
          %454 = sbr.rel (%p452) target = $region68
        $region67: #{run.5} parent=55 // pred_region
          %p455 = scmp.lt.s32.totalorder %s31, 1
          %s456 = scalar_select %p455, %s31, 1
          %s457 = smul.addr %s456, 16
          %s458 = smul.addr %s457, 4
          %s459 = scalar_lea.vmem %s2, %s458
        $region68: #{run.5} parent=55 // pred_fallthru
          _
      $region56: #{run.5} parent=5 // pred_fallthru
        _
      %p460 = scmp.le.s32.totalorder 1, %s24
      %p461 = scmp.lt.s32.totalorder %s24, 5
      %p462 = pnand %p460, %p461
      %p463 = pneg %p462
      // Predicated region
      $region69: #{run.5} parent=5 // pred_check
        _
      $region70: #{run.5} parent=5 // pred_check_branch
        %465 = sbr.rel (%p462) target = $region72
      $region71: #{run.5} parent=5 // pred_region
        %s466 = ssub.s32 %s24, 1
        %s467 = smul.u32 8, %s34
        %p468 = scmp.lt.s32.totalorder %s33, 1
        %s469 = scalar_select %p468, %s33, 1
        %p470 = scmp.lt.s32.totalorder %s467, 15
        %s471 = scalar_select %p470, %s467, 15
        %s472 = smul.addr %s469, 16
        %s473 = sadd.s32 %s471, %s472
        %s474 = smul.addr %s473, 4
        %s475 = scalar_lea.vmem %s0, %s474
        %p476 = pneg %p64
        %p477 = pneg %p61
        %p478 = scmp.lt.s32.totalorder %s33, 1
        %s479 = scalar_select %p478, %s33, 1
        %s480 = smul.addr %s479, 16
        %s481 = smul.addr %s480, 4
        %s482 = scalar_lea.vmem %s1, %s481
        %p483 = pneg %p90
        %p484 = pneg %p87
        %p485 = scmp.lt.s32.totalorder %s33, 1
        %s486 = scalar_select %p485, %s33, 1
        %s487 = smul.addr %s486, 16
        %s488 = smul.addr %s487, 4
        %s489 = scalar_lea.vmem %s2, %s488
        %p490 = pneg %p116
        %p491 = pneg %p113
        %p492 = pneg %p137
        %p493 = pneg %p134
        %p494 = pneg %p158
        %p495 = pneg %p155
        %p496 = pneg %p179
        %p497 = pneg %p176
        %p498 = pneg %p200
        %p499 = pneg %p197
        %p500 = pneg %p221
        %p501 = pneg %p218
        %p502 = pneg %p242
        %p503 = pneg %p239
        %p504 = pneg %p263
        %p505 = pneg %p260
        %p506 = pneg %p284
        %p507 = pneg %p281
        %p508 = pneg %p305
        %p509 = pneg %p302
        %p510 = pneg %p326
        %p511 = pneg %p323
        %p512 = pneg %p354
        %p513 = pneg %p351
        %s514 = smul.u32 8, %s34
        %p515 = scmp.lt.s32.totalorder %s33, 1
        %s516 = scalar_select %p515, %s33, 1
        %p517 = scmp.lt.s32.totalorder %s514, 15
        %s518 = scalar_select %p517, %s514, 15
        %s519 = smul.addr %s516, 16
        %s520 = sadd.s32 %s518, %s519
        %s521 = smul.addr %s520, 4
        %s522 = scalar_lea.vmem %s13, %s521
        %p523 = pneg %p382
        %p524 = pneg %p379
        %s525 = sand.u32 %s369, 1
        %s526 = scalar_lea.sflag [#allocation4], %s525
        %s527 = sand.u32 %s369, 1
        %s528 = smul.addr %s527, 64
        %s529 = scalar_lea.vmem [#allocation3], %s528
        %s530 = smul.u32 8, %s34
        %p531 = scmp.lt.s32.totalorder %s33, 1
        %s532 = scalar_select %p531, %s33, 1
        %p533 = scmp.lt.s32.totalorder %s530, 15
        %s534 = scalar_select %p533, %s530, 15
        %s535 = smul.addr %s532, 16
        %s536 = sadd.s32 %s534, %s535
        %s537 = smul.addr %s536, 4
        %s538 = scalar_lea.vmem %s0, %s537
        %s539 = smul.u32 8, %s34
        %p540 = scmp.lt.s32.totalorder %s33, 1
        %s541 = scalar_select %p540, %s33, 1
        %s542 = smul.addr %s541, 16
        %s543 = smul.addr %s542, 4
        %s544 = scalar_lea.vmem %s1, %s543
        %p545 = scmp.lt.s32.totalorder %s33, 1
        %s546 = scalar_select %p545, %s33, 1
        %s547 = smul.addr %s546, 16
        %s548 = smul.addr %s547, 4
        %s549 = scalar_lea.vmem %s2, %s548
        %s550 = smul.u32 8, %s34
        %p551 = scmp.lt.s32.totalorder %s33, 1
        %s552 = scalar_select %p551, %s33, 1
        %p553 = scmp.lt.s32.totalorder %s550, 15
        %s554 = scalar_select %p553, %s550, 15
        %s555 = smul.addr %s552, 16
        %s556 = sadd.s32 %s554, %s555
        %s557 = smul.addr %s556, 4
        %s558 = scalar_lea.vmem %s13, %s557
        %s559 = smul.u32 8, %s34
        %s560 = smul.u32 8, %s34
        %v562 = vld [vmem:[%s538] sm:$0xf]
        %v563 = vld [vmem:[%s538 + $0x4] sm:$0xf]
        %v564 = vld [vmem:[%s538 + $0x8] sm:$0xf]
        %v565 = vld [vmem:[%s538 + $0xc] sm:$0xf]
        %v566 = vld [vmem:[%s538 + $0x10] sm:$0xf]
        %v567 = vld [vmem:[%s538 + $0x14] sm:$0xf]
        %v568 = vld [vmem:[%s538 + $0x18] sm:$0xf]
        %v569 = vld [vmem:[%s538 + $0x1c] sm:$0xf]
        %v570 = vld [vmem:[%s544] sm:$0xf]
        %v571 = vld [vmem:[%s544 + $0x4] sm:$0xf]
        %v572 = vld [vmem:[%s544 + $0x8] sm:$0xf]
        %v573 = vld [vmem:[%s544 + $0xc] sm:$0xf]
        %v574 = vld [vmem:[%s544 + $0x10] sm:$0xf]
        %v575 = vld [vmem:[%s544 + $0x14] sm:$0xf]
        %v576 = vld [vmem:[%s544 + $0x18] sm:$0xf]
        %v577 = vld [vmem:[%s544 + $0x1c] sm:$0xf]
        %v578 = vld [vmem:[%s544 + $0x20] sm:$0xf]
        %v579 = vld [vmem:[%s544 + $0x24] sm:$0xf]
        %v580 = vld [vmem:[%s544 + $0x28] sm:$0xf]
        %v581 = vld [vmem:[%s544 + $0x2c] sm:$0xf]
        %v582 = vld [vmem:[%s544 + $0x30] sm:$0xf]
        %v583 = vld [vmem:[%s544 + $0x34] sm:$0xf]
        %v584 = vld [vmem:[%s544 + $0x38] sm:$0xf]
        %v585 = vld [vmem:[%s544 + $0x3c] sm:$0xf]
        %v586 = vld [vmem:[%s549] sm:$0xf]
        %v587 = vld [vmem:[%s549 + $0x4] sm:$0xf]
        %v588 = vld [vmem:[%s549 + $0x8] sm:$0xf]
        %v589 = vld [vmem:[%s549 + $0xc] sm:$0xf]
        %v590 = vld [vmem:[%s549 + $0x10] sm:$0xf]
        %v591 = vld [vmem:[%s549 + $0x14] sm:$0xf]
        %v592 = vld [vmem:[%s549 + $0x18] sm:$0xf]
        %v593 = vld [vmem:[%s549 + $0x1c] sm:$0xf]
        %v594 = vld [vmem:[%s549 + $0x20] sm:$0xf]
        %v595 = vld [vmem:[%s549 + $0x24] sm:$0xf]
        %v596 = vld [vmem:[%s549 + $0x28] sm:$0xf]
        %v597 = vld [vmem:[%s549 + $0x2c] sm:$0xf]
        %v598 = vld [vmem:[%s549 + $0x30] sm:$0xf]
        %v599 = vld [vmem:[%s549 + $0x34] sm:$0xf]
        %v600 = vld [vmem:[%s549 + $0x38] sm:$0xf]
        %v601 = vld [vmem:[%s549 + $0x3c] sm:$0xf]
        %v602 = vld [vmem:[%s3] sm:$0xf]
        %v603 = vld [vmem:[%s3 + $0x4] sm:$0xf]
        %v604 = vld [vmem:[%s3 + $0x8] sm:$0xf]
        %v605 = vld [vmem:[%s3 + $0xc] sm:$0xf]
        %v606 = vld [vmem:[%s3 + $0x10] sm:$0xf]
        %v607 = vld [vmem:[%s3 + $0x14] sm:$0xf]
        %v608 = vld [vmem:[%s3 + $0x18] sm:$0xf]
        %v609 = vld [vmem:[%s3 + $0x1c] sm:$0xf]
        %v610 = vld [vmem:[%s3 + $0x20] sm:$0xf]
        %v611 = vld [vmem:[%s3 + $0x24] sm:$0xf]
        %v612 = vld [vmem:[%s3 + $0x28] sm:$0xf]
        %v613 = vld [vmem:[%s3 + $0x2c] sm:$0xf]
        %v614 = vld [vmem:[%s3 + $0x30] sm:$0xf]
        %v615 = vld [vmem:[%s3 + $0x34] sm:$0xf]
        %v616 = vld [vmem:[%s3 + $0x38] sm:$0xf]
        %v617 = vld [vmem:[%s3 + $0x3c] sm:$0xf]
        %v618 = vld [vmem:[%s7] sm:$0x1]
        %v620 = vlaneseq
        %v621 = vshrl.u32 %v620, 7
        %v622 = vsub.s32 0, %v621
        %v623 = vrot.slane %v618, %v622
        %v633 = vunpack.c.l.b16 %v562
        %v634 = vunpack.c.l.b16 %v563
        %v635 = vunpack.c.l.b16 %v564
        %v636 = vunpack.c.l.b16 %v565
        %v637 = vunpack.c.l.b16 %v566
        %v638 = vunpack.c.l.b16 %v567
        %v639 = vunpack.c.l.b16 %v568
        %v640 = vunpack.c.l.b16 %v569
        %v641 = vpack.c.b16 %v634, %v633
        %v642 = vpack.c.b16 %v636, %v635
        %v643 = vpack.c.b16 %v638, %v637
        %v644 = vpack.c.b16 %v640, %v639
        %v665 = vunpack.c.l.b16 %v602
        %v666 = vunpack.c.l.b16 %v603
        %v667 = vunpack.c.l.b16 %v604
        %v668 = vunpack.c.l.b16 %v605
        %v669 = vunpack.c.l.b16 %v606
        %v670 = vunpack.c.l.b16 %v607
        %v671 = vunpack.c.l.b16 %v608
        %v672 = vunpack.c.l.b16 %v609
        %v673 = vunpack.c.l.b16 %v610
        %v674 = vunpack.c.l.b16 %v611
        %v675 = vunpack.c.l.b16 %v612
        %v676 = vunpack.c.l.b16 %v613
        %v677 = vunpack.c.l.b16 %v614
        %v678 = vunpack.c.l.b16 %v615
        %v679 = vunpack.c.l.b16 %v616
        %v680 = vunpack.c.l.b16 %v617
        %v681 = vpack.c.b16 %v666, %v665
        %v682 = vpack.c.b16 %v668, %v667
        %v683 = vpack.c.b16 %v670, %v669
        %v684 = vpack.c.b16 %v672, %v671
        %v685 = vpack.c.b16 %v674, %v673
        %v686 = vpack.c.b16 %v676, %v675
        %v687 = vpack.c.b16 %v678, %v677
        %v688 = vpack.c.b16 %v680, %v679
        %697 = vmatprep.subr.bf16.mxu0 0
        %698 = vmatpush1.bf16.msra.mxu0 %v681
        %699 = vmatprep.subr.bf16.mxu0 0
        %700 = vmatpush1.bf16.msra.mxu0 %v682
        %701 = vmatprep.subr.bf16.mxu0 0
        %702 = vmatpush1.bf16.msra.mxu0 %v683
        %703 = vmatprep.subr.bf16.mxu0 0
        %704 = vmatpush1.bf16.msra.mxu0 %v684
        %705 = vmatprep.subr.bf16.mxu0 0
        %706 = vmatpush1.bf16.msra.mxu0 %v685
        %707 = vmatprep.subr.bf16.mxu0 0
        %708 = vmatpush1.bf16.msra.mxu0 %v686
        %709 = vmatprep.subr.bf16.mxu0 0
        %710 = vmatpush1.bf16.msra.mxu0 %v687
        %711 = vmatprep.subr.bf16.mxu0 0
        %712 = vmatpush1.bf16.msra.mxu0 %v688
        %713 = vmatprep.subr.bf16.mxu0 0
        %714 = vmatpush1.bf16.msra.mxu0 0
        %715 = vmatprep.subr.bf16.mxu0 0
        %716 = vmatpush1.bf16.msra.mxu0 0
        %717 = vmatprep.subr.bf16.mxu0 0
        %718 = vmatpush1.bf16.msra.mxu0 0
        %719 = vmatprep.subr.bf16.mxu0 0
        %720 = vmatpush1.bf16.msra.mxu0 0
        %721 = vmatprep.subr.bf16.mxu0 0
        %722 = vmatpush1.bf16.msra.mxu0 0
        %723 = vmatprep.subr.bf16.mxu0 0
        %724 = vmatpush1.bf16.msra.mxu0 0
        %725 = vmatprep.subr.bf16.mxu0 0
        %726 = vmatpush1.bf16.msra.mxu0 0
        %727 = vmatprep.subr.bf16.mxu0 0
        %728 = vmatpush1.bf16.msra.mxu0 0
        %729 = vmatprep.mubr.bf16.mxu0 0
        %730 = vmatmul.mubr.bf16.gmra.mrb[0].mxu0 %v641
        %v731 = vpop.f32.mrb[0].mxu0
        %v732 = vadd.f32 %v623, %v731
        %v733 = vpop.f32.mrb[0].mxu0
        %v734 = vpop.f32.mrb[0].mxu0
        %v735 = vadd.f32 %v623, %v734
        %v736 = vpop.f32.mrb[0].mxu0
        %737 = vmatprep.mubr.bf16.mxu0 0
        %738 = vmatmul.mubr.bf16.gmra.mrb[0].mxu0 %v642
        %v739 = vpop.f32.mrb[0].mxu0
        %v740 = vadd.f32 %v623, %v739
        %v741 = vpop.f32.mrb[0].mxu0
        %v742 = vpop.f32.mrb[0].mxu0
        %v743 = vadd.f32 %v623, %v742
        %v744 = vpop.f32.mrb[0].mxu0
        %745 = vmatprep.mubr.bf16.mxu0 0
        %746 = vmatmul.mubr.bf16.gmra.mrb[0].mxu0 %v643
        %v747 = vpop.f32.mrb[0].mxu0
        %v748 = vadd.f32 %v623, %v747
        %v749 = vpop.f32.mrb[0].mxu0
        %v750 = vpop.f32.mrb[0].mxu0
        %v751 = vadd.f32 %v623, %v750
        %v752 = vpop.f32.mrb[0].mxu0
        %753 = vmatprep.mubr.bf16.mxu0 0
        %754 = vmatmul.mubr.bf16.gmra.mrb[0].mxu0 %v644
        %v755 = vpop.f32.mrb[0].mxu0
        %v756 = vadd.f32 %v623, %v755
        %v757 = vpop.f32.mrb[0].mxu0
        %v758 = vpop.f32.mrb[0].mxu0
        %v759 = vadd.f32 %v623, %v758
        %v760 = vpop.f32.mrb[0].mxu0
        %761 = vdwg.mxu0
        %v762 = vld [vmem:[%s4] sm:$0xf]
        %v763 = vld [vmem:[%s4 + $0x4] sm:$0xf]
        %v764 = vld [vmem:[%s4 + $0x8] sm:$0xf]
        %v765 = vld [vmem:[%s4 + $0xc] sm:$0xf]
        %v766 = vld [vmem:[%s4 + $0x10] sm:$0xf]
        %v767 = vld [vmem:[%s4 + $0x14] sm:$0xf]
        %v768 = vld [vmem:[%s4 + $0x18] sm:$0xf]
        %v769 = vld [vmem:[%s4 + $0x1c] sm:$0xf]
        %v770 = vld [vmem:[%s4 + $0x20] sm:$0xf]
        %v771 = vld [vmem:[%s4 + $0x24] sm:$0xf]
        %v772 = vld [vmem:[%s4 + $0x28] sm:$0xf]
        %v773 = vld [vmem:[%s4 + $0x2c] sm:$0xf]
        %v774 = vld [vmem:[%s4 + $0x30] sm:$0xf]
        %v775 = vld [vmem:[%s4 + $0x34] sm:$0xf]
        %v776 = vld [vmem:[%s4 + $0x38] sm:$0xf]
        %v777 = vld [vmem:[%s4 + $0x3c] sm:$0xf]
        %v778 = vld [vmem:[%s8] sm:$0x1]
        %v780 = vlaneseq
        %v781 = vshrl.u32 %v780, 7
        %v782 = vsub.s32 0, %v781
        %v783 = vrot.slane %v778, %v782
        %v801 = vunpack.c.l.b16 %v570
        %v802 = vunpack.c.l.b16 %v571
        %v803 = vunpack.c.l.b16 %v572
        %v804 = vunpack.c.l.b16 %v573
        %v805 = vunpack.c.l.b16 %v574
        %v806 = vunpack.c.l.b16 %v575
        %v807 = vunpack.c.l.b16 %v576
        %v808 = vunpack.c.l.b16 %v577
        %v809 = vunpack.c.l.b16 %v578
        %v810 = vunpack.c.l.b16 %v579
        %v811 = vunpack.c.l.b16 %v580
        %v812 = vunpack.c.l.b16 %v581
        %v813 = vunpack.c.l.b16 %v582
        %v814 = vunpack.c.l.b16 %v583
        %v815 = vunpack.c.l.b16 %v584
        %v816 = vunpack.c.l.b16 %v585
        %v817 = vpack.c.b16 %v802, %v801
        %v818 = vpack.c.b16 %v804, %v803
        %v819 = vpack.c.b16 %v806, %v805
        %v820 = vpack.c.b16 %v808, %v807
        %v821 = vpack.c.b16 %v810, %v809
        %v822 = vpack.c.b16 %v812, %v811
        %v823 = vpack.c.b16 %v814, %v813
        %v824 = vpack.c.b16 %v816, %v815
        %v849 = vunpack.c.l.b16 %v762
        %v850 = vunpack.c.l.b16 %v763
        %v851 = vunpack.c.l.b16 %v764
        %v852 = vunpack.c.l.b16 %v765
        %v853 = vunpack.c.l.b16 %v766
        %v854 = vunpack.c.l.b16 %v767
        %v855 = vunpack.c.l.b16 %v768
        %v856 = vunpack.c.l.b16 %v769
        %v857 = vunpack.c.l.b16 %v770
        %v858 = vunpack.c.l.b16 %v771
        %v859 = vunpack.c.l.b16 %v772
        %v860 = vunpack.c.l.b16 %v773
        %v861 = vunpack.c.l.b16 %v774
        %v862 = vunpack.c.l.b16 %v775
        %v863 = vunpack.c.l.b16 %v776
        %v864 = vunpack.c.l.b16 %v777
        %v865 = vpack.c.b16 %v850, %v849
        %v866 = vpack.c.b16 %v852, %v851
        %v867 = vpack.c.b16 %v854, %v853
        %v868 = vpack.c.b16 %v856, %v855
        %v869 = vpack.c.b16 %v858, %v857
        %v870 = vpack.c.b16 %v860, %v859
        %v871 = vpack.c.b16 %v862, %v861
        %v872 = vpack.c.b16 %v864, %v863
        %881 = vmatprep.subr.bf16.mxu0 0
        %882 = vmatpush1.bf16.msra.mxu0 %v865
        %883 = vmatprep.subr.bf16.mxu0 0
        %884 = vmatpush1.bf16.msra.mxu0 %v866
        %885 = vmatprep.subr.bf16.mxu0 0
        %886 = vmatpush1.bf16.msra.mxu0 %v867
        %887 = vmatprep.subr.bf16.mxu0 0
        %888 = vmatpush1.bf16.msra.mxu0 %v868
        %889 = vmatprep.subr.bf16.mxu0 0
        %890 = vmatpush1.bf16.msra.mxu0 %v869
        %891 = vmatprep.subr.bf16.mxu0 0
        %892 = vmatpush1.bf16.msra.mxu0 %v870
        %893 = vmatprep.subr.bf16.mxu0 0
        %894 = vmatpush1.bf16.msra.mxu0 %v871
        %895 = vmatprep.subr.bf16.mxu0 0
        %896 = vmatpush1.bf16.msra.mxu0 %v872
        %897 = vmatprep.subr.bf16.mxu0 0
        %898 = vmatpush1.bf16.msra.mxu0 0
        %899 = vmatprep.subr.bf16.mxu0 0
        %900 = vmatpush1.bf16.msra.mxu0 0
        %901 = vmatprep.subr.bf16.mxu0 0
        %902 = vmatpush1.bf16.msra.mxu0 0
        %903 = vmatprep.subr.bf16.mxu0 0
        %904 = vmatpush1.bf16.msra.mxu0 0
        %905 = vmatprep.subr.bf16.mxu0 0
        %906 = vmatpush1.bf16.msra.mxu0 0
        %907 = vmatprep.subr.bf16.mxu0 0
        %908 = vmatpush1.bf16.msra.mxu0 0
        %909 = vmatprep.subr.bf16.mxu0 0
        %910 = vmatpush1.bf16.msra.mxu0 0
        %911 = vmatprep.subr.bf16.mxu0 0
        %912 = vmatpush1.bf16.msra.mxu0 0
        %913 = vmatprep.mubr.bf16.mxu0 0
        %914 = vmatmul.mubr.bf16.gmra.mrb[0].mxu0 %v817
        %v915 = vpop.f32.mrb[0].mxu0
        %v916 = vadd.f32 %v783, %v915
        %v917 = vpop.f32.mrb[0].mxu0
        %v918 = vpop.f32.mrb[0].mxu0
        %v919 = vadd.f32 %v783, %v918
        %v920 = vpop.f32.mrb[0].mxu0
        %921 = vmatprep.mubr.bf16.mxu0 0
        %922 = vmatmul.mubr.bf16.gmra.mrb[0].mxu0 %v818
        %v923 = vpop.f32.mrb[0].mxu0
        %v924 = vadd.f32 %v783, %v923
        %v925 = vpop.f32.mrb[0].mxu0
        %v926 = vpop.f32.mrb[0].mxu0
        %v927 = vadd.f32 %v783, %v926
        %v928 = vpop.f32.mrb[0].mxu0
        %929 = vmatprep.mubr.bf16.mxu0 0
        %930 = vmatmul.mubr.bf16.gmra.mrb[0].mxu0 %v819
        %v931 = vpop.f32.mrb[0].mxu0
        %v932 = vadd.f32 %v783, %v931
        %v933 = vpop.f32.mrb[0].mxu0
        %v934 = vpop.f32.mrb[0].mxu0
        %v935 = vadd.f32 %v783, %v934
        %v936 = vpop.f32.mrb[0].mxu0
        %937 = vmatprep.mubr.bf16.mxu0 0
        %938 = vmatmul.mubr.bf16.gmra.mrb[0].mxu0 %v820
        %v939 = vpop.f32.mrb[0].mxu0
        %v940 = vadd.f32 %v783, %v939
        %v941 = vpop.f32.mrb[0].mxu0
        %v942 = vpop.f32.mrb[0].mxu0
        %v943 = vadd.f32 %v783, %v942
        %v944 = vpop.f32.mrb[0].mxu0
        %945 = vmatprep.mubr.bf16.mxu0 0
        %946 = vmatmul.mubr.bf16.gmra.mrb[0].mxu0 %v821
        %v947 = vpop.f32.mrb[0].mxu0
        %v948 = vadd.f32 %v783, %v947
        %v949 = vpop.f32.mrb[0].mxu0
        %v950 = vpop.f32.mrb[0].mxu0
        %v951 = vadd.f32 %v783, %v950
        %v952 = vpop.f32.mrb[0].mxu0
        %953 = vmatprep.mubr.bf16.mxu0 0
        %954 = vmatmul.mubr.bf16.gmra.mrb[0].mxu0 %v822
        %v955 = vpop.f32.mrb[0].mxu0
        %v956 = vadd.f32 %v783, %v955
        %v957 = vpop.f32.mrb[0].mxu0
        %v958 = vpop.f32.mrb[0].mxu0
        %v959 = vadd.f32 %v783, %v958
        %v960 = vpop.f32.mrb[0].mxu0
        %961 = vmatprep.mubr.bf16.mxu0 0
        %962 = vmatmul.mubr.bf16.gmra.mrb[0].mxu0 %v823
        %v963 = vpop.f32.mrb[0].mxu0
        %v964 = vadd.f32 %v783, %v963
        %v965 = vpop.f32.mrb[0].mxu0
        %v966 = vpop.f32.mrb[0].mxu0
        %v967 = vadd.f32 %v783, %v966
        %v968 = vpop.f32.mrb[0].mxu0
        %969 = vmatprep.mubr.bf16.mxu0 0
        %970 = vmatmul.mubr.bf16.gmra.mrb[0].mxu0 %v824
        %v971 = vpop.f32.mrb[0].mxu0
        %v972 = vadd.f32 %v783, %v971
        %v973 = vpop.f32.mrb[0].mxu0
        %v974 = vpop.f32.mrb[0].mxu0
        %v975 = vadd.f32 %v783, %v974
        %v976 = vpop.f32.mrb[0].mxu0
        %977 = vdwg.mxu0
        %v978 = vld [vmem:[%s5] sm:$0xf]
        %v979 = vld [vmem:[%s5 + $0x4] sm:$0xf]
        %v980 = vld [vmem:[%s5 + $0x8] sm:$0xf]
        %v981 = vld [vmem:[%s5 + $0xc] sm:$0xf]
        %v982 = vld [vmem:[%s5 + $0x10] sm:$0xf]
        %v983 = vld [vmem:[%s5 + $0x14] sm:$0xf]
        %v984 = vld [vmem:[%s5 + $0x18] sm:$0xf]
        %v985 = vld [vmem:[%s5 + $0x1c] sm:$0xf]
        %v986 = vld [vmem:[%s5 + $0x20] sm:$0xf]
        %v987 = vld [vmem:[%s5 + $0x24] sm:$0xf]
        %v988 = vld [vmem:[%s5 + $0x28] sm:$0xf]
        %v989 = vld [vmem:[%s5 + $0x2c] sm:$0xf]
        %v990 = vld [vmem:[%s5 + $0x30] sm:$0xf]
        %v991 = vld [vmem:[%s5 + $0x34] sm:$0xf]
        %v992 = vld [vmem:[%s5 + $0x38] sm:$0xf]
        %v993 = vld [vmem:[%s5 + $0x3c] sm:$0xf]
        %v994 = vld [vmem:[%s9] sm:$0x1]
        %v996 = vlaneseq
        %v997 = vshrl.u32 %v996, 7
        %v998 = vsub.s32 0, %v997
        %v999 = vrot.slane %v994, %v998
        %v1017 = vunpack.c.l.b16 %v586
        %v1018 = vunpack.c.l.b16 %v587
        %v1019 = vunpack.c.l.b16 %v588
        %v1020 = vunpack.c.l.b16 %v589
        %v1021 = vunpack.c.l.b16 %v590
        %v1022 = vunpack.c.l.b16 %v591
        %v1023 = vunpack.c.l.b16 %v592
        %v1024 = vunpack.c.l.b16 %v593
        %v1025 = vunpack.c.l.b16 %v594
        %v1026 = vunpack.c.l.b16 %v595
        %v1027 = vunpack.c.l.b16 %v596
        %v1028 = vunpack.c.l.b16 %v597
        %v1029 = vunpack.c.l.b16 %v598
        %v1030 = vunpack.c.l.b16 %v599
        %v1031 = vunpack.c.l.b16 %v600
        %v1032 = vunpack.c.l.b16 %v601
        %v1033 = vpack.c.b16 %v1018, %v1017
        %v1034 = vpack.c.b16 %v1020, %v1019
        %v1035 = vpack.c.b16 %v1022, %v1021
        %v1036 = vpack.c.b16 %v1024, %v1023
        %v1037 = vpack.c.b16 %v1026, %v1025
        %v1038 = vpack.c.b16 %v1028, %v1027
        %v1039 = vpack.c.b16 %v1030, %v1029
        %v1040 = vpack.c.b16 %v1032, %v1031
        %v1065 = vunpack.c.l.b16 %v978
        %v1066 = vunpack.c.l.b16 %v979
        %v1067 = vunpack.c.l.b16 %v980
        %v1068 = vunpack.c.l.b16 %v981
        %v1069 = vunpack.c.l.b16 %v982
        %v1070 = vunpack.c.l.b16 %v983
        %v1071 = vunpack.c.l.b16 %v984
        %v1072 = vunpack.c.l.b16 %v985
        %v1073 = vunpack.c.l.b16 %v986
        %v1074 = vunpack.c.l.b16 %v987
        %v1075 = vunpack.c.l.b16 %v988
        %v1076 = vunpack.c.l.b16 %v989
        %v1077 = vunpack.c.l.b16 %v990
        %v1078 = vunpack.c.l.b16 %v991
        %v1079 = vunpack.c.l.b16 %v992
        %v1080 = vunpack.c.l.b16 %v993
        %v1081 = vpack.c.b16 %v1066, %v1065
        %v1082 = vpack.c.b16 %v1068, %v1067
        %v1083 = vpack.c.b16 %v1070, %v1069
        %v1084 = vpack.c.b16 %v1072, %v1071
        %v1085 = vpack.c.b16 %v1074, %v1073
        %v1086 = vpack.c.b16 %v1076, %v1075
        %v1087 = vpack.c.b16 %v1078, %v1077
        %v1088 = vpack.c.b16 %v1080, %v1079
        %1097 = vmatprep.subr.bf16.mxu0 0
        %1098 = vmatpush1.bf16.msra.mxu0 %v1081
        %1099 = vmatprep.subr.bf16.mxu0 0
        %1100 = vmatpush1.bf16.msra.mxu0 %v1082
        %1101 = vmatprep.subr.bf16.mxu0 0
        %1102 = vmatpush1.bf16.msra.mxu0 %v1083
        %1103 = vmatprep.subr.bf16.mxu0 0
        %1104 = vmatpush1.bf16.msra.mxu0 %v1084
        %1105 = vmatprep.subr.bf16.mxu0 0
        %1106 = vmatpush1.bf16.msra.mxu0 %v1085
        %1107 = vmatprep.subr.bf16.mxu0 0
        %1108 = vmatpush1.bf16.msra.mxu0 %v1086
        %1109 = vmatprep.subr.bf16.mxu0 0
        %1110 = vmatpush1.bf16.msra.mxu0 %v1087
        %1111 = vmatprep.subr.bf16.mxu0 0
        %1112 = vmatpush1.bf16.msra.mxu0 %v1088
        %1113 = vmatprep.subr.bf16.mxu0 0
        %1114 = vmatpush1.bf16.msra.mxu0 0
        %1115 = vmatprep.subr.bf16.mxu0 0
        %1116 = vmatpush1.bf16.msra.mxu0 0
        %1117 = vmatprep.subr.bf16.mxu0 0
        %1118 = vmatpush1.bf16.msra.mxu0 0
        %1119 = vmatprep.subr.bf16.mxu0 0
        %1120 = vmatpush1.bf16.msra.mxu0 0
        %1121 = vmatprep.subr.bf16.mxu0 0
        %1122 = vmatpush1.bf16.msra.mxu0 0
        %1123 = vmatprep.subr.bf16.mxu0 0
        %1124 = vmatpush1.bf16.msra.mxu0 0
        %1125 = vmatprep.subr.bf16.mxu0 0
        %1126 = vmatpush1.bf16.msra.mxu0 0
        %1127 = vmatprep.subr.bf16.mxu0 0
        %1128 = vmatpush1.bf16.msra.mxu0 0
        %1129 = vmatprep.mubr.bf16.mxu0 0
        %1130 = vmatmul.mubr.bf16.gmra.mrb[0].mxu0 %v1033
        %v1131 = vpop.f32.mrb[0].mxu0
        %v1132 = vadd.f32 %v999, %v1131
        %v1133 = vpop.f32.mrb[0].mxu0
        %v1134 = vpop.f32.mrb[0].mxu0
        %v1135 = vadd.f32 %v999, %v1134
        %v1136 = vpop.f32.mrb[0].mxu0
        %1137 = vmatprep.mubr.bf16.mxu0 0
        %1138 = vmatmul.mubr.bf16.gmra.mrb[0].mxu0 %v1034
        %v1139 = vpop.f32.mrb[0].mxu0
        %v1140 = vadd.f32 %v999, %v1139
        %v1141 = vpop.f32.mrb[0].mxu0
        %v1142 = vpop.f32.mrb[0].mxu0
        %v1143 = vadd.f32 %v999, %v1142
        %v1144 = vpop.f32.mrb[0].mxu0
        %1145 = vmatprep.mubr.bf16.mxu0 0
        %1146 = vmatmul.mubr.bf16.gmra.mrb[0].mxu0 %v1035
        %v1147 = vpop.f32.mrb[0].mxu0
        %v1148 = vadd.f32 %v999, %v1147
        %v1149 = vpop.f32.mrb[0].mxu0
        %v1150 = vpop.f32.mrb[0].mxu0
        %v1151 = vadd.f32 %v999, %v1150
        %v1152 = vpop.f32.mrb[0].mxu0
        %1153 = vmatprep.mubr.bf16.mxu0 0
        %1154 = vmatmul.mubr.bf16.gmra.mrb[0].mxu0 %v1036
        %v1155 = vpop.f32.mrb[0].mxu0
        %v1156 = vadd.f32 %v999, %v1155
        %v1157 = vpop.f32.mrb[0].mxu0
        %v1158 = vpop.f32.mrb[0].mxu0
        %v1159 = vadd.f32 %v999, %v1158
        %v1160 = vpop.f32.mrb[0].mxu0
        %1161 = vmatprep.mubr.bf16.mxu0 0
        %1162 = vmatmul.mubr.bf16.gmra.mrb[0].mxu0 %v1037
        %v1163 = vpop.f32.mrb[0].mxu0
        %v1164 = vadd.f32 %v999, %v1163
        %v1165 = vpop.f32.mrb[0].mxu0
        %v1166 = vpop.f32.mrb[0].mxu0
        %v1167 = vadd.f32 %v999, %v1166
        %v1168 = vpop.f32.mrb[0].mxu0
        %1169 = vmatprep.mubr.bf16.mxu0 0
        %1170 = vmatmul.mubr.bf16.gmra.mrb[0].mxu0 %v1038
        %v1171 = vpop.f32.mrb[0].mxu0
        %v1172 = vadd.f32 %v999, %v1171
        %v1173 = vpop.f32.mrb[0].mxu0
        %v1174 = vpop.f32.mrb[0].mxu0
        %v1175 = vadd.f32 %v999, %v1174
        %v1176 = vpop.f32.mrb[0].mxu0
        %1177 = vmatprep.mubr.bf16.mxu0 0
        %1178 = vmatmul.mubr.bf16.gmra.mrb[0].mxu0 %v1039
        %v1179 = vpop.f32.mrb[0].mxu0
        %v1180 = vadd.f32 %v999, %v1179
        %v1181 = vpop.f32.mrb[0].mxu0
        %v1182 = vpop.f32.mrb[0].mxu0
        %v1183 = vadd.f32 %v999, %v1182
        %v1184 = vpop.f32.mrb[0].mxu0
        %1185 = vmatprep.mubr.bf16.mxu0 0
        %1186 = vmatmul.mubr.bf16.gmra.mrb[0].mxu0 %v1040
        %v1187 = vpop.f32.mrb[0].mxu0
        %v1188 = vadd.f32 %v999, %v1187
        %v1189 = vpop.f32.mrb[0].mxu0
        %v1190 = vpop.f32.mrb[0].mxu0
        %v1191 = vadd.f32 %v999, %v1190
        %v1192 = vpop.f32.mrb[0].mxu0
        %1193 = vdwg.mxu0
        %v1194 = vpack.c.bf16 %v735, %v732
        %v1195 = vpack.c.bf16 %v743, %v740
        %v1196 = vpack.c.bf16 %v751, %v748
        %v1197 = vpack.c.bf16 %v759, %v756
        %v1198 = vpack.c.bf16 %v919, %v916
        %v1199 = vpack.c.bf16 %v927, %v924
        %v1200 = vpack.c.bf16 %v935, %v932
        %v1201 = vpack.c.bf16 %v943, %v940
        %v1202 = vpack.c.bf16 %v951, %v948
        %v1203 = vpack.c.bf16 %v959, %v956
        %v1204 = vpack.c.bf16 %v967, %v964
        %v1205 = vpack.c.bf16 %v975, %v972
        %vm1206 = vcmask 261120
        %v1208 = vsel %vm1206, %v1194, 0
        %v1211 = vsel %vm1206, %v1195, 0
        %v1214 = vsel %vm1206, %v1196, 0
        %v1217 = vsel %vm1206, %v1197, 0
        %v1220 = vsel %vm1206, %v1198, 0
        %v1223 = vsel %vm1206, %v1199, 0
        %v1226 = vsel %vm1206, %v1200, 0
        %v1229 = vsel %vm1206, %v1201, 0
        %v1232 = vsel %vm1206, %v1202, 0
        %v1235 = vsel %vm1206, %v1203, 0
        %v1238 = vsel %vm1206, %v1204, 0
        %v1241 = vsel %vm1206, %v1205, 0
        %1243 = vmatprep.subr.bf16.mxu0 0
        %1244 = vmatpush1.bf16.xpose.msra.mxu0 %v1220
        %1245 = vmatprep.subr.bf16.mxu0 0
        %1246 = vmatpush1.bf16.xpose.msra.mxu0 %v1223
        %1247 = vmatprep.subr.bf16.mxu0 0
        %1248 = vmatpush1.bf16.xpose.msra.mxu0 %v1226
        %1249 = vmatprep.subr.bf16.mxu0 0
        %1250 = vmatpush1.bf16.xpose.msra.mxu0 %v1229
        %1251 = vmatprep.subr.bf16.mxu0 0
        %1252 = vmatpush1.bf16.xpose.msra.mxu0 %v1232
        %1253 = vmatprep.subr.bf16.mxu0 0
        %1254 = vmatpush1.bf16.xpose.msra.mxu0 %v1235
        %1255 = vmatprep.subr.bf16.mxu0 0
        %1256 = vmatpush1.bf16.xpose.msra.mxu0 %v1238
        %1257 = vmatprep.subr.bf16.mxu0 0
        %1258 = vmatpush1.bf16.xpose.msra.mxu0 %v1241
        %1259 = vmatprep.subr.bf16.mxu0 0
        %1260 = vmatpush1.bf16.xpose.msra.mxu0 0
        %1261 = vmatprep.subr.bf16.mxu0 0
        %1262 = vmatpush1.bf16.xpose.msra.mxu0 0
        %1263 = vmatprep.subr.bf16.mxu0 0
        %1264 = vmatpush1.bf16.xpose.msra.mxu0 0
        %1265 = vmatprep.subr.bf16.mxu0 0
        %1266 = vmatpush1.bf16.xpose.msra.mxu0 0
        %1267 = vmatprep.subr.bf16.mxu0 0
        %1268 = vmatpush1.bf16.xpose.msra.mxu0 0
        %1269 = vmatprep.subr.bf16.mxu0 0
        %1270 = vmatpush1.bf16.xpose.msra.mxu0 0
        %1271 = vmatprep.subr.bf16.mxu0 0
        %1272 = vmatpush1.bf16.xpose.msra.mxu0 0
        %1273 = vmatprep.subr.bf16.mxu0 0
        %1274 = vmatpush1.bf16.xpose.msra.mxu0 0
        %1275 = vmatprep.mubr.bf16.mxu0 0
        %1276 = vmatmul.mubr.bf16.gmra.mrb[0].mxu0 %v1208
        %v1277 = vpop.f32.mrb[0].mxu0
        %v1278 = vadd.f32 0.0, %v1277
        %v1279 = vpop.f32.mrb[0].mxu0
        %v1280 = vpop.f32.mrb[0].mxu0
        %v1281 = vadd.f32 0.0, %v1280
        %v1282 = vpop.f32.mrb[0].mxu0
        %1283 = vmatprep.mubr.bf16.mxu0 0
        %1284 = vmatmul.mubr.bf16.gmra.mrb[0].mxu0 %v1211
        %v1285 = vpop.f32.mrb[0].mxu0
        %v1286 = vadd.f32 0.0, %v1285
        %v1287 = vpop.f32.mrb[0].mxu0
        %v1288 = vpop.f32.mrb[0].mxu0
        %v1289 = vadd.f32 0.0, %v1288
        %v1290 = vpop.f32.mrb[0].mxu0
        %1291 = vmatprep.mubr.bf16.mxu0 0
        %1292 = vmatmul.mubr.bf16.gmra.mrb[0].mxu0 %v1214
        %v1293 = vpop.f32.mrb[0].mxu0
        %v1294 = vadd.f32 0.0, %v1293
        %v1295 = vpop.f32.mrb[0].mxu0
        %v1296 = vpop.f32.mrb[0].mxu0
        %v1297 = vadd.f32 0.0, %v1296
        %v1298 = vpop.f32.mrb[0].mxu0
        %1299 = vmatprep.mubr.bf16.mxu0 0
        %1300 = vmatmul.mubr.bf16.gmra.mrb[0].mxu0 %v1217
        %v1301 = vpop.f32.mrb[0].mxu0
        %v1302 = vadd.f32 0.0, %v1301
        %v1303 = vpop.f32.mrb[0].mxu0
        %v1304 = vpop.f32.mrb[0].mxu0
        %v1305 = vadd.f32 0.0, %v1304
        %v1306 = vpop.f32.mrb[0].mxu0
        %1307 = vdwg.mxu0
        %1308 = vmax.xlane.f32.xlu0 %v1278
        %v1309 = vpop.xlane.xlu0 %1308
        %1310 = vmax.xlane.f32.xlu0 %v1281
        %v1311 = vpop.xlane.xlu0 %1310
        %1312 = vmax.xlane.f32.xlu0 %v1286
        %v1313 = vpop.xlane.xlu0 %1312
        %1314 = vmax.xlane.f32.xlu0 %v1289
        %v1315 = vpop.xlane.xlu0 %1314
        %1316 = vmax.xlane.f32.xlu0 %v1294
        %v1317 = vpop.xlane.xlu0 %1316
        %1318 = vmax.xlane.f32.xlu0 %v1297
        %v1319 = vpop.xlane.xlu0 %1318
        %1320 = vmax.xlane.f32.xlu0 %v1302
        %v1321 = vpop.xlane.xlu0 %1320
        %1322 = vmax.xlane.f32.xlu0 %v1305
        %v1323 = vpop.xlane.xlu0 %1322
        %v1324 = vsub.f32 %v1278, %v1309
        %v1325 = vsub.f32 %v1281, %v1311
        %v1326 = vsub.f32 %v1286, %v1313
        %v1327 = vsub.f32 %v1289, %v1315
        %v1328 = vsub.f32 %v1294, %v1317
        %v1329 = vsub.f32 %v1297, %v1319
        %v1330 = vsub.f32 %v1302, %v1321
        %v1331 = vsub.f32 %v1305, %v1323
        %v1332 = vmul.f32 %v1324, 1.442695
        %v1333 = vpow.pop %v1332
        %v1334 = vmul.f32 %v1325, 1.442695
        %v1335 = vpow.pop %v1334
        %v1336 = vmul.f32 %v1326, 1.442695
        %v1337 = vpow.pop %v1336
        %v1338 = vmul.f32 %v1327, 1.442695
        %v1339 = vpow.pop %v1338
        %v1340 = vmul.f32 %v1328, 1.442695
        %v1341 = vpow.pop %v1340
        %v1342 = vmul.f32 %v1329, 1.442695
        %v1343 = vpow.pop %v1342
        %v1344 = vmul.f32 %v1330, 1.442695
        %v1345 = vpow.pop %v1344
        %v1346 = vmul.f32 %v1331, 1.442695
        %v1347 = vpow.pop %v1346
        %1348 = vadd.xlane.f32.xlu0 %v1333
        %v1349 = vpop.xlane.xlu0 %1348
        %1350 = vadd.xlane.f32.xlu0 %v1335
        %v1351 = vpop.xlane.xlu0 %1350
        %1352 = vadd.xlane.f32.xlu0 %v1337
        %v1353 = vpop.xlane.xlu0 %1352
        %1354 = vadd.xlane.f32.xlu0 %v1339
        %v1355 = vpop.xlane.xlu0 %1354
        %1356 = vadd.xlane.f32.xlu0 %v1341
        %v1357 = vpop.xlane.xlu0 %1356
        %1358 = vadd.xlane.f32.xlu0 %v1343
        %v1359 = vpop.xlane.xlu0 %1358
        %1360 = vadd.xlane.f32.xlu0 %v1345
        %v1361 = vpop.xlane.xlu0 %1360
        %1362 = vadd.xlane.f32.xlu0 %v1347
        %v1363 = vpop.xlane.xlu0 %1362
        %v1364 = vrcp.pop %v1349
        %v1365 = vmul.f32 %v1333, %v1364
        %v1366 = vrcp.pop %v1351
        %v1367 = vmul.f32 %v1335, %v1366
        %v1368 = vrcp.pop %v1353
        %v1369 = vmul.f32 %v1337, %v1368
        %v1370 = vrcp.pop %v1355
        %v1371 = vmul.f32 %v1339, %v1370
        %v1372 = vrcp.pop %v1357
        %v1373 = vmul.f32 %v1341, %v1372
        %v1374 = vrcp.pop %v1359
        %v1375 = vmul.f32 %v1343, %v1374
        %v1376 = vrcp.pop %v1361
        %v1377 = vmul.f32 %v1345, %v1376
        %v1378 = vrcp.pop %v1363
        %v1379 = vmul.f32 %v1347, %v1378
        %v1380 = vadd.f32 %v1365, 0.0
        %v1381 = vadd.f32 %v1367, 0.0
        %v1382 = vadd.f32 %v1369, 0.0
        %v1383 = vadd.f32 %v1371, 0.0
        %v1384 = vadd.f32 %v1373, 0.0
        %v1385 = vadd.f32 %v1375, 0.0
        %v1386 = vadd.f32 %v1377, 0.0
        %v1387 = vadd.f32 %v1379, 0.0
        %v1388 = vpack.c.bf16 %v1367, %v1365
        %v1389 = vpack.c.bf16 %v1371, %v1369
        %v1390 = vpack.c.bf16 %v1375, %v1373
        %v1391 = vpack.c.bf16 %v1379, %v1377
        %v1392 = vpack.c.bf16 %v1135, %v1132
        %v1393 = vpack.c.bf16 %v1143, %v1140
        %v1394 = vpack.c.bf16 %v1151, %v1148
        %v1395 = vpack.c.bf16 %v1159, %v1156
        %v1396 = vpack.c.bf16 %v1167, %v1164
        %v1397 = vpack.c.bf16 %v1175, %v1172
        %v1398 = vpack.c.bf16 %v1183, %v1180
        %v1399 = vpack.c.bf16 %v1191, %v1188
        %1400 = vmatprep.subr.bf16.mxu0 0
        %1401 = vmatpush1.bf16.msra.mxu0 %v1392
        %1402 = vmatprep.subr.bf16.mxu0 0
        %1403 = vmatpush1.bf16.msra.mxu0 %v1393
        %1404 = vmatprep.subr.bf16.mxu0 0
        %1405 = vmatpush1.bf16.msra.mxu0 %v1394
        %1406 = vmatprep.subr.bf16.mxu0 0
        %1407 = vmatpush1.bf16.msra.mxu0 %v1395
        %1408 = vmatprep.subr.bf16.mxu0 0
        %1409 = vmatpush1.bf16.msra.mxu0 %v1396
        %1410 = vmatprep.subr.bf16.mxu0 0
        %1411 = vmatpush1.bf16.msra.mxu0 %v1397
        %1412 = vmatprep.subr.bf16.mxu0 0
        %1413 = vmatpush1.bf16.msra.mxu0 %v1398
        %1414 = vmatprep.subr.bf16.mxu0 0
        %1415 = vmatpush1.bf16.msra.mxu0 %v1399
        %1416 = vmatprep.subr.bf16.mxu0 0
        %1417 = vmatpush1.bf16.msra.mxu0 0
        %1418 = vmatprep.subr.bf16.mxu0 0
        %1419 = vmatpush1.bf16.msra.mxu0 0
        %1420 = vmatprep.subr.bf16.mxu0 0
        %1421 = vmatpush1.bf16.msra.mxu0 0
        %1422 = vmatprep.subr.bf16.mxu0 0
        %1423 = vmatpush1.bf16.msra.mxu0 0
        %1424 = vmatprep.subr.bf16.mxu0 0
        %1425 = vmatpush1.bf16.msra.mxu0 0
        %1426 = vmatprep.subr.bf16.mxu0 0
        %1427 = vmatpush1.bf16.msra.mxu0 0
        %1428 = vmatprep.subr.bf16.mxu0 0
        %1429 = vmatpush1.bf16.msra.mxu0 0
        %1430 = vmatprep.subr.bf16.mxu0 0
        %1431 = vmatpush1.bf16.msra.mxu0 0
        %1432 = vmatprep.mubr.bf16.mxu0 0
        %1433 = vmatmul.mubr.bf16.gmra.mrb[0].mxu0 %v1388
        %v1434 = vpop.f32.mrb[0].mxu0
        %v1435 = vadd.f32 0.0, %v1434
        %v1436 = vpop.f32.mrb[0].mxu0
        %v1437 = vpop.f32.mrb[0].mxu0
        %v1438 = vadd.f32 0.0, %v1437
        %v1439 = vpop.f32.mrb[0].mxu0
        %1440 = vmatprep.mubr.bf16.mxu0 0
        %1441 = vmatmul.mubr.bf16.gmra.mrb[0].mxu0 %v1389
        %v1442 = vpop.f32.mrb[0].mxu0
        %v1443 = vadd.f32 0.0, %v1442
        %v1444 = vpop.f32.mrb[0].mxu0
        %v1445 = vpop.f32.mrb[0].mxu0
        %v1446 = vadd.f32 0.0, %v1445
        %v1447 = vpop.f32.mrb[0].mxu0
        %1448 = vmatprep.mubr.bf16.mxu0 0
        %1449 = vmatmul.mubr.bf16.gmra.mrb[0].mxu0 %v1390
        %v1450 = vpop.f32.mrb[0].mxu0
        %v1451 = vadd.f32 0.0, %v1450
        %v1452 = vpop.f32.mrb[0].mxu0
        %v1453 = vpop.f32.mrb[0].mxu0
        %v1454 = vadd.f32 0.0, %v1453
        %v1455 = vpop.f32.mrb[0].mxu0
        %1456 = vmatprep.mubr.bf16.mxu0 0
        %1457 = vmatmul.mubr.bf16.gmra.mrb[0].mxu0 %v1391
        %v1458 = vpop.f32.mrb[0].mxu0
        %v1459 = vadd.f32 0.0, %v1458
        %v1460 = vpop.f32.mrb[0].mxu0
        %v1461 = vpop.f32.mrb[0].mxu0
        %v1462 = vadd.f32 0.0, %v1461
        %v1463 = vpop.f32.mrb[0].mxu0
        %1464 = vdwg.mxu0
        %1465 = vst.msk [vmem:[#allocation2] sm:$0xff] %vm1206, %v1435
        %1466 = vst.msk [vmem:[#allocation2 + $0x8] sm:$0xff] %vm1206, %v1438
        %1467 = vst.msk [vmem:[#allocation2 + $0x10] sm:$0xff] %vm1206, %v1443
        %1468 = vst.msk [vmem:[#allocation2 + $0x18] sm:$0xff] %vm1206, %v1446
        %1469 = vst.msk [vmem:[#allocation2 + $0x20] sm:$0xff] %vm1206, %v1451
        %1470 = vst.msk [vmem:[#allocation2 + $0x28] sm:$0xff] %vm1206, %v1454
        %1471 = vst.msk [vmem:[#allocation2 + $0x30] sm:$0xff] %vm1206, %v1459
        %1472 = vst.msk [vmem:[#allocation2 + $0x38] sm:$0xff] %vm1206, %v1462
        %1477 = vrot.lane.b32.xlu0 %v1194, 96
        %v1478 = vpop.permute.xlu0 %1477
        %1479 = vrot.lane.b32.xlu0 %v1195, 96
        %v1480 = vpop.permute.xlu0 %1479
        %1481 = vrot.lane.b32.xlu0 %v1196, 96
        %v1482 = vpop.permute.xlu0 %1481
        %1483 = vrot.lane.b32.xlu0 %v1197, 96
        %v1484 = vpop.permute.xlu0 %1483
        %1493 = vrot.lane.b32.xlu0 %v1198, 96
        %v1494 = vpop.permute.xlu0 %1493
        %1495 = vrot.lane.b32.xlu0 %v1199, 96
        %v1496 = vpop.permute.xlu0 %1495
        %1497 = vrot.lane.b32.xlu0 %v1200, 96
        %v1498 = vpop.permute.xlu0 %1497
        %1499 = vrot.lane.b32.xlu0 %v1201, 96
        %v1500 = vpop.permute.xlu0 %1499
        %1501 = vrot.lane.b32.xlu0 %v1202, 96
        %v1502 = vpop.permute.xlu0 %1501
        %1503 = vrot.lane.b32.xlu0 %v1203, 96
        %v1504 = vpop.permute.xlu0 %1503
        %1505 = vrot.lane.b32.xlu0 %v1204, 96
        %v1506 = vpop.permute.xlu0 %1505
        %1507 = vrot.lane.b32.xlu0 %v1205, 96
        %v1508 = vpop.permute.xlu0 %1507
        %v1510 = vsel %vm1206, %v1478, 0
        %v1513 = vsel %vm1206, %v1480, 0
        %v1516 = vsel %vm1206, %v1482, 0
        %v1519 = vsel %vm1206, %v1484, 0
        %v1522 = vsel %vm1206, %v1494, 0
        %v1525 = vsel %vm1206, %v1496, 0
        %v1528 = vsel %vm1206, %v1498, 0
        %v1531 = vsel %vm1206, %v1500, 0
        %v1534 = vsel %vm1206, %v1502, 0
        %v1537 = vsel %vm1206, %v1504, 0
        %v1540 = vsel %vm1206, %v1506, 0
        %v1543 = vsel %vm1206, %v1508, 0
        %1545 = vmatprep.subr.bf16.mxu0 0
        %1546 = vmatpush1.bf16.xpose.msra.mxu0 %v1522
        %1547 = vmatprep.subr.bf16.mxu0 0
        %1548 = vmatpush1.bf16.xpose.msra.mxu0 %v1525
        %1549 = vmatprep.subr.bf16.mxu0 0
        %1550 = vmatpush1.bf16.xpose.msra.mxu0 %v1528
        %1551 = vmatprep.subr.bf16.mxu0 0
        %1552 = vmatpush1.bf16.xpose.msra.mxu0 %v1531
        %1553 = vmatprep.subr.bf16.mxu0 0
        %1554 = vmatpush1.bf16.xpose.msra.mxu0 %v1534
        %1555 = vmatprep.subr.bf16.mxu0 0
        %1556 = vmatpush1.bf16.xpose.msra.mxu0 %v1537
        %1557 = vmatprep.subr.bf16.mxu0 0
        %1558 = vmatpush1.bf16.xpose.msra.mxu0 %v1540
        %1559 = vmatprep.subr.bf16.mxu0 0
        %1560 = vmatpush1.bf16.xpose.msra.mxu0 %v1543
        %1561 = vmatprep.subr.bf16.mxu0 0
        %1562 = vmatpush1.bf16.xpose.msra.mxu0 0
        %1563 = vmatprep.subr.bf16.mxu0 0
        %1564 = vmatpush1.bf16.xpose.msra.mxu0 0
        %1565 = vmatprep.subr.bf16.mxu0 0
        %1566 = vmatpush1.bf16.xpose.msra.mxu0 0
        %1567 = vmatprep.subr.bf16.mxu0 0
        %1568 = vmatpush1.bf16.xpose.msra.mxu0 0
        %1569 = vmatprep.subr.bf16.mxu0 0
        %1570 = vmatpush1.bf16.xpose.msra.mxu0 0
        %1571 = vmatprep.subr.bf16.mxu0 0
        %1572 = vmatpush1.bf16.xpose.msra.mxu0 0
        %1573 = vmatprep.subr.bf16.mxu0 0
        %1574 = vmatpush1.bf16.xpose.msra.mxu0 0
        %1575 = vmatprep.subr.bf16.mxu0 0
        %1576 = vmatpush1.bf16.xpose.msra.mxu0 0
        %1577 = vmatprep.mubr.bf16.mxu0 0
        %1578 = vmatmul.mubr.bf16.gmra.mrb[0].mxu0 %v1510
        %v1579 = vpop.f32.mrb[0].mxu0
        %v1580 = vadd.f32 0.0, %v1579
        %v1581 = vpop.f32.mrb[0].mxu0
        %v1582 = vpop.f32.mrb[0].mxu0
        %v1583 = vadd.f32 0.0, %v1582
        %v1584 = vpop.f32.mrb[0].mxu0
        %1585 = vmatprep.mubr.bf16.mxu0 0
        %1586 = vmatmul.mubr.bf16.gmra.mrb[0].mxu0 %v1513
        %v1587 = vpop.f32.mrb[0].mxu0
        %v1588 = vadd.f32 0.0, %v1587
        %v1589 = vpop.f32.mrb[0].mxu0
        %v1590 = vpop.f32.mrb[0].mxu0
        %v1591 = vadd.f32 0.0, %v1590
        %v1592 = vpop.f32.mrb[0].mxu0
        %1593 = vmatprep.mubr.bf16.mxu0 0
        %1594 = vmatmul.mubr.bf16.gmra.mrb[0].mxu0 %v1516
        %v1595 = vpop.f32.mrb[0].mxu0
        %v1596 = vadd.f32 0.0, %v1595
        %v1597 = vpop.f32.mrb[0].mxu0
        %v1598 = vpop.f32.mrb[0].mxu0
        %v1599 = vadd.f32 0.0, %v1598
        %v1600 = vpop.f32.mrb[0].mxu0
        %1601 = vmatprep.mubr.bf16.mxu0 0
        %1602 = vmatmul.mubr.bf16.gmra.mrb[0].mxu0 %v1519
        %v1603 = vpop.f32.mrb[0].mxu0
        %v1604 = vadd.f32 0.0, %v1603
        %v1605 = vpop.f32.mrb[0].mxu0
        %v1606 = vpop.f32.mrb[0].mxu0
        %v1607 = vadd.f32 0.0, %v1606
        %v1608 = vpop.f32.mrb[0].mxu0
        %1609 = vdwg.mxu0
        %1610 = vmax.xlane.f32.xlu0 %v1580
        %v1611 = vpop.xlane.xlu0 %1610
        %1612 = vmax.xlane.f32.xlu0 %v1583
        %v1613 = vpop.xlane.xlu0 %1612
        %1614 = vmax.xlane.f32.xlu0 %v1588
        %v1615 = vpop.xlane.xlu0 %1614
        %1616 = vmax.xlane.f32.xlu0 %v1591
        %v1617 = vpop.xlane.xlu0 %1616
        %1618 = vmax.xlane.f32.xlu0 %v1596
        %v1619 = vpop.xlane.xlu0 %1618
        %1620 = vmax.xlane.f32.xlu0 %v1599
        %v1621 = vpop.xlane.xlu0 %1620
        %1622 = vmax.xlane.f32.xlu0 %v1604
        %v1623 = vpop.xlane.xlu0 %1622
        %1624 = vmax.xlane.f32.xlu0 %v1607
        %v1625 = vpop.xlane.xlu0 %1624
        %v1626 = vsub.f32 %v1580, %v1611
        %v1627 = vsub.f32 %v1583, %v1613
        %v1628 = vsub.f32 %v1588, %v1615
        %v1629 = vsub.f32 %v1591, %v1617
        %v1630 = vsub.f32 %v1596, %v1619
        %v1631 = vsub.f32 %v1599, %v1621
        %v1632 = vsub.f32 %v1604, %v1623
        %v1633 = vsub.f32 %v1607, %v1625
        %v1634 = vmul.f32 %v1626, 1.442695
        %v1635 = vpow.pop %v1634
        %v1636 = vmul.f32 %v1627, 1.442695
        %v1637 = vpow.pop %v1636
        %v1638 = vmul.f32 %v1628, 1.442695
        %v1639 = vpow.pop %v1638
        %v1640 = vmul.f32 %v1629, 1.442695
        %v1641 = vpow.pop %v1640
        %v1642 = vmul.f32 %v1630, 1.442695
        %v1643 = vpow.pop %v1642
        %v1644 = vmul.f32 %v1631, 1.442695
        %v1645 = vpow.pop %v1644
        %v1646 = vmul.f32 %v1632, 1.442695
        %v1647 = vpow.pop %v1646
        %v1648 = vmul.f32 %v1633, 1.442695
        %v1649 = vpow.pop %v1648
        %1650 = vadd.xlane.f32.xlu0 %v1635
        %v1651 = vpop.xlane.xlu0 %1650
        %1652 = vadd.xlane.f32.xlu0 %v1637
        %v1653 = vpop.xlane.xlu0 %1652
        %1654 = vadd.xlane.f32.xlu0 %v1639
        %v1655 = vpop.xlane.xlu0 %1654
        %1656 = vadd.xlane.f32.xlu0 %v1641
        %v1657 = vpop.xlane.xlu0 %1656
        %1658 = vadd.xlane.f32.xlu0 %v1643
        %v1659 = vpop.xlane.xlu0 %1658
        %1660 = vadd.xlane.f32.xlu0 %v1645
        %v1661 = vpop.xlane.xlu0 %1660
        %1662 = vadd.xlane.f32.xlu0 %v1647
        %v1663 = vpop.xlane.xlu0 %1662
        %1664 = vadd.xlane.f32.xlu0 %v1649
        %v1665 = vpop.xlane.xlu0 %1664
        %v1666 = vrcp.pop %v1651
        %v1667 = vmul.f32 %v1635, %v1666
        %v1668 = vrcp.pop %v1653
        %v1669 = vmul.f32 %v1637, %v1668
        %v1670 = vrcp.pop %v1655
        %v1671 = vmul.f32 %v1639, %v1670
        %v1672 = vrcp.pop %v1657
        %v1673 = vmul.f32 %v1641, %v1672
        %v1674 = vrcp.pop %v1659
        %v1675 = vmul.f32 %v1643, %v1674
        %v1676 = vrcp.pop %v1661
        %v1677 = vmul.f32 %v1645, %v1676
        %v1678 = vrcp.pop %v1663
        %v1679 = vmul.f32 %v1647, %v1678
        %v1680 = vrcp.pop %v1665
        %v1681 = vmul.f32 %v1649, %v1680
        %v1682 = vadd.f32 %v1380, %v1667
        %v1683 = vadd.f32 %v1381, %v1669
        %v1684 = vadd.f32 %v1382, %v1671
        %v1685 = vadd.f32 %v1383, %v1673
        %v1686 = vadd.f32 %v1384, %v1675
        %v1687 = vadd.f32 %v1385, %v1677
        %v1688 = vadd.f32 %v1386, %v1679
        %v1689 = vadd.f32 %v1387, %v1681
        %v1690 = vpack.c.bf16 %v1669, %v1667
        %v1691 = vpack.c.bf16 %v1673, %v1671
        %v1692 = vpack.c.bf16 %v1677, %v1675
        %v1693 = vpack.c.bf16 %v1681, %v1679
        %1702 = vrot.lane.b32.xlu0 %v1392, 96
        %v1703 = vpop.permute.xlu0 %1702
        %1704 = vrot.lane.b32.xlu0 %v1393, 96
        %v1705 = vpop.permute.xlu0 %1704
        %1706 = vrot.lane.b32.xlu0 %v1394, 96
        %v1707 = vpop.permute.xlu0 %1706
        %1708 = vrot.lane.b32.xlu0 %v1395, 96
        %v1709 = vpop.permute.xlu0 %1708
        %1710 = vrot.lane.b32.xlu0 %v1396, 96
        %v1711 = vpop.permute.xlu0 %1710
        %1712 = vrot.lane.b32.xlu0 %v1397, 96
        %v1713 = vpop.permute.xlu0 %1712
        %1714 = vrot.lane.b32.xlu0 %v1398, 96
        %v1715 = vpop.permute.xlu0 %1714
        %1716 = vrot.lane.b32.xlu0 %v1399, 96
        %v1717 = vpop.permute.xlu0 %1716
        %1726 = vmatprep.subr.bf16.mxu0 0
        %1727 = vmatpush1.bf16.msra.mxu0 %v1703
        %1728 = vmatprep.subr.bf16.mxu0 0
        %1729 = vmatpush1.bf16.msra.mxu0 %v1705
        %1730 = vmatprep.subr.bf16.mxu0 0
        %1731 = vmatpush1.bf16.msra.mxu0 %v1707
        %1732 = vmatprep.subr.bf16.mxu0 0
        %1733 = vmatpush1.bf16.msra.mxu0 %v1709
        %1734 = vmatprep.subr.bf16.mxu0 0
        %1735 = vmatpush1.bf16.msra.mxu0 %v1711
        %1736 = vmatprep.subr.bf16.mxu0 0
        %1737 = vmatpush1.bf16.msra.mxu0 %v1713
        %1738 = vmatprep.subr.bf16.mxu0 0
        %1739 = vmatpush1.bf16.msra.mxu0 %v1715
        %1740 = vmatprep.subr.bf16.mxu0 0
        %1741 = vmatpush1.bf16.msra.mxu0 %v1717
        %1742 = vmatprep.subr.bf16.mxu0 0
        %1743 = vmatpush1.bf16.msra.mxu0 0
        %1744 = vmatprep.subr.bf16.mxu0 0
        %1745 = vmatpush1.bf16.msra.mxu0 0
        %1746 = vmatprep.subr.bf16.mxu0 0
        %1747 = vmatpush1.bf16.msra.mxu0 0
        %1748 = vmatprep.subr.bf16.mxu0 0
        %1749 = vmatpush1.bf16.msra.mxu0 0
        %1750 = vmatprep.subr.bf16.mxu0 0
        %1751 = vmatpush1.bf16.msra.mxu0 0
        %1752 = vmatprep.subr.bf16.mxu0 0
        %1753 = vmatpush1.bf16.msra.mxu0 0
        %1754 = vmatprep.subr.bf16.mxu0 0
        %1755 = vmatpush1.bf16.msra.mxu0 0
        %1756 = vmatprep.subr.bf16.mxu0 0
        %1757 = vmatpush1.bf16.msra.mxu0 0
        %1758 = vmatprep.mubr.bf16.mxu0 0
        %1759 = vmatmul.mubr.bf16.gmra.mrb[0].mxu0 %v1690
        %v1760 = vpop.f32.mrb[0].mxu0
        %v1761 = vadd.f32 0.0, %v1760
        %v1762 = vpop.f32.mrb[0].mxu0
        %v1763 = vpop.f32.mrb[0].mxu0
        %v1764 = vadd.f32 0.0, %v1763
        %v1765 = vpop.f32.mrb[0].mxu0
        %1766 = vmatprep.mubr.bf16.mxu0 0
        %1767 = vmatmul.mubr.bf16.gmra.mrb[0].mxu0 %v1691
        %v1768 = vpop.f32.mrb[0].mxu0
        %v1769 = vadd.f32 0.0, %v1768
        %v1770 = vpop.f32.mrb[0].mxu0
        %v1771 = vpop.f32.mrb[0].mxu0
        %v1772 = vadd.f32 0.0, %v1771
        %v1773 = vpop.f32.mrb[0].mxu0
        %1774 = vmatprep.mubr.bf16.mxu0 0
        %1775 = vmatmul.mubr.bf16.gmra.mrb[0].mxu0 %v1692
        %v1776 = vpop.f32.mrb[0].mxu0
        %v1777 = vadd.f32 0.0, %v1776
        %v1778 = vpop.f32.mrb[0].mxu0
        %v1779 = vpop.f32.mrb[0].mxu0
        %v1780 = vadd.f32 0.0, %v1779
        %v1781 = vpop.f32.mrb[0].mxu0
        %1782 = vmatprep.mubr.bf16.mxu0 0
        %1783 = vmatmul.mubr.bf16.gmra.mrb[0].mxu0 %v1693
        %v1784 = vpop.f32.mrb[0].mxu0
        %v1785 = vadd.f32 0.0, %v1784
        %v1786 = vpop.f32.mrb[0].mxu0
        %v1787 = vpop.f32.mrb[0].mxu0
        %v1788 = vadd.f32 0.0, %v1787
        %v1789 = vpop.f32.mrb[0].mxu0
        %1790 = vdwg.mxu0
        %1799 = vrot.lane.b32.xlu0 %v1761, 32
        %v1800 = vpop.permute.xlu0 %1799
        %1801 = vrot.lane.b32.xlu0 %v1764, 32
        %v1802 = vpop.permute.xlu0 %1801
        %1803 = vrot.lane.b32.xlu0 %v1769, 32
        %v1804 = vpop.permute.xlu0 %1803
        %1805 = vrot.lane.b32.xlu0 %v1772, 32
        %v1806 = vpop.permute.xlu0 %1805
        %1807 = vrot.lane.b32.xlu0 %v1777, 32
        %v1808 = vpop.permute.xlu0 %1807
        %1809 = vrot.lane.b32.xlu0 %v1780, 32
        %v1810 = vpop.permute.xlu0 %1809
        %1811 = vrot.lane.b32.xlu0 %v1785, 32
        %v1812 = vpop.permute.xlu0 %1811
        %1813 = vrot.lane.b32.xlu0 %v1788, 32
        %v1814 = vpop.permute.xlu0 %1813
        %vm1823 = vcmask 523520
        %1824 = vst.msk [vmem:[#allocation2] sm:$0xff] %vm1823, %v1800
        %1825 = vst.msk [vmem:[#allocation2 + $0x8] sm:$0xff] %vm1823, %v1802
        %1826 = vst.msk [vmem:[#allocation2 + $0x10] sm:$0xff] %vm1823, %v1804
        %1827 = vst.msk [vmem:[#allocation2 + $0x18] sm:$0xff] %vm1823, %v1806
        %1828 = vst.msk [vmem:[#allocation2 + $0x20] sm:$0xff] %vm1823, %v1808
        %1829 = vst.msk [vmem:[#allocation2 + $0x28] sm:$0xff] %vm1823, %v1810
        %1830 = vst.msk [vmem:[#allocation2 + $0x30] sm:$0xff] %vm1823, %v1812
        %1831 = vst.msk [vmem:[#allocation2 + $0x38] sm:$0xff] %vm1823, %v1814
        %1832 = vrot.lane.b32.xlu0 %v1194, 64
        %v1833 = vpop.permute.xlu0 %1832
        %1834 = vrot.lane.b32.xlu0 %v1195, 64
        %v1835 = vpop.permute.xlu0 %1834
        %1836 = vrot.lane.b32.xlu0 %v1196, 64
        %v1837 = vpop.permute.xlu0 %1836
        %1838 = vrot.lane.b32.xlu0 %v1197, 64
        %v1839 = vpop.permute.xlu0 %1838
        %1840 = vrot.lane.b32.xlu0 %v1198, 64
        %v1841 = vpop.permute.xlu0 %1840
        %1842 = vrot.lane.b32.xlu0 %v1199, 64
        %v1843 = vpop.permute.xlu0 %1842
        %1844 = vrot.lane.b32.xlu0 %v1200, 64
        %v1845 = vpop.permute.xlu0 %1844
        %1846 = vrot.lane.b32.xlu0 %v1201, 64
        %v1847 = vpop.permute.xlu0 %1846
        %1848 = vrot.lane.b32.xlu0 %v1202, 64
        %v1849 = vpop.permute.xlu0 %1848
        %1850 = vrot.lane.b32.xlu0 %v1203, 64
        %v1851 = vpop.permute.xlu0 %1850
        %1852 = vrot.lane.b32.xlu0 %v1204, 64
        %v1853 = vpop.permute.xlu0 %1852
        %1854 = vrot.lane.b32.xlu0 %v1205, 64
        %v1855 = vpop.permute.xlu0 %1854
        %v1857 = vsel %vm1206, %v1833, 0
        %v1860 = vsel %vm1206, %v1835, 0
        %v1863 = vsel %vm1206, %v1837, 0
        %v1866 = vsel %vm1206, %v1839, 0
        %v1869 = vsel %vm1206, %v1841, 0
        %v1872 = vsel %vm1206, %v1843, 0
        %v1875 = vsel %vm1206, %v1845, 0
        %v1878 = vsel %vm1206, %v1847, 0
        %v1881 = vsel %vm1206, %v1849, 0
        %v1884 = vsel %vm1206, %v1851, 0
        %v1887 = vsel %vm1206, %v1853, 0
        %v1890 = vsel %vm1206, %v1855, 0
        %1892 = vmatprep.subr.bf16.mxu0 0
        %1893 = vmatpush1.bf16.xpose.msra.mxu0 %v1869
        %1894 = vmatprep.subr.bf16.mxu0 0
        %1895 = vmatpush1.bf16.xpose.msra.mxu0 %v1872
        %1896 = vmatprep.subr.bf16.mxu0 0
        %1897 = vmatpush1.bf16.xpose.msra.mxu0 %v1875
        %1898 = vmatprep.subr.bf16.mxu0 0
        %1899 = vmatpush1.bf16.xpose.msra.mxu0 %v1878
        %1900 = vmatprep.subr.bf16.mxu0 0
        %1901 = vmatpush1.bf16.xpose.msra.mxu0 %v1881
        %1902 = vmatprep.subr.bf16.mxu0 0
        %1903 = vmatpush1.bf16.xpose.msra.mxu0 %v1884
        %1904 = vmatprep.subr.bf16.mxu0 0
        %1905 = vmatpush1.bf16.xpose.msra.mxu0 %v1887
        %1906 = vmatprep.subr.bf16.mxu0 0
        %1907 = vmatpush1.bf16.xpose.msra.mxu0 %v1890
        %1908 = vmatprep.subr.bf16.mxu0 0
        %1909 = vmatpush1.bf16.xpose.msra.mxu0 0
        %1910 = vmatprep.subr.bf16.mxu0 0
        %1911 = vmatpush1.bf16.xpose.msra.mxu0 0
        %1912 = vmatprep.subr.bf16.mxu0 0
        %1913 = vmatpush1.bf16.xpose.msra.mxu0 0
        %1914 = vmatprep.subr.bf16.mxu0 0
        %1915 = vmatpush1.bf16.xpose.msra.mxu0 0
        %1916 = vmatprep.subr.bf16.mxu0 0
        %1917 = vmatpush1.bf16.xpose.msra.mxu0 0
        %1918 = vmatprep.subr.bf16.mxu0 0
        %1919 = vmatpush1.bf16.xpose.msra.mxu0 0
        %1920 = vmatprep.subr.bf16.mxu0 0
        %1921 = vmatpush1.bf16.xpose.msra.mxu0 0
        %1922 = vmatprep.subr.bf16.mxu0 0
        %1923 = vmatpush1.bf16.xpose.msra.mxu0 0
        %1924 = vmatprep.mubr.bf16.mxu0 0
        %1925 = vmatmul.mubr.bf16.gmra.mrb[0].mxu0 %v1857
        %v1926 = vpop.f32.mrb[0].mxu0
        %v1927 = vadd.f32 0.0, %v1926
        %v1928 = vpop.f32.mrb[0].mxu0
        %v1929 = vpop.f32.mrb[0].mxu0
        %v1930 = vadd.f32 0.0, %v1929
        %v1931 = vpop.f32.mrb[0].mxu0
        %1932 = vmatprep.mubr.bf16.mxu0 0
        %1933 = vmatmul.mubr.bf16.gmra.mrb[0].mxu0 %v1860
        %v1934 = vpop.f32.mrb[0].mxu0
        %v1935 = vadd.f32 0.0, %v1934
        %v1936 = vpop.f32.mrb[0].mxu0
        %v1937 = vpop.f32.mrb[0].mxu0
        %v1938 = vadd.f32 0.0, %v1937
        %v1939 = vpop.f32.mrb[0].mxu0
        %1940 = vmatprep.mubr.bf16.mxu0 0
        %1941 = vmatmul.mubr.bf16.gmra.mrb[0].mxu0 %v1863
        %v1942 = vpop.f32.mrb[0].mxu0
        %v1943 = vadd.f32 0.0, %v1942
        %v1944 = vpop.f32.mrb[0].mxu0
        %v1945 = vpop.f32.mrb[0].mxu0
        %v1946 = vadd.f32 0.0, %v1945
        %v1947 = vpop.f32.mrb[0].mxu0
        %1948 = vmatprep.mubr.bf16.mxu0 0
        %1949 = vmatmul.mubr.bf16.gmra.mrb[0].mxu0 %v1866
        %v1950 = vpop.f32.mrb[0].mxu0
        %v1951 = vadd.f32 0.0, %v1950
        %v1952 = vpop.f32.mrb[0].mxu0
        %v1953 = vpop.f32.mrb[0].mxu0
        %v1954 = vadd.f32 0.0, %v1953
        %v1955 = vpop.f32.mrb[0].mxu0
        %1956 = vdwg.mxu0
        %1957 = vmax.xlane.f32.xlu0 %v1927
        %v1958 = vpop.xlane.xlu0 %1957
        %1959 = vmax.xlane.f32.xlu0 %v1930
        %v1960 = vpop.xlane.xlu0 %1959
        %1961 = vmax.xlane.f32.xlu0 %v1935
        %v1962 = vpop.xlane.xlu0 %1961
        %1963 = vmax.xlane.f32.xlu0 %v1938
        %v1964 = vpop.xlane.xlu0 %1963
        %1965 = vmax.xlane.f32.xlu0 %v1943
        %v1966 = vpop.xlane.xlu0 %1965
        %1967 = vmax.xlane.f32.xlu0 %v1946
        %v1968 = vpop.xlane.xlu0 %1967
        %1969 = vmax.xlane.f32.xlu0 %v1951
        %v1970 = vpop.xlane.xlu0 %1969
        %1971 = vmax.xlane.f32.xlu0 %v1954
        %v1972 = vpop.xlane.xlu0 %1971
        %v1973 = vsub.f32 %v1927, %v1958
        %v1974 = vsub.f32 %v1930, %v1960
        %v1975 = vsub.f32 %v1935, %v1962
        %v1976 = vsub.f32 %v1938, %v1964
        %v1977 = vsub.f32 %v1943, %v1966
        %v1978 = vsub.f32 %v1946, %v1968
        %v1979 = vsub.f32 %v1951, %v1970
        %v1980 = vsub.f32 %v1954, %v1972
        %v1981 = vmul.f32 %v1973, 1.442695
        %v1982 = vpow.pop %v1981
        %v1983 = vmul.f32 %v1974, 1.442695
        %v1984 = vpow.pop %v1983
        %v1985 = vmul.f32 %v1975, 1.442695
        %v1986 = vpow.pop %v1985
        %v1987 = vmul.f32 %v1976, 1.442695
        %v1988 = vpow.pop %v1987
        %v1989 = vmul.f32 %v1977, 1.442695
        %v1990 = vpow.pop %v1989
        %v1991 = vmul.f32 %v1978, 1.442695
        %v1992 = vpow.pop %v1991
        %v1993 = vmul.f32 %v1979, 1.442695
        %v1994 = vpow.pop %v1993
        %v1995 = vmul.f32 %v1980, 1.442695
        %v1996 = vpow.pop %v1995
        %1997 = vadd.xlane.f32.xlu0 %v1982
        %v1998 = vpop.xlane.xlu0 %1997
        %1999 = vadd.xlane.f32.xlu0 %v1984
        %v2000 = vpop.xlane.xlu0 %1999
        %2001 = vadd.xlane.f32.xlu0 %v1986
        %v2002 = vpop.xlane.xlu0 %2001
        %2003 = vadd.xlane.f32.xlu0 %v1988
        %v2004 = vpop.xlane.xlu0 %2003
        %2005 = vadd.xlane.f32.xlu0 %v1990
        %v2006 = vpop.xlane.xlu0 %2005
        %2007 = vadd.xlane.f32.xlu0 %v1992
        %v2008 = vpop.xlane.xlu0 %2007
        %2009 = vadd.xlane.f32.xlu0 %v1994
        %v2010 = vpop.xlane.xlu0 %2009
        %2011 = vadd.xlane.f32.xlu0 %v1996
        %v2012 = vpop.xlane.xlu0 %2011
        %v2013 = vrcp.pop %v1998
        %v2014 = vmul.f32 %v1982, %v2013
        %v2015 = vrcp.pop %v2000
        %v2016 = vmul.f32 %v1984, %v2015
        %v2017 = vrcp.pop %v2002
        %v2018 = vmul.f32 %v1986, %v2017
        %v2019 = vrcp.pop %v2004
        %v2020 = vmul.f32 %v1988, %v2019
        %v2021 = vrcp.pop %v2006
        %v2022 = vmul.f32 %v1990, %v2021
        %v2023 = vrcp.pop %v2008
        %v2024 = vmul.f32 %v1992, %v2023
        %v2025 = vrcp.pop %v2010
        %v2026 = vmul.f32 %v1994, %v2025
        %v2027 = vrcp.pop %v2012
        %v2028 = vmul.f32 %v1996, %v2027
        %v2029 = vadd.f32 %v1682, %v2014
        %v2030 = vadd.f32 %v1683, %v2016
        %v2031 = vadd.f32 %v1684, %v2018
        %v2032 = vadd.f32 %v1685, %v2020
        %v2033 = vadd.f32 %v1686, %v2022
        %v2034 = vadd.f32 %v1687, %v2024
        %v2035 = vadd.f32 %v1688, %v2026
        %v2036 = vadd.f32 %v1689, %v2028
        %v2037 = vpack.c.bf16 %v2016, %v2014
        %v2038 = vpack.c.bf16 %v2020, %v2018
        %v2039 = vpack.c.bf16 %v2024, %v2022
        %v2040 = vpack.c.bf16 %v2028, %v2026
        %2041 = vrot.lane.b32.xlu0 %v1392, 64
        %v2042 = vpop.permute.xlu0 %2041
        %2043 = vrot.lane.b32.xlu0 %v1393, 64
        %v2044 = vpop.permute.xlu0 %2043
        %2045 = vrot.lane.b32.xlu0 %v1394, 64
        %v2046 = vpop.permute.xlu0 %2045
        %2047 = vrot.lane.b32.xlu0 %v1395, 64
        %v2048 = vpop.permute.xlu0 %2047
        %2049 = vrot.lane.b32.xlu0 %v1396, 64
        %v2050 = vpop.permute.xlu0 %2049
        %2051 = vrot.lane.b32.xlu0 %v1397, 64
        %v2052 = vpop.permute.xlu0 %2051
        %2053 = vrot.lane.b32.xlu0 %v1398, 64
        %v2054 = vpop.permute.xlu0 %2053
        %2055 = vrot.lane.b32.xlu0 %v1399, 64
        %v2056 = vpop.permute.xlu0 %2055
        %2065 = vmatprep.subr.bf16.mxu0 0
        %2066 = vmatpush1.bf16.msra.mxu0 %v2042
        %2067 = vmatprep.subr.bf16.mxu0 0
        %2068 = vmatpush1.bf16.msra.mxu0 %v2044
        %2069 = vmatprep.subr.bf16.mxu0 0
        %2070 = vmatpush1.bf16.msra.mxu0 %v2046
        %2071 = vmatprep.subr.bf16.mxu0 0
        %2072 = vmatpush1.bf16.msra.mxu0 %v2048
        %2073 = vmatprep.subr.bf16.mxu0 0
        %2074 = vmatpush1.bf16.msra.mxu0 %v2050
        %2075 = vmatprep.subr.bf16.mxu0 0
        %2076 = vmatpush1.bf16.msra.mxu0 %v2052
        %2077 = vmatprep.subr.bf16.mxu0 0
        %2078 = vmatpush1.bf16.msra.mxu0 %v2054
        %2079 = vmatprep.subr.bf16.mxu0 0
        %2080 = vmatpush1.bf16.msra.mxu0 %v2056
        %2081 = vmatprep.subr.bf16.mxu0 0
        %2082 = vmatpush1.bf16.msra.mxu0 0
        %2083 = vmatprep.subr.bf16.mxu0 0
        %2084 = vmatpush1.bf16.msra.mxu0 0
        %2085 = vmatprep.subr.bf16.mxu0 0
        %2086 = vmatpush1.bf16.msra.mxu0 0
        %2087 = vmatprep.subr.bf16.mxu0 0
        %2088 = vmatpush1.bf16.msra.mxu0 0
        %2089 = vmatprep.subr.bf16.mxu0 0
        %2090 = vmatpush1.bf16.msra.mxu0 0
        %2091 = vmatprep.subr.bf16.mxu0 0
        %2092 = vmatpush1.bf16.msra.mxu0 0
        %2093 = vmatprep.subr.bf16.mxu0 0
        %2094 = vmatpush1.bf16.msra.mxu0 0
        %2095 = vmatprep.subr.bf16.mxu0 0
        %2096 = vmatpush1.bf16.msra.mxu0 0
        %2097 = vmatprep.mubr.bf16.mxu0 0
        %2098 = vmatmul.mubr.bf16.gmra.mrb[0].mxu0 %v2037
        %v2099 = vpop.f32.mrb[0].mxu0
        %v2100 = vadd.f32 0.0, %v2099
        %v2101 = vpop.f32.mrb[0].mxu0
        %v2102 = vpop.f32.mrb[0].mxu0
        %v2103 = vadd.f32 0.0, %v2102
        %v2104 = vpop.f32.mrb[0].mxu0
        %2105 = vmatprep.mubr.bf16.mxu0 0
        %2106 = vmatmul.mubr.bf16.gmra.mrb[0].mxu0 %v2038
        %v2107 = vpop.f32.mrb[0].mxu0
        %v2108 = vadd.f32 0.0, %v2107
        %v2109 = vpop.f32.mrb[0].mxu0
        %v2110 = vpop.f32.mrb[0].mxu0
        %v2111 = vadd.f32 0.0, %v2110
        %v2112 = vpop.f32.mrb[0].mxu0
        %2113 = vmatprep.mubr.bf16.mxu0 0
        %2114 = vmatmul.mubr.bf16.gmra.mrb[0].mxu0 %v2039
        %v2115 = vpop.f32.mrb[0].mxu0
        %v2116 = vadd.f32 0.0, %v2115
        %v2117 = vpop.f32.mrb[0].mxu0
        %v2118 = vpop.f32.mrb[0].mxu0
        %v2119 = vadd.f32 0.0, %v2118
        %v2120 = vpop.f32.mrb[0].mxu0
        %2121 = vmatprep.mubr.bf16.mxu0 0
        %2122 = vmatmul.mubr.bf16.gmra.mrb[0].mxu0 %v2040
        %v2123 = vpop.f32.mrb[0].mxu0
        %v2124 = vadd.f32 0.0, %v2123
        %v2125 = vpop.f32.mrb[0].mxu0
        %v2126 = vpop.f32.mrb[0].mxu0
        %v2127 = vadd.f32 0.0, %v2126
        %v2128 = vpop.f32.mrb[0].mxu0
        %2129 = vdwg.mxu0
        %2138 = vrot.lane.b32.xlu0 %v2100, 64
        %v2139 = vpop.permute.xlu0 %2138
        %2140 = vrot.lane.b32.xlu0 %v2103, 64
        %v2141 = vpop.permute.xlu0 %2140
        %2142 = vrot.lane.b32.xlu0 %v2108, 64
        %v2143 = vpop.permute.xlu0 %2142
        %2144 = vrot.lane.b32.xlu0 %v2111, 64
        %v2145 = vpop.permute.xlu0 %2144
        %2146 = vrot.lane.b32.xlu0 %v2116, 64
        %v2147 = vpop.permute.xlu0 %2146
        %2148 = vrot.lane.b32.xlu0 %v2119, 64
        %v2149 = vpop.permute.xlu0 %2148
        %2150 = vrot.lane.b32.xlu0 %v2124, 64
        %v2151 = vpop.permute.xlu0 %2150
        %2152 = vrot.lane.b32.xlu0 %v2127, 64
        %v2153 = vpop.permute.xlu0 %2152
        %vm2162 = vcmask 785920
        %2163 = vst.msk [vmem:[#allocation2] sm:$0xff] %vm2162, %v2139
        %2164 = vst.msk [vmem:[#allocation2 + $0x8] sm:$0xff] %vm2162, %v2141
        %2165 = vst.msk [vmem:[#allocation2 + $0x10] sm:$0xff] %vm2162, %v2143
        %2166 = vst.msk [vmem:[#allocation2 + $0x18] sm:$0xff] %vm2162, %v2145
        %2167 = vst.msk [vmem:[#allocation2 + $0x20] sm:$0xff] %vm2162, %v2147
        %2168 = vst.msk [vmem:[#allocation2 + $0x28] sm:$0xff] %vm2162, %v2149
        %2169 = vst.msk [vmem:[#allocation2 + $0x30] sm:$0xff] %vm2162, %v2151
        %2170 = vst.msk [vmem:[#allocation2 + $0x38] sm:$0xff] %vm2162, %v2153
        %2171 = vrot.lane.b32.xlu0 %v1194, 32
        %v2172 = vpop.permute.xlu0 %2171
        %2173 = vrot.lane.b32.xlu0 %v1195, 32
        %v2174 = vpop.permute.xlu0 %2173
        %2175 = vrot.lane.b32.xlu0 %v1196, 32
        %v2176 = vpop.permute.xlu0 %2175
        %2177 = vrot.lane.b32.xlu0 %v1197, 32
        %v2178 = vpop.permute.xlu0 %2177
        %2179 = vrot.lane.b32.xlu0 %v1198, 32
        %v2180 = vpop.permute.xlu0 %2179
        %2181 = vrot.lane.b32.xlu0 %v1199, 32
        %v2182 = vpop.permute.xlu0 %2181
        %2183 = vrot.lane.b32.xlu0 %v1200, 32
        %v2184 = vpop.permute.xlu0 %2183
        %2185 = vrot.lane.b32.xlu0 %v1201, 32
        %v2186 = vpop.permute.xlu0 %2185
        %2187 = vrot.lane.b32.xlu0 %v1202, 32
        %v2188 = vpop.permute.xlu0 %2187
        %2189 = vrot.lane.b32.xlu0 %v1203, 32
        %v2190 = vpop.permute.xlu0 %2189
        %2191 = vrot.lane.b32.xlu0 %v1204, 32
        %v2192 = vpop.permute.xlu0 %2191
        %2193 = vrot.lane.b32.xlu0 %v1205, 32
        %v2194 = vpop.permute.xlu0 %2193
        %v2196 = vsel %vm1206, %v2172, 0
        %v2199 = vsel %vm1206, %v2174, 0
        %v2202 = vsel %vm1206, %v2176, 0
        %v2205 = vsel %vm1206, %v2178, 0
        %v2208 = vsel %vm1206, %v2180, 0
        %v2211 = vsel %vm1206, %v2182, 0
        %v2214 = vsel %vm1206, %v2184, 0
        %v2217 = vsel %vm1206, %v2186, 0
        %v2220 = vsel %vm1206, %v2188, 0
        %v2223 = vsel %vm1206, %v2190, 0
        %v2226 = vsel %vm1206, %v2192, 0
        %v2229 = vsel %vm1206, %v2194, 0
        %2231 = vmatprep.subr.bf16.mxu0 0
        %2232 = vmatpush1.bf16.xpose.msra.mxu0 %v2208
        %2233 = vmatprep.subr.bf16.mxu0 0
        %2234 = vmatpush1.bf16.xpose.msra.mxu0 %v2211
        %2235 = vmatprep.subr.bf16.mxu0 0
        %2236 = vmatpush1.bf16.xpose.msra.mxu0 %v2214
        %2237 = vmatprep.subr.bf16.mxu0 0
        %2238 = vmatpush1.bf16.xpose.msra.mxu0 %v2217
        %2239 = vmatprep.subr.bf16.mxu0 0
        %2240 = vmatpush1.bf16.xpose.msra.mxu0 %v2220
        %2241 = vmatprep.subr.bf16.mxu0 0
        %2242 = vmatpush1.bf16.xpose.msra.mxu0 %v2223
        %2243 = vmatprep.subr.bf16.mxu0 0
        %2244 = vmatpush1.bf16.xpose.msra.mxu0 %v2226
        %2245 = vmatprep.subr.bf16.mxu0 0
        %2246 = vmatpush1.bf16.xpose.msra.mxu0 %v2229
        %2247 = vmatprep.subr.bf16.mxu0 0
        %2248 = vmatpush1.bf16.xpose.msra.mxu0 0
        %2249 = vmatprep.subr.bf16.mxu0 0
        %2250 = vmatpush1.bf16.xpose.msra.mxu0 0
        %2251 = vmatprep.subr.bf16.mxu0 0
        %2252 = vmatpush1.bf16.xpose.msra.mxu0 0
        %2253 = vmatprep.subr.bf16.mxu0 0
        %2254 = vmatpush1.bf16.xpose.msra.mxu0 0
        %2255 = vmatprep.subr.bf16.mxu0 0
        %2256 = vmatpush1.bf16.xpose.msra.mxu0 0
        %2257 = vmatprep.subr.bf16.mxu0 0
        %2258 = vmatpush1.bf16.xpose.msra.mxu0 0
        %2259 = vmatprep.subr.bf16.mxu0 0
        %2260 = vmatpush1.bf16.xpose.msra.mxu0 0
        %2261 = vmatprep.subr.bf16.mxu0 0
        %2262 = vmatpush1.bf16.xpose.msra.mxu0 0
        %2263 = vmatprep.mubr.bf16.mxu0 0
        %2264 = vmatmul.mubr.bf16.gmra.mrb[0].mxu0 %v2196
        %v2265 = vpop.f32.mrb[0].mxu0
        %v2266 = vadd.f32 0.0, %v2265
        %v2267 = vpop.f32.mrb[0].mxu0
        %v2268 = vpop.f32.mrb[0].mxu0
        %v2269 = vadd.f32 0.0, %v2268
        %v2270 = vpop.f32.mrb[0].mxu0
        %2271 = vmatprep.mubr.bf16.mxu0 0
        %2272 = vmatmul.mubr.bf16.gmra.mrb[0].mxu0 %v2199
        %v2273 = vpop.f32.mrb[0].mxu0
        %v2274 = vadd.f32 0.0, %v2273
        %v2275 = vpop.f32.mrb[0].mxu0
        %v2276 = vpop.f32.mrb[0].mxu0
        %v2277 = vadd.f32 0.0, %v2276
        %v2278 = vpop.f32.mrb[0].mxu0
        %2279 = vmatprep.mubr.bf16.mxu0 0
        %2280 = vmatmul.mubr.bf16.gmra.mrb[0].mxu0 %v2202
        %v2281 = vpop.f32.mrb[0].mxu0
        %v2282 = vadd.f32 0.0, %v2281
        %v2283 = vpop.f32.mrb[0].mxu0
        %v2284 = vpop.f32.mrb[0].mxu0
        %v2285 = vadd.f32 0.0, %v2284
        %v2286 = vpop.f32.mrb[0].mxu0
        %2287 = vmatprep.mubr.bf16.mxu0 0
        %2288 = vmatmul.mubr.bf16.gmra.mrb[0].mxu0 %v2205
        %v2289 = vpop.f32.mrb[0].mxu0
        %v2290 = vadd.f32 0.0, %v2289
        %v2291 = vpop.f32.mrb[0].mxu0
        %v2292 = vpop.f32.mrb[0].mxu0
        %v2293 = vadd.f32 0.0, %v2292
        %v2294 = vpop.f32.mrb[0].mxu0
        %2295 = vdwg.mxu0
        %2296 = vmax.xlane.f32.xlu0 %v2266
        %v2297 = vpop.xlane.xlu0 %2296
        %2298 = vmax.xlane.f32.xlu0 %v2269
        %v2299 = vpop.xlane.xlu0 %2298
        %2300 = vmax.xlane.f32.xlu0 %v2274
        %v2301 = vpop.xlane.xlu0 %2300
        %2302 = vmax.xlane.f32.xlu0 %v2277
        %v2303 = vpop.xlane.xlu0 %2302
        %2304 = vmax.xlane.f32.xlu0 %v2282
        %v2305 = vpop.xlane.xlu0 %2304
        %2306 = vmax.xlane.f32.xlu0 %v2285
        %v2307 = vpop.xlane.xlu0 %2306
        %2308 = vmax.xlane.f32.xlu0 %v2290
        %v2309 = vpop.xlane.xlu0 %2308
        %2310 = vmax.xlane.f32.xlu0 %v2293
        %v2311 = vpop.xlane.xlu0 %2310
        %v2312 = vsub.f32 %v2266, %v2297
        %v2313 = vsub.f32 %v2269, %v2299
        %v2314 = vsub.f32 %v2274, %v2301
        %v2315 = vsub.f32 %v2277, %v2303
        %v2316 = vsub.f32 %v2282, %v2305
        %v2317 = vsub.f32 %v2285, %v2307
        %v2318 = vsub.f32 %v2290, %v2309
        %v2319 = vsub.f32 %v2293, %v2311
        %v2320 = vmul.f32 %v2312, 1.442695
        %v2321 = vpow.pop %v2320
        %v2322 = vmul.f32 %v2313, 1.442695
        %v2323 = vpow.pop %v2322
        %v2324 = vmul.f32 %v2314, 1.442695
        %v2325 = vpow.pop %v2324
        %v2326 = vmul.f32 %v2315, 1.442695
        %v2327 = vpow.pop %v2326
        %v2328 = vmul.f32 %v2316, 1.442695
        %v2329 = vpow.pop %v2328
        %v2330 = vmul.f32 %v2317, 1.442695
        %v2331 = vpow.pop %v2330
        %v2332 = vmul.f32 %v2318, 1.442695
        %v2333 = vpow.pop %v2332
        %v2334 = vmul.f32 %v2319, 1.442695
        %v2335 = vpow.pop %v2334
        %2336 = vadd.xlane.f32.xlu0 %v2321
        %v2337 = vpop.xlane.xlu0 %2336
        %2338 = vadd.xlane.f32.xlu0 %v2323
        %v2339 = vpop.xlane.xlu0 %2338
        %2340 = vadd.xlane.f32.xlu0 %v2325
        %v2341 = vpop.xlane.xlu0 %2340
        %2342 = vadd.xlane.f32.xlu0 %v2327
        %v2343 = vpop.xlane.xlu0 %2342
        %2344 = vadd.xlane.f32.xlu0 %v2329
        %v2345 = vpop.xlane.xlu0 %2344
        %2346 = vadd.xlane.f32.xlu0 %v2331
        %v2347 = vpop.xlane.xlu0 %2346
        %2348 = vadd.xlane.f32.xlu0 %v2333
        %v2349 = vpop.xlane.xlu0 %2348
        %2350 = vadd.xlane.f32.xlu0 %v2335
        %v2351 = vpop.xlane.xlu0 %2350
        %v2352 = vrcp.pop %v2337
        %v2353 = vmul.f32 %v2321, %v2352
        %v2354 = vrcp.pop %v2339
        %v2355 = vmul.f32 %v2323, %v2354
        %v2356 = vrcp.pop %v2341
        %v2357 = vmul.f32 %v2325, %v2356
        %v2358 = vrcp.pop %v2343
        %v2359 = vmul.f32 %v2327, %v2358
        %v2360 = vrcp.pop %v2345
        %v2361 = vmul.f32 %v2329, %v2360
        %v2362 = vrcp.pop %v2347
        %v2363 = vmul.f32 %v2331, %v2362
        %v2364 = vrcp.pop %v2349
        %v2365 = vmul.f32 %v2333, %v2364
        %v2366 = vrcp.pop %v2351
        %v2367 = vmul.f32 %v2335, %v2366
        %v2368 = vadd.f32 %v2029, %v2353
        %v2369 = vadd.f32 %v2030, %v2355
        %v2370 = vadd.f32 %v2031, %v2357
        %v2371 = vadd.f32 %v2032, %v2359
        %v2372 = vadd.f32 %v2033, %v2361
        %v2373 = vadd.f32 %v2034, %v2363
        %v2374 = vadd.f32 %v2035, %v2365
        %v2375 = vadd.f32 %v2036, %v2367
        %v2376 = vpack.c.bf16 %v2355, %v2353
        %v2377 = vpack.c.bf16 %v2359, %v2357
        %v2378 = vpack.c.bf16 %v2363, %v2361
        %v2379 = vpack.c.bf16 %v2367, %v2365
        %2380 = vrot.lane.b32.xlu0 %v1392, 32
        %v2381 = vpop.permute.xlu0 %2380
        %2382 = vrot.lane.b32.xlu0 %v1393, 32
        %v2383 = vpop.permute.xlu0 %2382
        %2384 = vrot.lane.b32.xlu0 %v1394, 32
        %v2385 = vpop.permute.xlu0 %2384
        %2386 = vrot.lane.b32.xlu0 %v1395, 32
        %v2387 = vpop.permute.xlu0 %2386
        %2388 = vrot.lane.b32.xlu0 %v1396, 32
        %v2389 = vpop.permute.xlu0 %2388
        %2390 = vrot.lane.b32.xlu0 %v1397, 32
        %v2391 = vpop.permute.xlu0 %2390
        %2392 = vrot.lane.b32.xlu0 %v1398, 32
        %v2393 = vpop.permute.xlu0 %2392
        %2394 = vrot.lane.b32.xlu0 %v1399, 32
        %v2395 = vpop.permute.xlu0 %2394
        %2404 = vmatprep.subr.bf16.mxu0 0
        %2405 = vmatpush1.bf16.msra.mxu0 %v2381
        %2406 = vmatprep.subr.bf16.mxu0 0
        %2407 = vmatpush1.bf16.msra.mxu0 %v2383
        %2408 = vmatprep.subr.bf16.mxu0 0
        %2409 = vmatpush1.bf16.msra.mxu0 %v2385
        %2410 = vmatprep.subr.bf16.mxu0 0
        %2411 = vmatpush1.bf16.msra.mxu0 %v2387
        %2412 = vmatprep.subr.bf16.mxu0 0
        %2413 = vmatpush1.bf16.msra.mxu0 %v2389
        %2414 = vmatprep.subr.bf16.mxu0 0
        %2415 = vmatpush1.bf16.msra.mxu0 %v2391
        %2416 = vmatprep.subr.bf16.mxu0 0
        %2417 = vmatpush1.bf16.msra.mxu0 %v2393
        %2418 = vmatprep.subr.bf16.mxu0 0
        %2419 = vmatpush1.bf16.msra.mxu0 %v2395
        %2420 = vmatprep.subr.bf16.mxu0 0
        %2421 = vmatpush1.bf16.msra.mxu0 0
        %2422 = vmatprep.subr.bf16.mxu0 0
        %2423 = vmatpush1.bf16.msra.mxu0 0
        %2424 = vmatprep.subr.bf16.mxu0 0
        %2425 = vmatpush1.bf16.msra.mxu0 0
        %2426 = vmatprep.subr.bf16.mxu0 0
        %2427 = vmatpush1.bf16.msra.mxu0 0
        %2428 = vmatprep.subr.bf16.mxu0 0
        %2429 = vmatpush1.bf16.msra.mxu0 0
        %2430 = vmatprep.subr.bf16.mxu0 0
        %2431 = vmatpush1.bf16.msra.mxu0 0
        %2432 = vmatprep.subr.bf16.mxu0 0
        %2433 = vmatpush1.bf16.msra.mxu0 0
        %2434 = vmatprep.subr.bf16.mxu0 0
        %2435 = vmatpush1.bf16.msra.mxu0 0
        %2436 = vmatprep.mubr.bf16.mxu0 0
        %2437 = vmatmul.mubr.bf16.gmra.mrb[0].mxu0 %v2376
        %v2438 = vpop.f32.mrb[0].mxu0
        %v2439 = vadd.f32 0.0, %v2438
        %v2440 = vpop.f32.mrb[0].mxu0
        %v2441 = vpop.f32.mrb[0].mxu0
        %v2442 = vadd.f32 0.0, %v2441
        %v2443 = vpop.f32.mrb[0].mxu0
        %2444 = vmatprep.mubr.bf16.mxu0 0
        %2445 = vmatmul.mubr.bf16.gmra.mrb[0].mxu0 %v2377
        %v2446 = vpop.f32.mrb[0].mxu0
        %v2447 = vadd.f32 0.0, %v2446
        %v2448 = vpop.f32.mrb[0].mxu0
        %v2449 = vpop.f32.mrb[0].mxu0
        %v2450 = vadd.f32 0.0, %v2449
        %v2451 = vpop.f32.mrb[0].mxu0
        %2452 = vmatprep.mubr.bf16.mxu0 0
        %2453 = vmatmul.mubr.bf16.gmra.mrb[0].mxu0 %v2378
        %v2454 = vpop.f32.mrb[0].mxu0
        %v2455 = vadd.f32 0.0, %v2454
        %v2456 = vpop.f32.mrb[0].mxu0
        %v2457 = vpop.f32.mrb[0].mxu0
        %v2458 = vadd.f32 0.0, %v2457
        %v2459 = vpop.f32.mrb[0].mxu0
        %2460 = vmatprep.mubr.bf16.mxu0 0
        %2461 = vmatmul.mubr.bf16.gmra.mrb[0].mxu0 %v2379
        %v2462 = vpop.f32.mrb[0].mxu0
        %v2463 = vadd.f32 0.0, %v2462
        %v2464 = vpop.f32.mrb[0].mxu0
        %v2465 = vpop.f32.mrb[0].mxu0
        %v2466 = vadd.f32 0.0, %v2465
        %v2467 = vpop.f32.mrb[0].mxu0
        %2468 = vdwg.mxu0
        %2477 = vrot.lane.b32.xlu0 %v2439, 96
        %v2478 = vpop.permute.xlu0 %2477
        %2479 = vrot.lane.b32.xlu0 %v2442, 96
        %v2480 = vpop.permute.xlu0 %2479
        %2481 = vrot.lane.b32.xlu0 %v2447, 96
        %v2482 = vpop.permute.xlu0 %2481
        %2483 = vrot.lane.b32.xlu0 %v2450, 96
        %v2484 = vpop.permute.xlu0 %2483
        %2485 = vrot.lane.b32.xlu0 %v2455, 96
        %v2486 = vpop.permute.xlu0 %2485
        %2487 = vrot.lane.b32.xlu0 %v2458, 96
        %v2488 = vpop.permute.xlu0 %2487
        %2489 = vrot.lane.b32.xlu0 %v2463, 96
        %v2490 = vpop.permute.xlu0 %2489
        %2491 = vrot.lane.b32.xlu0 %v2466, 96
        %v2492 = vpop.permute.xlu0 %2491
        %vm2501 = vcmask 1048320
        %2502 = vst.msk [vmem:[#allocation2] sm:$0xff] %vm2501, %v2478
        %2503 = vst.msk [vmem:[#allocation2 + $0x8] sm:$0xff] %vm2501, %v2480
        %2504 = vst.msk [vmem:[#allocation2 + $0x10] sm:$0xff] %vm2501, %v2482
        %2505 = vst.msk [vmem:[#allocation2 + $0x18] sm:$0xff] %vm2501, %v2484
        %2506 = vst.msk [vmem:[#allocation2 + $0x20] sm:$0xff] %vm2501, %v2486
        %2507 = vst.msk [vmem:[#allocation2 + $0x28] sm:$0xff] %vm2501, %v2488
        %2508 = vst.msk [vmem:[#allocation2 + $0x30] sm:$0xff] %vm2501, %v2490
        %2509 = vst.msk [vmem:[#allocation2 + $0x38] sm:$0xff] %vm2501, %v2492
        %v2510 = vld [vmem:[#allocation2] sm:$0xff]
        %v2511 = vld [vmem:[#allocation2 + $0x8] sm:$0xff]
        %v2512 = vld [vmem:[#allocation2 + $0x10] sm:$0xff]
        %v2513 = vld [vmem:[#allocation2 + $0x18] sm:$0xff]
        %v2514 = vld [vmem:[#allocation2 + $0x20] sm:$0xff]
        %v2515 = vld [vmem:[#allocation2 + $0x28] sm:$0xff]
        %v2516 = vld [vmem:[#allocation2 + $0x30] sm:$0xff]
        %v2517 = vld [vmem:[#allocation2 + $0x38] sm:$0xff]
        %v2518 = vpack.c.bf16 %v2511, %v2510
        %v2519 = vpack.c.bf16 %v2513, %v2512
        %v2520 = vpack.c.bf16 %v2515, %v2514
        %v2521 = vpack.c.bf16 %v2517, %v2516
        %v2522 = vld [vmem:[%s6] sm:$0xf]
        %v2523 = vld [vmem:[%s6 + $0x4] sm:$0xf]
        %v2524 = vld [vmem:[%s6 + $0x8] sm:$0xf]
        %v2525 = vld [vmem:[%s6 + $0xc] sm:$0xf]
        %v2526 = vld [vmem:[%s6 + $0x10] sm:$0xf]
        %v2527 = vld [vmem:[%s6 + $0x14] sm:$0xf]
        %v2528 = vld [vmem:[%s6 + $0x18] sm:$0xf]
        %v2529 = vld [vmem:[%s6 + $0x1c] sm:$0xf]
        %v2530 = vld [vmem:[%s6 + $0x20] sm:$0xf]
        %v2531 = vld [vmem:[%s6 + $0x24] sm:$0xf]
        %v2532 = vld [vmem:[%s6 + $0x28] sm:$0xf]
        %v2533 = vld [vmem:[%s6 + $0x2c] sm:$0xf]
        %v2534 = vld [vmem:[%s6 + $0x30] sm:$0xf]
        %v2535 = vld [vmem:[%s6 + $0x34] sm:$0xf]
        %v2536 = vld [vmem:[%s6 + $0x38] sm:$0xf]
        %v2537 = vld [vmem:[%s6 + $0x3c] sm:$0xf]
        %v2538 = vld [vmem:[%s10] sm:$0x1]
        %v2540 = vlaneseq
        %v2541 = vshrl.u32 %v2540, 7
        %v2542 = vsub.s32 0, %v2541
        %v2543 = vrot.slane %v2538, %v2542
        %v2561 = vunpack.c.l.b16 %v2522
        %v2562 = vunpack.c.l.b16 %v2523
        %v2563 = vunpack.c.l.b16 %v2524
        %v2564 = vunpack.c.l.b16 %v2525
        %v2565 = vunpack.c.l.b16 %v2526
        %v2566 = vunpack.c.l.b16 %v2527
        %v2567 = vunpack.c.l.b16 %v2528
        %v2568 = vunpack.c.l.b16 %v2529
        %v2569 = vunpack.c.l.b16 %v2530
        %v2570 = vunpack.c.l.b16 %v2531
        %v2571 = vunpack.c.l.b16 %v2532
        %v2572 = vunpack.c.l.b16 %v2533
        %v2573 = vunpack.c.l.b16 %v2534
        %v2574 = vunpack.c.l.b16 %v2535
        %v2575 = vunpack.c.l.b16 %v2536
        %v2576 = vunpack.c.l.b16 %v2537
        %v2577 = vpack.c.b16 %v2562, %v2561
        %v2578 = vpack.c.b16 %v2564, %v2563
        %v2579 = vpack.c.b16 %v2566, %v2565
        %v2580 = vpack.c.b16 %v2568, %v2567
        %v2581 = vpack.c.b16 %v2570, %v2569
        %v2582 = vpack.c.b16 %v2572, %v2571
        %v2583 = vpack.c.b16 %v2574, %v2573
        %v2584 = vpack.c.b16 %v2576, %v2575
        %2593 = vmatprep.subr.bf16.mxu0 0
        %2594 = vmatpush1.bf16.msra.mxu0 %v2577
        %2595 = vmatprep.subr.bf16.mxu0 0
        %2596 = vmatpush1.bf16.msra.mxu0 %v2578
        %2597 = vmatprep.subr.bf16.mxu0 0
        %2598 = vmatpush1.bf16.msra.mxu0 %v2579
        %2599 = vmatprep.subr.bf16.mxu0 0
        %2600 = vmatpush1.bf16.msra.mxu0 %v2580
        %2601 = vmatprep.subr.bf16.mxu0 0
        %2602 = vmatpush1.bf16.msra.mxu0 %v2581
        %2603 = vmatprep.subr.bf16.mxu0 0
        %2604 = vmatpush1.bf16.msra.mxu0 %v2582
        %2605 = vmatprep.subr.bf16.mxu0 0
        %2606 = vmatpush1.bf16.msra.mxu0 %v2583
        %2607 = vmatprep.subr.bf16.mxu0 0
        %2608 = vmatpush1.bf16.msra.mxu0 %v2584
        %2609 = vmatprep.subr.bf16.mxu0 0
        %2610 = vmatpush1.bf16.msra.mxu0 0
        %2611 = vmatprep.subr.bf16.mxu0 0
        %2612 = vmatpush1.bf16.msra.mxu0 0
        %2613 = vmatprep.subr.bf16.mxu0 0
        %2614 = vmatpush1.bf16.msra.mxu0 0
        %2615 = vmatprep.subr.bf16.mxu0 0
        %2616 = vmatpush1.bf16.msra.mxu0 0
        %2617 = vmatprep.subr.bf16.mxu0 0
        %2618 = vmatpush1.bf16.msra.mxu0 0
        %2619 = vmatprep.subr.bf16.mxu0 0
        %2620 = vmatpush1.bf16.msra.mxu0 0
        %2621 = vmatprep.subr.bf16.mxu0 0
        %2622 = vmatpush1.bf16.msra.mxu0 0
        %2623 = vmatprep.subr.bf16.mxu0 0
        %2624 = vmatpush1.bf16.msra.mxu0 0
        %2625 = vmatprep.mubr.bf16.mxu0 0
        %2626 = vmatmul.mubr.bf16.gmra.mrb[0].mxu0 %v2518
        %v2627 = vpop.f32.mrb[0].mxu0
        %v2628 = vadd.f32 %v2543, %v2627
        %v2629 = vpop.f32.mrb[0].mxu0
        %v2630 = vpop.f32.mrb[0].mxu0
        %v2631 = vadd.f32 %v2543, %v2630
        %v2632 = vpop.f32.mrb[0].mxu0
        %2633 = vmatprep.mubr.bf16.mxu0 0
        %2634 = vmatmul.mubr.bf16.gmra.mrb[0].mxu0 %v2519
        %v2635 = vpop.f32.mrb[0].mxu0
        %v2636 = vadd.f32 %v2543, %v2635
        %v2637 = vpop.f32.mrb[0].mxu0
        %v2638 = vpop.f32.mrb[0].mxu0
        %v2639 = vadd.f32 %v2543, %v2638
        %v2640 = vpop.f32.mrb[0].mxu0
        %2641 = vmatprep.mubr.bf16.mxu0 0
        %2642 = vmatmul.mubr.bf16.gmra.mrb[0].mxu0 %v2520
        %v2643 = vpop.f32.mrb[0].mxu0
        %v2644 = vadd.f32 %v2543, %v2643
        %v2645 = vpop.f32.mrb[0].mxu0
        %v2646 = vpop.f32.mrb[0].mxu0
        %v2647 = vadd.f32 %v2543, %v2646
        %v2648 = vpop.f32.mrb[0].mxu0
        %2649 = vmatprep.mubr.bf16.mxu0 0
        %2650 = vmatmul.mubr.bf16.gmra.mrb[0].mxu0 %v2521
        %v2651 = vpop.f32.mrb[0].mxu0
        %v2652 = vadd.f32 %v2543, %v2651
        %v2653 = vpop.f32.mrb[0].mxu0
        %v2654 = vpop.f32.mrb[0].mxu0
        %v2655 = vadd.f32 %v2543, %v2654
        %v2656 = vpop.f32.mrb[0].mxu0
        %2657 = vdwg.mxu0
        %v2658 = vunpack.c.l.bf16 %v562
        %v2659 = vunpack.c.l.bf16 %v563
        %v2660 = vunpack.c.l.bf16 %v564
        %v2661 = vunpack.c.l.bf16 %v565
        %v2662 = vunpack.c.l.bf16 %v566
        %v2663 = vunpack.c.l.bf16 %v567
        %v2664 = vunpack.c.l.bf16 %v568
        %v2665 = vunpack.c.l.bf16 %v569
        %v2666 = vadd.f32 %v2658, %v2628
        %v2667 = vadd.f32 %v2659, %v2631
        %v2668 = vadd.f32 %v2660, %v2636
        %v2669 = vadd.f32 %v2661, %v2639
        %v2670 = vadd.f32 %v2662, %v2644
        %v2671 = vadd.f32 %v2663, %v2647
        %v2672 = vadd.f32 %v2664, %v2652
        %v2673 = vadd.f32 %v2665, %v2655
        %v2674 = vld [vmem:[%s11] sm:$0x1]
        %v2675 = vld [vmem:[%s12] sm:$0x1]
        %2676 = vadd.xlane.f32.xlu0 %v2666
        %v2677 = vpop.xlane.xlu0 %2676
        %2678 = vadd.xlane.f32.xlu0 %v2667
        %v2679 = vpop.xlane.xlu0 %2678
        %2680 = vadd.xlane.f32.xlu0 %v2668
        %v2681 = vpop.xlane.xlu0 %2680
        %2682 = vadd.xlane.f32.xlu0 %v2669
        %v2683 = vpop.xlane.xlu0 %2682
        %2684 = vadd.xlane.f32.xlu0 %v2670
        %v2685 = vpop.xlane.xlu0 %2684
        %2686 = vadd.xlane.f32.xlu0 %v2671
        %v2687 = vpop.xlane.xlu0 %2686
        %2688 = vadd.xlane.f32.xlu0 %v2672
        %v2689 = vpop.xlane.xlu0 %2688
        %2690 = vadd.xlane.f32.xlu0 %v2673
        %v2691 = vpop.xlane.xlu0 %2690
        %v2692 = vrcp.pop 128.0
        %v2693 = vmul.f32 %v2677, %v2692
        %v2694 = vmul.f32 %v2679, %v2692
        %v2695 = vmul.f32 %v2681, %v2692
        %v2696 = vmul.f32 %v2683, %v2692
        %v2697 = vmul.f32 %v2685, %v2692
        %v2698 = vmul.f32 %v2687, %v2692
        %v2699 = vmul.f32 %v2689, %v2692
        %v2700 = vmul.f32 %v2691, %v2692
        %v2701 = vsub.f32 %v2666, %v2693
        %v2702 = vsub.f32 %v2667, %v2694
        %v2703 = vsub.f32 %v2668, %v2695
        %v2704 = vsub.f32 %v2669, %v2696
        %v2705 = vsub.f32 %v2670, %v2697
        %v2706 = vsub.f32 %v2671, %v2698
        %v2707 = vsub.f32 %v2672, %v2699
        %v2708 = vsub.f32 %v2673, %v2700
        %v2709 = vmul.f32 %v2701, %v2701
        %v2710 = vmul.f32 %v2702, %v2702
        %v2711 = vmul.f32 %v2703, %v2703
        %v2712 = vmul.f32 %v2704, %v2704
        %v2713 = vmul.f32 %v2705, %v2705
        %v2714 = vmul.f32 %v2706, %v2706
        %v2715 = vmul.f32 %v2707, %v2707
        %v2716 = vmul.f32 %v2708, %v2708
        %2717 = vadd.xlane.f32.xlu0 %v2709
        %v2718 = vpop.xlane.xlu0 %2717
        %2719 = vadd.xlane.f32.xlu0 %v2710
        %v2720 = vpop.xlane.xlu0 %2719
        %2721 = vadd.xlane.f32.xlu0 %v2711
        %v2722 = vpop.xlane.xlu0 %2721
        %2723 = vadd.xlane.f32.xlu0 %v2712
        %v2724 = vpop.xlane.xlu0 %2723
        %2725 = vadd.xlane.f32.xlu0 %v2713
        %v2726 = vpop.xlane.xlu0 %2725
        %2727 = vadd.xlane.f32.xlu0 %v2714
        %v2728 = vpop.xlane.xlu0 %2727
        %2729 = vadd.xlane.f32.xlu0 %v2715
        %v2730 = vpop.xlane.xlu0 %2729
        %2731 = vadd.xlane.f32.xlu0 %v2716
        %v2732 = vpop.xlane.xlu0 %2731
        %v2733 = vmul.f32 %v2718, %v2692
        %v2734 = vmul.f32 %v2720, %v2692
        %v2735 = vmul.f32 %v2722, %v2692
        %v2736 = vmul.f32 %v2724, %v2692
        %v2737 = vmul.f32 %v2726, %v2692
        %v2738 = vmul.f32 %v2728, %v2692
        %v2739 = vmul.f32 %v2730, %v2692
        %v2740 = vmul.f32 %v2732, %v2692
        %v2741 = vadd.f32 %v2733, 1e-05
        %v2742 = vadd.f32 %v2734, 1e-05
        %v2743 = vadd.f32 %v2735, 1e-05
        %v2744 = vadd.f32 %v2736, 1e-05
        %v2745 = vadd.f32 %v2737, 1e-05
        %v2746 = vadd.f32 %v2738, 1e-05
        %v2747 = vadd.f32 %v2739, 1e-05
        %v2748 = vadd.f32 %v2740, 1e-05
        %v2749 = vrsqrt.pop %v2741
        %v2750 = vrsqrt.pop %v2742
        %v2751 = vrsqrt.pop %v2743
        %v2752 = vrsqrt.pop %v2744
        %v2753 = vrsqrt.pop %v2745
        %v2754 = vrsqrt.pop %v2746
        %v2755 = vrsqrt.pop %v2747
        %v2756 = vrsqrt.pop %v2748
        %v2757 = vmul.f32 %v2701, %v2749
        %v2758 = vmul.f32 %v2702, %v2750
        %v2759 = vmul.f32 %v2703, %v2751
        %v2760 = vmul.f32 %v2704, %v2752
        %v2761 = vmul.f32 %v2705, %v2753
        %v2762 = vmul.f32 %v2706, %v2754
        %v2763 = vmul.f32 %v2707, %v2755
        %v2764 = vmul.f32 %v2708, %v2756
        %v2766 = vlaneseq
        %v2767 = vshrl.u32 %v2766, 7
        %v2768 = vsub.s32 0, %v2767
        %v2769 = vrot.slane %v2674, %v2768
        %v2771 = vmul.f32 %v2757, %v2769
        %v2772 = vmul.f32 %v2758, %v2769
        %v2773 = vmul.f32 %v2759, %v2769
        %v2774 = vmul.f32 %v2760, %v2769
        %v2775 = vmul.f32 %v2761, %v2769
        %v2776 = vmul.f32 %v2762, %v2769
        %v2777 = vmul.f32 %v2763, %v2769
        %v2778 = vmul.f32 %v2764, %v2769
        %v2780 = vlaneseq
        %v2781 = vshrl.u32 %v2780, 7
        %v2782 = vsub.s32 0, %v2781
        %v2783 = vrot.slane %v2675, %v2782
        %v2785 = vadd.f32 %v2771, %v2783
        %v2786 = vadd.f32 %v2772, %v2783
        %v2787 = vadd.f32 %v2773, %v2783
        %v2788 = vadd.f32 %v2774, %v2783
        %v2789 = vadd.f32 %v2775, %v2783
        %v2790 = vadd.f32 %v2776, %v2783
        %v2791 = vadd.f32 %v2777, %v2783
        %v2792 = vadd.f32 %v2778, %v2783
        %v2793 = vpack.c.bf16 %v2786, %v2785
        %v2794 = vpack.c.bf16 %v2788, %v2787
        %v2795 = vpack.c.bf16 %v2790, %v2789
        %v2796 = vpack.c.bf16 %v2792, %v2791
        %v2801 = vunpack.c.l.b16 %v2793
        %v2802 = vunpack.c.h.b16 %v2793
        %v2803 = vunpack.c.l.b16 %v2794
        %v2804 = vunpack.c.h.b16 %v2794
        %v2805 = vunpack.c.l.b16 %v2795
        %v2806 = vunpack.c.h.b16 %v2795
        %v2807 = vunpack.c.l.b16 %v2796
        %v2808 = vunpack.c.h.b16 %v2796
        %v2809 = vpack.c.b16 %v2801, %v2801
        %v2810 = vpack.c.b16 %v2802, %v2802
        %v2811 = vpack.c.b16 %v2803, %v2803
        %v2812 = vpack.c.b16 %v2804, %v2804
        %v2813 = vpack.c.b16 %v2805, %v2805
        %v2814 = vpack.c.b16 %v2806, %v2806
        %v2815 = vpack.c.b16 %v2807, %v2807
        %v2816 = vpack.c.b16 %v2808, %v2808
        %2825 = vst [vmem:[%s558] sm:$0xf] %v2809
        %2826 = vst [vmem:[%s558 + $0x4] sm:$0xf] %v2810
        %2827 = vst [vmem:[%s558 + $0x8] sm:$0xf] %v2811
        %2828 = vst [vmem:[%s558 + $0xc] sm:$0xf] %v2812
        %2829 = vst [vmem:[%s558 + $0x10] sm:$0xf] %v2813
        %2830 = vst [vmem:[%s558 + $0x14] sm:$0xf] %v2814
        %2831 = vst [vmem:[%s558 + $0x18] sm:$0xf] %v2815
        %2832 = vst [vmem:[%s558 + $0x1c] sm:$0xf] %v2816
        %v2833 = vmul.f32 %v2368, 0.25
        %v2834 = vmul.f32 %v2369, 0.25
        %v2835 = vmul.f32 %v2370, 0.25
        %v2836 = vmul.f32 %v2371, 0.25
        %v2837 = vmul.f32 %v2372, 0.25
        %v2838 = vmul.f32 %v2373, 0.25
        %v2839 = vmul.f32 %v2374, 0.25
        %v2840 = vmul.f32 %v2375, 0.25
        %2841 = vst [vmem:[%s529] sm:$0xff] %v2833
        %2842 = vst [vmem:[%s529 + $0x8] sm:$0xff] %v2834
        %2843 = vst [vmem:[%s529 + $0x10] sm:$0xff] %v2835
        %2844 = vst [vmem:[%s529 + $0x18] sm:$0xff] %v2836
        %2845 = vst [vmem:[%s529 + $0x20] sm:$0xff] %v2837
        %2846 = vst [vmem:[%s529 + $0x28] sm:$0xff] %v2838
        %2847 = vst [vmem:[%s529 + $0x30] sm:$0xff] %v2839
        %2848 = vst [vmem:[%s529 + $0x38] sm:$0xff] %v2840
        %s2849 = smul.u32 8, %s34
        %p2850 = scmp.lt.s32.totalorder %s33, 1
        %s2851 = scalar_select %p2850, %s33, 1
        %p2852 = scmp.lt.s32.totalorder %s2849, 15
        %s2853 = scalar_select %p2852, %s2849, 15
        %s2854 = smul.addr %s2851, 16
        %s2855 = sadd.s32 %s2853, %s2854
        %s2856 = smul.addr %s2855, 4
        %s2857 = scalar_lea.vmem %s13, %s2856
        %s2858 = sand.u32 %s369, 1
        %s2859 = scalar_lea.sflag [#allocation4], %s2858
        %s2860 = sand.u32 %s369, 1
        %s2861 = smul.addr %s2860, 64
        %s2862 = scalar_lea.vmem [#allocation3], %s2861
        // Predicated region
        $region73: #{run.5} parent=71 // pred_check
          %p2863 = pneg %p351
        $region74: #{run.5} parent=71 // pred_check_branch
          %2865 = sbr.rel (%p2863) target = $region76
        $region75: #{run.5} parent=71 // pred_region
          %s2866 = smul.u32 8, %s34
        $region76: #{run.5} parent=71 // pred_fallthru
          _
        // Predicated region
        $region77: #{run.5} parent=71 // pred_check
          %p2867 = pneg %p379
        $region78: #{run.5} parent=71 // pred_check_branch
          %2869 = sbr.rel (%p2867) target = $region80
        $region79: #{run.5} parent=71 // pred_region
          %s2870 = smul.u32 8, %s34
          %s2872 = ssub.s32 1024, 1024
          %2873 = vsyncadd %s2859, %s2872
          %s2874 = smul.addr %s33, 16
          %s2875 = sadd.s32 %s2870, %s2874
          %s2876 = smul.addr %s2875, 128
          %s2877 = scalar_lea.hbm %s14, %s2876
          %s2878 = sshll.u32 %s2862, 4
          %s2879 = int_to_ptr.vmem [resolvable:$true] %s2878
          %2884 = dma.vmem_to_hbm [thread:$0]  %s2879, 1024, %s2877, %s2859, 128, 128, 8
        $region80: #{run.5} parent=71 // pred_fallthru
          _
      $region72: #{run.5} parent=5 // pred_fallthru
        _
      %p2885 = scmp.le.s32.totalorder 2, %s24
      // Predicated region
      $region81: #{run.5} parent=5 // pred_check
        %p2886 = pneg %p2885
      $region82: #{run.5} parent=5 // pred_check_branch
        %2888 = sbr.rel (%p2886) target = $region84
      $region83: #{run.5} parent=5 // pred_region
        %s2889 = ssub.s32 %s24, 2
        // Predicated region
        $region85: #{run.5} parent=83 // pred_check
          %p2890 = pneg %p357
        $region86: #{run.5} parent=83 // pred_check_branch
          %2892 = sbr.rel (%p2890) target = $region88
        $region87: #{run.5} parent=83 // pred_region
          %s2893 = smul.u32 8, %s36
          %p2894 = scmp.lt.s32.totalorder %s35, 1
          %s2895 = scalar_select %p2894, %s35, 1
          %p2896 = scmp.lt.s32.totalorder %s2893, 15
          %s2897 = scalar_select %p2896, %s2893, 15
          %s2898 = smul.addr %s2895, 16
          %s2899 = sadd.s32 %s2897, %s2898
          %s2900 = smul.addr %s2899, 4
          %s2901 = scalar_lea.vmem %s13, %s2900
        $region88: #{run.5} parent=83 // pred_fallthru
          _
        // Predicated region
        $region89: #{run.5} parent=83 // pred_check
          %p2902 = pneg %p385
        $region90: #{run.5} parent=83 // pred_check_branch
          %2904 = sbr.rel (%p2902) target = $region92
        $region91: #{run.5} parent=83 // pred_region
          %s2905 = sand.u32 %s370, 1
          %s2906 = scalar_lea.sflag [#allocation4], %s2905
          %s2907 = sand.u32 %s370, 1
          %s2908 = smul.addr %s2907, 64
          %s2909 = scalar_lea.vmem [#allocation3], %s2908
          %2910 = dma.done %s2906, 1024
        $region92: #{run.5} parent=83 // pred_fallthru
          _
      $region84: #{run.5} parent=5 // pred_fallthru
        _
    $region6: #{run.5} parent=1 // loop_footer
      %s28 = sadd.s32 1, %s24
    $region7: #{run.5} parent=1 // loop_footer_branch
      %23 = sbr.rel target = $region3
    $region8: #{run.5} parent=1 // loop_exit
      _
    %2911 = vsyncpa [#allocation4], 1
    %s2912 = scalar_lea.sflag [#allocation4], 1
    %2913 = vsyncpa %s2912, 1

</llo_original>
